<compile_context>
chip_gen: v5e
topology: v5e:2x2
jax: 0.10.0
libtpu: 0.0.40
codegen_flags: <defaults>
</compile_context>

<pallas_src>
import functools

import jax
import jax.numpy as jnp
from jax import lax
from jax.experimental import pallas as pl
from jax.experimental.pallas import tpu as pltpu

_MIB = 1024 * 1024


def _round_up(x, m):
    return (x + m - 1) // m * m


def _vmem_limits():
    """(vmem_limit_bytes, strip-picker budget) derived from this generation's VMEM capacity."""
    try:
        cap = getattr(pltpu.get_tpu_info(), "vmem_capacity_bytes", None) or 64 * _MIB
    except Exception:  # query unavailable -> assume the smallest (v7x-like) part
        cap = 64 * _MIB
    limit = max(32 * _MIB, min(cap - 12 * _MIB, 100 * _MIB))  # v7x ~52 MiB; v5e/v6e 100 MiB
    budget = int(limit * 0.75)
    return limit, budget


def _pick_strip_rows(H, W, Cin, Cint, Cout, vmem_budget_bytes):
    """Largest even divisor of H whose pipelined working set fits the budget.

    Footprints are 128-lane / sublane padded and include the single-buffered weights and the
    f32 accumulator scratch, so the pick cannot silently exceed real VMEM.
    """
    wp = _round_up(W + 2, 16)
    lane = lambda c: _round_up(c, 128)
    fixed = (9 * _round_up(Cin, 16) * lane(Cint) * 2        # w1 bf16 (Buffered(1))
             + _round_up(Cint, 16) * lane(Cout) * 2         # w2 bf16 (Buffered(1))
             + 8 * lane(Cint) * 4 + 8 * lane(Cout) * 4)     # shift / b2 f32
    best = None
    for th in range(2, H + 1, 2):
        if H % th:
            continue
        r = (th + 2) * wp + 16
        need = (fixed
                + 2 * _round_up(r, 16) * lane(Cin) * 2          # input strip bf16, x2 buffers
                + 2 * _round_up(th * wp, 16) * lane(Cout) * 2   # output strip bf16, x2 buffers
                + _round_up(th * wp, 8) * lane(Cint) * 4)       # f32 accumulator scratch
        if need <= vmem_budget_bytes:
            best = th
    return best if best is not None else 2


def _fcn_head_kernel(x_ref, w1_ref, shift_ref, w2_ref, b2_ref, o_ref, acc_ref, *, wp):
    # x_ref:     ((TH+2)*wp + 16, Cin) bf16 -- one padded strip incl. its own halo + zero tail
    # w1_ref:    (9, Cin, Cint)        bf16 -- 3x3 weights, BN scale folded in, tap t = dy*3+dx
    # shift_ref: (1, Cint)             f32  -- folded BN shift
    # w2_ref:    (Cint, Cout)          bf16 -- 1x1 weights
    # b2_ref:    (1, Cout)             f32  -- 1x1 bias
    # o_ref:     (TH*wp, Cout)         bf16 -- conv output over the padded width
    # acc_ref:   (TH*wp, Cint)         f32  -- VMEM accumulator (in-place accumulate, v7x MRB)
    n_body = o_ref.shape[0]

    # 3x3 conv = 9 MXU matmuls against row-offset slices of the strip (bf16 in, f32 acc).
    # Offsets are static; columns >= W of each row are junk and are sliced off by the wrapper.
    t = 0
    for dy in range(3):
        for dx in range(3):
            off = dy * wp + dx
            part = jnp.dot(x_ref[off:off + n_body, :], w1_ref[t],
                           preferred_element_type=jnp.float32)
            if t == 0:
                acc_ref[...] = part
            else:
                acc_ref[...] += part
            t += 1

    # Folded BatchNorm shift + ReLU epilogue in f32 on the VPU (v5e-safe).
    y = jnp.maximum(acc_ref[...] + shift_ref[0], 0.0)
    # TODO(synk): nn.Dropout(0.1) is identity at inference; train-mode masking not emitted.

    # 1x1 conv == matmul (bf16 in, f32 acc) + bias; stored bf16 over exactly Cout channels.
    out = jnp.dot(y.astype(jnp.bfloat16), w2_ref[...],
                  preferred_element_type=jnp.float32) + b2_ref[0]
    o_ref[...] = out.astype(o_ref.dtype)


def fcn_head_forward(x_nchw, w1_hwio, bn_gamma, bn_beta, bn_mean, bn_var, w2_io, b2,
                     eps=1e-5, strip_rows=None):
    """x_nchw: (B, Cin, H, W) float32. Returns (B, Cout, H, W) float32 (eval-mode _FCNHead)."""
    B, Cin, H, W = x_nchw.shape
    Cint = w1_hwio.shape[3]
    Cout = w2_io.shape[1]
    assert H % 2 == 0, "kernel tiles H into even-height strips"

    Wp = _round_up(W + 2, 16)            # padded width: >= W+2, bf16-tile-aligned row stride
    vmem_limit, vmem_budget = _vmem_limits()
    if strip_rows is None:
        strip_rows = _pick_strip_rows(H, W, Cin, Cint, Cout, vmem_budget)
    TH = strip_rows
    assert H % TH == 0 and TH % 2 == 0, (H, TH)
    n_strips = H // TH
    R = (TH + 2) * Wp + 16               # strip rows incl. halo + zero tail (feeds junk cols only)

    # Fold BatchNorm (eval, running stats): y = conv(x, w1) * scale + shift.
    scale = bn_gamma / jnp.sqrt(bn_var + eps)
    shift = (bn_beta - bn_mean * scale).reshape(1, Cint).astype(jnp.float32)
    w1_folded = (w1_hwio * scale[None, None, None, :]).astype(jnp.bfloat16).reshape(9, Cin, Cint)
    w2_b = w2_io.astype(jnp.bfloat16)
    b2_f = b2.reshape(1, Cout).astype(jnp.float32)

    # NCHW -> NHWC bf16, pad H by (1,1) / W by (1, Wp-W-1), then cut into overlapping
    # (TH+2)-row strips so every grid step fetches ONE self-contained block (no in-kernel halo
    # assembly).  The duplicated halo is 2/TH extra rows -- negligible at real strip heights.
    # TODO(synk): if the producer can hand over NHWC/bf16 activations this prep pass vanishes.
    x_nhwc = jnp.transpose(x_nchw, (0, 2, 3, 1)).astype(jnp.bfloat16)
    x_pad = jnp.pad(x_nhwc, ((0, 0), (1, 1), (1, Wp - W - 1), (0, 0)))
    strips = jnp.stack([x_pad[:, s * TH:s * TH + TH + 2] for s in range(n_strips)], axis=1)
    strips = strips.reshape(B, n_strips, (TH + 2) * Wp, Cin)
    strips = jnp.pad(strips, ((0, 0), (0, 0), (0, 16), (0, 0)))     # zero tail

    # v7x has 2 TensorCores: put the larger parallel axis first so the grid splits evenly.
    strips_first = n_strips > B
    grid = (n_strips, B) if strips_first else (B, n_strips)
    bs = (lambda i, j: (j, i)) if strips_first else (lambda i, j: (i, j))

    grid_spec = pltpu.PrefetchScalarGridSpec(
        num_scalar_prefetch=0,
        grid=grid,
        in_specs=[
            # One overlapping strip per step (halo included) -> single DMA, zero assembly copies.
            pl.BlockSpec((None, None, R, Cin), lambda i, j: bs(i, j) + (0, 0)),
            # Weights / BN terms: constant index maps + single-buffered (fetched once, resident).
            pl.BlockSpec((9, Cin, Cint), lambda i, j: (0, 0, 0), pipeline_mode=pl.Buffered(1)),
            pl.BlockSpec((1, Cint), lambda i, j: (0, 0), pipeline_mode=pl.Buffered(1)),
            pl.BlockSpec((Cint, Cout), lambda i, j: (0, 0), pipeline_mode=pl.Buffered(1)),
            pl.BlockSpec((1, Cout), lambda i, j: (0, 0), pipeline_mode=pl.Buffered(1)),
        ],
        out_specs=pl.BlockSpec((None, TH * Wp, Cout), lambda i, j: bs(i, j) + (0,)),
        scratch_shapes=[pltpu.VMEM((TH * Wp, Cint), jnp.float32)],
    )

    flops = 2 * B * H * Wp * (9 * Cin * Cint + Cint * Cout)
    bytes_accessed = (strips.size * 2 + w1_folded.size * 2 + w2_b.size * 2
                      + shift.size * 4 + b2_f.size * 4 + B * H * Wp * Cout * 2)
    cost = pl.CostEstimate(flops=flops, transcendentals=0, bytes_accessed=bytes_accessed)

    out_flat = pl.pallas_call(
        functools.partial(_fcn_head_kernel, wp=Wp),
        out_shape=jax.ShapeDtypeStruct((B, H * Wp, Cout), jnp.bfloat16),
        grid_spec=grid_spec,
        compiler_params=pltpu.CompilerParams(
            dimension_semantics=("parallel", "parallel"),
            vmem_limit_bytes=vmem_limit,
        ),
        cost_estimate=cost,
    )(strips, w1_folded, shift, w2_b, b2_f)

    # Layout plumbing (16x less data than a Cp=128 f32 slab): drop junk width columns, upcast
    # to f32 and return NCHW as the module contract requires.
    out = out_flat.reshape(B, H, Wp, Cout)[:, :, :W, :]
    return jnp.transpose(out, (0, 3, 1, 2)).astype(jnp.float32)


def _reference(x_nchw, w1_hwio, bn_gamma, bn_beta, bn_mean, bn_var, w2_io, b2, eps=1e-5):
    # Mirrors the kernel's quantization points (bf16 MXU inputs, f32 accumulation, bf16 store).
    scale = bn_gamma / jnp.sqrt(bn_var + eps)
    shift = bn_beta - bn_mean * scale
    x = jnp.transpose(x_nchw, (0, 2, 3, 1)).astype(jnp.bfloat16)
    w1f = (w1_hwio * scale[None, None, None, :]).astype(jnp.bfloat16)
    y = lax.conv_general_dilated(
        x, w1f, window_strides=(1, 1), padding=((1, 1), (1, 1)),
        dimension_numbers=("NHWC", "HWIO", "NHWC"),
        preferred_element_type=jnp.float32)
    y = jnp.maximum(y + shift, 0.0)
    out = jnp.einsum("bhwc,co->bhwo", y.astype(jnp.bfloat16), w2_io.astype(jnp.bfloat16),
                     preferred_element_type=jnp.float32) + b2
    out = out.astype(jnp.bfloat16).astype(jnp.float32)   # kernel stores bf16
    return jnp.transpose(out, (0, 3, 1, 2))


if __name__ == "__main__":
    key = jax.random.PRNGKey(0)
    B, Cin, H, W = 2, 16, 16, 16          # in_channels=16 -> inter_channels=4
    Cint = Cin // 4
    Cout = 8                              # `channels` argument of _FCNHead

    ks = jax.random.split(key, 8)
    x = jax.random.normal(ks[0], (B, Cin, H, W), dtype=jnp.float32)
    # Conv2d(in=Cin, out=Cint, k=3, pad=1, bias=False) weights, stored HWIO.
    w1 = 0.1 * jax.random.normal(ks[1], (3, 3, Cin, Cint), dtype=jnp.float32)
    # BatchNorm2d(Cint) parameters + running stats (eval semantics).
    bn_gamma = 1.0 + 0.1 * jax.random.normal(ks[2], (Cint,), dtype=jnp.float32)
    bn_beta = 0.1 * jax.random.normal(ks[3], (Cint,), dtype=jnp.float32)
    bn_mean = 0.05 * jax.random.normal(ks[4], (Cint,), dtype=jnp.float32)
    bn_var = jnp.abs(1.0 + 0.1 * jax.random.normal(ks[5], (Cint,), dtype=jnp.float32))
    # Conv2d(in=Cint, out=Cout, k=1) weights (IO layout) + bias.
    w2 = 0.1 * jax.random.normal(ks[6], (Cint, Cout), dtype=jnp.float32)
    b2 = 0.1 * jax.random.normal(ks[7], (Cout,), dtype=jnp.float32)

    # Sanity-check the auto strip picker (pure Python, no extra compile).
    th_auto = _pick_strip_rows(H, W, Cin, Cint, Cout, _vmem_limits()[1])
    assert H % th_auto == 0 and th_auto % 2 == 0, th_auto

    # strip_rows=8 -> 2 spatial strips per image, exercising the overlapping-strip path.
    out = fcn_head_forward(x, w1, bn_gamma, bn_beta, bn_mean, bn_var, w2, b2, strip_rows=8)
    out = jax.block_until_ready(out)

    ref = _reference(x, w1, bn_gamma, bn_beta, bn_mean, bn_var, w2, b2)
    assert out.shape == (B, Cout, H, W), out.shape
    max_err = float(jnp.max(jnp.abs(out - ref)))
    assert jnp.allclose(out, ref, atol=1e-2, rtol=1e-2), max_err
    print("KERNEL_OK")
</pallas_src>

<mosaic_0001>
module attributes {stable_mosaic.version = 11 : i64} {
  func.func @_fcn_head_kernel(%arg0: i32, %arg1: i32, %arg2: memref<1x1x336x16xbf16, #tpu.memory_space<vmem>>, %arg3: memref<9x16x4xbf16, #tpu.memory_space<vmem>>, %arg4: memref<1x4xf32, #tpu.memory_space<vmem>>, %arg5: memref<4x8xbf16, #tpu.memory_space<vmem>>, %arg6: memref<1x8xf32, #tpu.memory_space<vmem>>, %arg7: memref<1x256x8xbf16, #tpu.memory_space<vmem>>, %arg8: memref<256x4xf32, #tpu.memory_space<vmem>>) attributes {dimension_semantics = [#tpu.dimension_semantics<parallel>, #tpu.dimension_semantics<parallel>], iteration_bounds = array<i64: 2, 2>, scalar_prefetch = 0 : i64, scratch_operands = 1 : i64, tpu.core_type = #tpu.core_type<tc>, window_params = [{transform_indices = @transform_0, window_bounds = array<i64: 1, 1, 336, 16>}, {pipeline_mode = #tpu.pipeline_mode<synchronous>, transform_indices = @transform_1, window_bounds = array<i64: 9, 16, 4>}, {pipeline_mode = #tpu.pipeline_mode<synchronous>, transform_indices = @transform_2, window_bounds = array<i64: 1, 4>}, {pipeline_mode = #tpu.pipeline_mode<synchronous>, transform_indices = @transform_3, window_bounds = array<i64: 4, 8>}, {pipeline_mode = #tpu.pipeline_mode<synchronous>, transform_indices = @transform_4, window_bounds = array<i64: 1, 8>}, {transform_indices = @transform_5, window_bounds = array<i64: 1, 256, 8>}]} {
    %c0 = arith.constant 0 : index
    %c0_0 = arith.constant 0 : index
    %c0_1 = arith.constant 0 : index
    %c0_2 = arith.constant 0 : index
    %0 = vector.load %arg2[%c0, %c0_0, %c0_1, %c0_2] : memref<1x1x336x16xbf16, #tpu.memory_space<vmem>>, vector<1x1x256x16xbf16>
    %1 = vector.shape_cast %0 : vector<1x1x256x16xbf16> to vector<256x16xbf16>
    %c0_3 = arith.constant 0 : index
    %c0_4 = arith.constant 0 : index
    %c0_5 = arith.constant 0 : index
    %2 = vector.load %arg3[%c0_3, %c0_4, %c0_5] : memref<9x16x4xbf16, #tpu.memory_space<vmem>>, vector<1x16x4xbf16>
    %3 = vector.shape_cast %2 : vector<1x16x4xbf16> to vector<16x4xbf16>
    %cst = arith.constant dense<0.000000e+00> : vector<256x4xf32>
    %4 = tpu.matmul %1, %3, %cst {dimension_numbers = #tpu.dot_dimension_numbers<[1], [0], [0], [1], [0, 0, 1, 1], [], []>} : vector<256x16xbf16>, vector<16x4xbf16>, vector<256x4xf32> -> vector<256x4xf32>
    %c0_6 = arith.constant 0 : index
    %c0_7 = arith.constant 0 : index
    %5 = vector.load %arg8[%c0_6, %c0_7] : memref<256x4xf32, #tpu.memory_space<vmem>>, vector<256x4xf32>
    tpu.vector_store %arg8[%c0_6, %c0_7], %4 {strides = array<i32>} : memref<256x4xf32, #tpu.memory_space<vmem>>, vector<256x4xf32>,
    %c0_8 = arith.constant 0 : index
    %c0_9 = arith.constant 0 : index
    %c1 = arith.constant 1 : index
    %c0_10 = arith.constant 0 : index
    %6 = vector.load %arg2[%c0_8, %c0_9, %c1, %c0_10] : memref<1x1x336x16xbf16, #tpu.memory_space<vmem>>, vector<1x1x256x16xbf16>
    %7 = vector.shape_cast %6 : vector<1x1x256x16xbf16> to vector<256x16xbf16>
    %c1_11 = arith.constant 1 : index
    %c0_12 = arith.constant 0 : index
    %c0_13 = arith.constant 0 : index
    %8 = vector.load %arg3[%c1_11, %c0_12, %c0_13] : memref<9x16x4xbf16, #tpu.memory_space<vmem>>, vector<1x16x4xbf16>
    %9 = vector.shape_cast %8 : vector<1x16x4xbf16> to vector<16x4xbf16>
    %cst_14 = arith.constant dense<0.000000e+00> : vector<256x4xf32>
    %10 = tpu.matmul %7, %9, %cst_14 {dimension_numbers = #tpu.dot_dimension_numbers<[1], [0], [0], [1], [0, 0, 1, 1], [], []>} : vector<256x16xbf16>, vector<16x4xbf16>, vector<256x4xf32> -> vector<256x4xf32>
    %c0_15 = arith.constant 0 : index
    %c0_16 = arith.constant 0 : index
    %11 = vector.load %arg8[%c0_15, %c0_16] : memref<256x4xf32, #tpu.memory_space<vmem>>, vector<256x4xf32>
    %12 = arith.addf %11, %10 : vector<256x4xf32>
    %c0_17 = arith.constant 0 : index
    %c0_18 = arith.constant 0 : index
    %13 = vector.load %arg8[%c0_17, %c0_18] : memref<256x4xf32, #tpu.memory_space<vmem>>, vector<256x4xf32>
    tpu.vector_store %arg8[%c0_17, %c0_18], %12 {strides = array<i32>} : memref<256x4xf32, #tpu.memory_space<vmem>>, vector<256x4xf32>,
    %c0_19 = arith.constant 0 : index
    %c0_20 = arith.constant 0 : index
    %c2 = arith.constant 2 : index
    %c0_21 = arith.constant 0 : index
    %14 = vector.load %arg2[%c0_19, %c0_20, %c2, %c0_21] : memref<1x1x336x16xbf16, #tpu.memory_space<vmem>>, vector<1x1x256x16xbf16>
    %15 = vector.shape_cast %14 : vector<1x1x256x16xbf16> to vector<256x16xbf16>
    %c2_22 = arith.constant 2 : index
    %c0_23 = arith.constant 0 : index
    %c0_24 = arith.constant 0 : index
    %16 = vector.load %arg3[%c2_22, %c0_23, %c0_24] : memref<9x16x4xbf16, #tpu.memory_space<vmem>>, vector<1x16x4xbf16>
    %17 = vector.shape_cast %16 : vector<1x16x4xbf16> to vector<16x4xbf16>
    %cst_25 = arith.constant dense<0.000000e+00> : vector<256x4xf32>
    %18 = tpu.matmul %15, %17, %cst_25 {dimension_numbers = #tpu.dot_dimension_numbers<[1], [0], [0], [1], [0, 0, 1, 1], [], []>} : vector<256x16xbf16>, vector<16x4xbf16>, vector<256x4xf32> -> vector<256x4xf32>
    %c0_26 = arith.constant 0 : index
    %c0_27 = arith.constant 0 : index
    %19 = vector.load %arg8[%c0_26, %c0_27] : memref<256x4xf32, #tpu.memory_space<vmem>>, vector<256x4xf32>
    %20 = arith.addf %19, %18 : vector<256x4xf32>
    %c0_28 = arith.constant 0 : index
    %c0_29 = arith.constant 0 : index
    %21 = vector.load %arg8[%c0_28, %c0_29] : memref<256x4xf32, #tpu.memory_space<vmem>>, vector<256x4xf32>
    tpu.vector_store %arg8[%c0_28, %c0_29], %20 {strides = array<i32>} : memref<256x4xf32, #tpu.memory_space<vmem>>, vector<256x4xf32>,
    %c0_30 = arith.constant 0 : index
    %c0_31 = arith.constant 0 : index
    %c32 = arith.constant 32 : index
    %c0_32 = arith.constant 0 : index
    %22 = vector.load %arg2[%c0_30, %c0_31, %c32, %c0_32] : memref<1x1x336x16xbf16, #tpu.memory_space<vmem>>, vector<1x1x256x16xbf16>
    %23 = vector.shape_cast %22 : vector<1x1x256x16xbf16> to vector<256x16xbf16>
    %c3 = arith.constant 3 : index
    %c0_33 = arith.constant 0 : index
    %c0_34 = arith.constant 0 : index
    %24 = vector.load %arg3[%c3, %c0_33, %c0_34] : memref<9x16x4xbf16, #tpu.memory_space<vmem>>, vector<1x16x4xbf16>
    %25 = vector.shape_cast %24 : vector<1x16x4xbf16> to vector<16x4xbf16>
    %cst_35 = arith.constant dense<0.000000e+00> : vector<256x4xf32>
    %26 = tpu.matmul %23, %25, %cst_35 {dimension_numbers = #tpu.dot_dimension_numbers<[1], [0], [0], [1], [0, 0, 1, 1], [], []>} : vector<256x16xbf16>, vector<16x4xbf16>, vector<256x4xf32> -> vector<256x4xf32>
    %c0_36 = arith.constant 0 : index
    %c0_37 = arith.constant 0 : index
    %27 = vector.load %arg8[%c0_36, %c0_37] : memref<256x4xf32, #tpu.memory_space<vmem>>, vector<256x4xf32>
    %28 = arith.addf %27, %26 : vector<256x4xf32>
    %c0_38 = arith.constant 0 : index
    %c0_39 = arith.constant 0 : index
    %29 = vector.load %arg8[%c0_38, %c0_39] : memref<256x4xf32, #tpu.memory_space<vmem>>, vector<256x4xf32>
    tpu.vector_store %arg8[%c0_38, %c0_39], %28 {strides = array<i32>} : memref<256x4xf32, #tpu.memory_space<vmem>>, vector<256x4xf32>,
    %c0_40 = arith.constant 0 : index
    %c0_41 = arith.constant 0 : index
    %c33 = arith.constant 33 : index
    %c0_42 = arith.constant 0 : index
    %30 = vector.load %arg2[%c0_40, %c0_41, %c33, %c0_42] : memref<1x1x336x16xbf16, #tpu.memory_space<vmem>>, vector<1x1x256x16xbf16>
    %31 = vector.shape_cast %30 : vector<1x1x256x16xbf16> to vector<256x16xbf16>
    %c4 = arith.constant 4 : index
    %c0_43 = arith.constant 0 : index
    %c0_44 = arith.constant 0 : index
    %32 = vector.load %arg3[%c4, %c0_43, %c0_44] : memref<9x16x4xbf16, #tpu.memory_space<vmem>>, vector<1x16x4xbf16>
    %33 = vector.shape_cast %32 : vector<1x16x4xbf16> to vector<16x4xbf16>
    %cst_45 = arith.constant dense<0.000000e+00> : vector<256x4xf32>
    %34 = tpu.matmul %31, %33, %cst_45 {dimension_numbers = #tpu.dot_dimension_numbers<[1], [0], [0], [1], [0, 0, 1, 1], [], []>} : vector<256x16xbf16>, vector<16x4xbf16>, vector<256x4xf32> -> vector<256x4xf32>
    %c0_46 = arith.constant 0 : index
    %c0_47 = arith.constant 0 : index
    %35 = vector.load %arg8[%c0_46, %c0_47] : memref<256x4xf32, #tpu.memory_space<vmem>>, vector<256x4xf32>
    %36 = arith.addf %35, %34 : vector<256x4xf32>
    %c0_48 = arith.constant 0 : index
    %c0_49 = arith.constant 0 : index
    %37 = vector.load %arg8[%c0_48, %c0_49] : memref<256x4xf32, #tpu.memory_space<vmem>>, vector<256x4xf32>
    tpu.vector_store %arg8[%c0_48, %c0_49], %36 {strides = array<i32>} : memref<256x4xf32, #tpu.memory_space<vmem>>, vector<256x4xf32>,
    %c0_50 = arith.constant 0 : index
    %c0_51 = arith.constant 0 : index
    %c34 = arith.constant 34 : index
    %c0_52 = arith.constant 0 : index
    %38 = vector.load %arg2[%c0_50, %c0_51, %c34, %c0_52] : memref<1x1x336x16xbf16, #tpu.memory_space<vmem>>, vector<1x1x256x16xbf16>
    %39 = vector.shape_cast %38 : vector<1x1x256x16xbf16> to vector<256x16xbf16>
    %c5 = arith.constant 5 : index
    %c0_53 = arith.constant 0 : index
    %c0_54 = arith.constant 0 : index
    %40 = vector.load %arg3[%c5, %c0_53, %c0_54] : memref<9x16x4xbf16, #tpu.memory_space<vmem>>, vector<1x16x4xbf16>
    %41 = vector.shape_cast %40 : vector<1x16x4xbf16> to vector<16x4xbf16>
    %cst_55 = arith.constant dense<0.000000e+00> : vector<256x4xf32>
    %42 = tpu.matmul %39, %41, %cst_55 {dimension_numbers = #tpu.dot_dimension_numbers<[1], [0], [0], [1], [0, 0, 1, 1], [], []>} : vector<256x16xbf16>, vector<16x4xbf16>, vector<256x4xf32> -> vector<256x4xf32>
    %c0_56 = arith.constant 0 : index
    %c0_57 = arith.constant 0 : index
    %43 = vector.load %arg8[%c0_56, %c0_57] : memref<256x4xf32, #tpu.memory_space<vmem>>, vector<256x4xf32>
    %44 = arith.addf %43, %42 : vector<256x4xf32>
    %c0_58 = arith.constant 0 : index
    %c0_59 = arith.constant 0 : index
    %45 = vector.load %arg8[%c0_58, %c0_59] : memref<256x4xf32, #tpu.memory_space<vmem>>, vector<256x4xf32>
    tpu.vector_store %arg8[%c0_58, %c0_59], %44 {strides = array<i32>} : memref<256x4xf32, #tpu.memory_space<vmem>>, vector<256x4xf32>,
    %c0_60 = arith.constant 0 : index
    %c0_61 = arith.constant 0 : index
    %c64 = arith.constant 64 : index
    %c0_62 = arith.constant 0 : index
    %46 = vector.load %arg2[%c0_60, %c0_61, %c64, %c0_62] : memref<1x1x336x16xbf16, #tpu.memory_space<vmem>>, vector<1x1x256x16xbf16>
    %47 = vector.shape_cast %46 : vector<1x1x256x16xbf16> to vector<256x16xbf16>
    %c6 = arith.constant 6 : index
    %c0_63 = arith.constant 0 : index
    %c0_64 = arith.constant 0 : index
    %48 = vector.load %arg3[%c6, %c0_63, %c0_64] : memref<9x16x4xbf16, #tpu.memory_space<vmem>>, vector<1x16x4xbf16>
    %49 = vector.shape_cast %48 : vector<1x16x4xbf16> to vector<16x4xbf16>
    %cst_65 = arith.constant dense<0.000000e+00> : vector<256x4xf32>
    %50 = tpu.matmul %47, %49, %cst_65 {dimension_numbers = #tpu.dot_dimension_numbers<[1], [0], [0], [1], [0, 0, 1, 1], [], []>} : vector<256x16xbf16>, vector<16x4xbf16>, vector<256x4xf32> -> vector<256x4xf32>
    %c0_66 = arith.constant 0 : index
    %c0_67 = arith.constant 0 : index
    %51 = vector.load %arg8[%c0_66, %c0_67] : memref<256x4xf32, #tpu.memory_space<vmem>>, vector<256x4xf32>
    %52 = arith.addf %51, %50 : vector<256x4xf32>
    %c0_68 = arith.constant 0 : index
    %c0_69 = arith.constant 0 : index
    %53 = vector.load %arg8[%c0_68, %c0_69] : memref<256x4xf32, #tpu.memory_space<vmem>>, vector<256x4xf32>
    tpu.vector_store %arg8[%c0_68, %c0_69], %52 {strides = array<i32>} : memref<256x4xf32, #tpu.memory_space<vmem>>, vector<256x4xf32>,
    %c0_70 = arith.constant 0 : index
    %c0_71 = arith.constant 0 : index
    %c65 = arith.constant 65 : index
    %c0_72 = arith.constant 0 : index
    %54 = vector.load %arg2[%c0_70, %c0_71, %c65, %c0_72] : memref<1x1x336x16xbf16, #tpu.memory_space<vmem>>, vector<1x1x256x16xbf16>
    %55 = vector.shape_cast %54 : vector<1x1x256x16xbf16> to vector<256x16xbf16>
    %c7 = arith.constant 7 : index
    %c0_73 = arith.constant 0 : index
    %c0_74 = arith.constant 0 : index
    %56 = vector.load %arg3[%c7, %c0_73, %c0_74] : memref<9x16x4xbf16, #tpu.memory_space<vmem>>, vector<1x16x4xbf16>
    %57 = vector.shape_cast %56 : vector<1x16x4xbf16> to vector<16x4xbf16>
    %cst_75 = arith.constant dense<0.000000e+00> : vector<256x4xf32>
    %58 = tpu.matmul %55, %57, %cst_75 {dimension_numbers = #tpu.dot_dimension_numbers<[1], [0], [0], [1], [0, 0, 1, 1], [], []>} : vector<256x16xbf16>, vector<16x4xbf16>, vector<256x4xf32> -> vector<256x4xf32>
    %c0_76 = arith.constant 0 : index
    %c0_77 = arith.constant 0 : index
    %59 = vector.load %arg8[%c0_76, %c0_77] : memref<256x4xf32, #tpu.memory_space<vmem>>, vector<256x4xf32>
    %60 = arith.addf %59, %58 : vector<256x4xf32>
    %c0_78 = arith.constant 0 : index
    %c0_79 = arith.constant 0 : index
    %61 = vector.load %arg8[%c0_78, %c0_79] : memref<256x4xf32, #tpu.memory_space<vmem>>, vector<256x4xf32>
    tpu.vector_store %arg8[%c0_78, %c0_79], %60 {strides = array<i32>} : memref<256x4xf32, #tpu.memory_space<vmem>>, vector<256x4xf32>,
    %c0_80 = arith.constant 0 : index
    %c0_81 = arith.constant 0 : index
    %c66 = arith.constant 66 : index
    %c0_82 = arith.constant 0 : index
    %62 = vector.load %arg2[%c0_80, %c0_81, %c66, %c0_82] : memref<1x1x336x16xbf16, #tpu.memory_space<vmem>>, vector<1x1x256x16xbf16>
    %63 = vector.shape_cast %62 : vector<1x1x256x16xbf16> to vector<256x16xbf16>
    %c8 = arith.constant 8 : index
    %c0_83 = arith.constant 0 : index
    %c0_84 = arith.constant 0 : index
    %64 = vector.load %arg3[%c8, %c0_83, %c0_84] : memref<9x16x4xbf16, #tpu.memory_space<vmem>>, vector<1x16x4xbf16>
    %65 = vector.shape_cast %64 : vector<1x16x4xbf16> to vector<16x4xbf16>
    %cst_85 = arith.constant dense<0.000000e+00> : vector<256x4xf32>
    %66 = tpu.matmul %63, %65, %cst_85 {dimension_numbers = #tpu.dot_dimension_numbers<[1], [0], [0], [1], [0, 0, 1, 1], [], []>} : vector<256x16xbf16>, vector<16x4xbf16>, vector<256x4xf32> -> vector<256x4xf32>
    %c0_86 = arith.constant 0 : index
    %c0_87 = arith.constant 0 : index
    %67 = vector.load %arg8[%c0_86, %c0_87] : memref<256x4xf32, #tpu.memory_space<vmem>>, vector<256x4xf32>
    %68 = arith.addf %67, %66 : vector<256x4xf32>
    %c0_88 = arith.constant 0 : index
    %c0_89 = arith.constant 0 : index
    %69 = vector.load %arg8[%c0_88, %c0_89] : memref<256x4xf32, #tpu.memory_space<vmem>>, vector<256x4xf32>
    tpu.vector_store %arg8[%c0_88, %c0_89], %68 {strides = array<i32>} : memref<256x4xf32, #tpu.memory_space<vmem>>, vector<256x4xf32>,
    %c0_90 = arith.constant 0 : index
    %c0_91 = arith.constant 0 : index
    %70 = vector.load %arg8[%c0_90, %c0_91] : memref<256x4xf32, #tpu.memory_space<vmem>>, vector<256x4xf32>
    %c0_92 = arith.constant 0 : index
    %c0_93 = arith.constant 0 : index
    %71 = vector.load %arg4[%c0_92, %c0_93] : memref<1x4xf32, #tpu.memory_space<vmem>>, vector<1x4xf32>
    %72 = vector.shape_cast %71 : vector<1x4xf32> to vector<4xf32>
    %73 = vector.shape_cast %72 : vector<4xf32> to vector<1x4xf32>
    %74 = vector.broadcast %73 : vector<1x4xf32> to vector<256x4xf32>
    %75 = arith.addf %70, %74 : vector<256x4xf32>
    %cst_94 = arith.constant 0.000000e+00 : f32
    %76 = vector.broadcast %cst_94 : f32 to vector<256x4xf32>
    %77 = arith.maximumf %75, %76 : vector<256x4xf32>
    %78 = arith.truncf %77 : vector<256x4xf32> to vector<256x4xbf16>
    %c0_95 = arith.constant 0 : index
    %c0_96 = arith.constant 0 : index
    %79 = vector.load %arg5[%c0_95, %c0_96] : memref<4x8xbf16, #tpu.memory_space<vmem>>, vector<4x8xbf16>
    %cst_97 = arith.constant dense<0.000000e+00> : vector<256x8xf32>
    %80 = tpu.matmul %78, %79, %cst_97 {dimension_numbers = #tpu.dot_dimension_numbers<[1], [0], [0], [1], [0, 0, 1, 1], [], []>} : vector<256x4xbf16>, vector<4x8xbf16>, vector<256x8xf32> -> vector<256x8xf32>
    %c0_98 = arith.constant 0 : index
    %c0_99 = arith.constant 0 : index
    %81 = vector.load %arg6[%c0_98, %c0_99] : memref<1x8xf32, #tpu.memory_space<vmem>>, vector<1x8xf32>
    %82 = vector.shape_cast %81 : vector<1x8xf32> to vector<8xf32>
    %83 = vector.shape_cast %82 : vector<8xf32> to vector<1x8xf32>
    %84 = vector.broadcast %83 : vector<1x8xf32> to vector<256x8xf32>
    %85 = arith.addf %80, %84 : vector<256x8xf32>
    %86 = arith.truncf %85 : vector<256x8xf32> to vector<256x8xbf16>
    %c0_100 = arith.constant 0 : index
    %c0_101 = arith.constant 0 : index
    %c0_102 = arith.constant 0 : index
    %87 = vector.load %arg7[%c0_100, %c0_101, %c0_102] : memref<1x256x8xbf16, #tpu.memory_space<vmem>>, vector<1x256x8xbf16>
    %88 = vector.shape_cast %87 : vector<1x256x8xbf16> to vector<256x8xbf16>
    %89 = vector.shape_cast %86 : vector<256x8xbf16> to vector<1x256x8xbf16>
    tpu.vector_store %arg7[%c0_100, %c0_101, %c0_102], %89 {strides = array<i32>} : memref<1x256x8xbf16, #tpu.memory_space<vmem>>, vector<1x256x8xbf16>,
    return
  }
  func.func @transform_0(%arg0: i32, %arg1: i32) -> (i32, i32, i32, i32) {
    %c0_i32 = arith.constant 0 : i32
    %c0_i32_0 = arith.constant 0 : i32
    %c0_i32_1 = arith.constant 0 : i32
    return %arg0, %arg1, %c0_i32, %c0_i32_0 : i32, i32, i32, i32
  }
  func.func @transform_1(%arg0: i32, %arg1: i32) -> (i32, i32, i32) {
    %c0_i32 = arith.constant 0 : i32
    %c0_i32_0 = arith.constant 0 : i32
    %c0_i32_1 = arith.constant 0 : i32
    %c0_i32_2 = arith.constant 0 : i32
    return %c0_i32, %c0_i32_0, %c0_i32_1 : i32, i32, i32
  }
  func.func @transform_2(%arg0: i32, %arg1: i32) -> (i32, i32) {
    %c0_i32 = arith.constant 0 : i32
    %c0_i32_0 = arith.constant 0 : i32
    %c0_i32_1 = arith.constant 0 : i32
    return %c0_i32, %c0_i32_0 : i32, i32
  }
  func.func @transform_3(%arg0: i32, %arg1: i32) -> (i32, i32) {
    %c0_i32 = arith.constant 0 : i32
    %c0_i32_0 = arith.constant 0 : i32
    %c0_i32_1 = arith.constant 0 : i32
    return %c0_i32, %c0_i32_0 : i32, i32
  }
  func.func @transform_4(%arg0: i32, %arg1: i32) -> (i32, i32) {
    %c0_i32 = arith.constant 0 : i32
    %c0_i32_0 = arith.constant 0 : i32
    %c0_i32_1 = arith.constant 0 : i32
    return %c0_i32, %c0_i32_0 : i32, i32
  }
  func.func @transform_5(%arg0: i32, %arg1: i32) -> (i32, i32, i32) {
    %c0_i32 = arith.constant 0 : i32
    %c0_i32_0 = arith.constant 0 : i32
    return %arg0, %arg1, %c0_i32 : i32, i32, i32
  }
}

</mosaic_0001>

<llo_original>
// kernel: tpu_custom_call.1
$region0: #{tpu_custom_call.1}
  #allocation0 [shape = 'u32[]', space=smem, size = 0x4, offset = 0x4, fixed_abs, tag = 'smem constant byte address 0x4 - core index']
  #allocation1 [shape = 'u32[72,128]{1,0:T(1,128)}', space=vmem, size = 0x9000, scoped, tag = 'internal scratch']
  #allocation2 [shape = 'f32[256,4]{1,0:T(8,128)}', space=vmem, size = 0x20000, scoped, tag = 'scratch operand']
  %s0 = inlined_call_operand.vmem [shape: bf16[2,2,336,16], index: 0, kind: input, shape index: {}]
  %s1 = inlined_call_operand.vmem [shape: bf16[9,16,4], index: 1, kind: input, shape index: {}]
  %s2 = inlined_call_operand.vmem [shape: f32[1,4], index: 2, kind: input, shape index: {}]
  %s3 = inlined_call_operand.vmem [shape: bf16[4,8], index: 3, kind: input, shape index: {}]
  %s4 = inlined_call_operand.vmem [shape: f32[1,8], index: 4, kind: input, shape index: {}]
  %s5 = inlined_call_operand.vmem [shape: bf16[2,512,8], index: 5, kind: output, shape index: {}]
  %s6 = sld [smem:[#allocation0]]
  $region53: #{tpu_custom_call.1} parent=0
    _
  %s8 = ssub.s32 1, %s6
  %s9 = scalar_select 0, %s8, %s6
  loop: start=0, step=1, limit=6
  $region2: #{tpu_custom_call.1} parent=0 // loop_pre_header
    _
  $region3: #{tpu_custom_call.1} parent=0 // loop_header
    %s11 = sphi 0, %s15
    %p12 = scmp.ge.s32.totalorder %s11, 6
    %s18 = sphi 0, %s30
    %s19 = sphi 0, %s26
    %s20 = sphi 0, %s18
    %s21 = sphi 0, %s19
    %s22 = sphi 0, %s20
    %s23 = sphi 0, %s21
    %s35 = sphi 0, %s37
    %s38 = sphi 0, %s35
    %s39 = sphi 0, %s38
    %s55 = sphi 0, %s39
    %s59 = sphi 0, %s59
    %s61 = sphi 0, %s59
    %s62 = sphi 0, %s61
    %s76 = sphi 0, %s62
    %s80 = sphi 0, %s80
    %s82 = sphi 0, %s80
    %s83 = sphi 0, %s82
    %s97 = sphi 0, %s83
    %s101 = sphi 0, %s101
    %s103 = sphi 0, %s101
    %s104 = sphi 0, %s103
    %s118 = sphi 0, %s104
    %s122 = sphi 0, %s122
    %s124 = sphi 0, %s122
    %s125 = sphi 0, %s124
    %s139 = sphi 0, %s125
    %s147 = sphi 0, %s149
    %s150 = sphi 0, %s147
    %s151 = sphi 0, %s150
    %s167 = sphi 0, %s151
  $region4: #{tpu_custom_call.1} parent=0 // loop_header_branch
    %14 = sbr.rel (%p12) target = $region8
  $region5: #{tpu_custom_call.1} parent=0 // loop_body
    %s16 = ssub.s32 %s11, 1
    %s17 = ssub.s32 %s11, 2
    %s24 = sadd.s32 1, %s19
    %p25 = scmp.ge.s32.totalorder %s24, 2
    %s26 = scalar_select %p25, 0, %s24
    %s27 = sadd.s32 1, %s18
    %s28 = scalar_select %p25, %s27, %s18
    %p29 = scmp.ge.s32.totalorder %s28, 2
    %s30 = scalar_select %p29, 0, %s28
    %s31 = ssub.s32 %s18, %s30
    %s32 = ssub.s32 %s19, %s26
    %s33 = sor.u32 %s31, %s32
    %p34 = scmp.eq.s32.totalorder %s33, 0
    %s36 = sadd.s32 %s35, 1
    %s37 = scalar_select %p34, %s35, %s36
    %p40 = pneg %p34
    %p41 = scmp.eq.s32.totalorder %s11, 3
    %p42 = por %p40, %p41
    %p43 = scmp.ne.s32.totalorder %s35, %s38
    %p44 = scmp.eq.s32.totalorder %s11, 0
    %p45 = por %p43, %p44
    %p46 = scmp.ne.s32.totalorder %s35, %s38
    %p47 = scmp.eq.s32.totalorder %s16, 3
    %p48 = por %p46, %p47
    %p49 = scmp.ne.s32.totalorder %s38, %s39
    %p50 = scmp.eq.s32.totalorder %s16, 0
    %p51 = por %p49, %p50
    %p52 = scmp.ne.s32.totalorder %s38, %s39
    %p53 = scmp.eq.s32.totalorder %s17, 3
    %p54 = por %p52, %p53
    %p56 = scmp.ne.s32.totalorder %s39, %s55
    %p57 = scmp.eq.s32.totalorder %s17, 0
    %p58 = por %p56, %p57
    %s60 = sadd.s32 %s59, 1
    %p63 = scmp.eq.s32.totalorder %s11, 3
    %p64 = scmp.ne.s32.totalorder %s59, %s61
    %p65 = scmp.eq.s32.totalorder %s11, 0
    %p66 = por %p64, %p65
    %p67 = scmp.ne.s32.totalorder %s59, %s61
    %p68 = scmp.eq.s32.totalorder %s16, 3
    %p69 = por %p67, %p68
    %p70 = scmp.ne.s32.totalorder %s61, %s62
    %p71 = scmp.eq.s32.totalorder %s16, 0
    %p72 = por %p70, %p71
    %p73 = scmp.ne.s32.totalorder %s61, %s62
    %p74 = scmp.eq.s32.totalorder %s17, 3
    %p75 = por %p73, %p74
    %p77 = scmp.ne.s32.totalorder %s62, %s76
    %p78 = scmp.eq.s32.totalorder %s17, 0
    %p79 = por %p77, %p78
    %s81 = sadd.s32 %s80, 1
    %p84 = scmp.eq.s32.totalorder %s11, 3
    %p85 = scmp.ne.s32.totalorder %s80, %s82
    %p86 = scmp.eq.s32.totalorder %s11, 0
    %p87 = por %p85, %p86
    %p88 = scmp.ne.s32.totalorder %s80, %s82
    %p89 = scmp.eq.s32.totalorder %s16, 3
    %p90 = por %p88, %p89
    %p91 = scmp.ne.s32.totalorder %s82, %s83
    %p92 = scmp.eq.s32.totalorder %s16, 0
    %p93 = por %p91, %p92
    %p94 = scmp.ne.s32.totalorder %s82, %s83
    %p95 = scmp.eq.s32.totalorder %s17, 3
    %p96 = por %p94, %p95
    %p98 = scmp.ne.s32.totalorder %s83, %s97
    %p99 = scmp.eq.s32.totalorder %s17, 0
    %p100 = por %p98, %p99
    %s102 = sadd.s32 %s101, 1
    %p105 = scmp.eq.s32.totalorder %s11, 3
    %p106 = scmp.ne.s32.totalorder %s101, %s103
    %p107 = scmp.eq.s32.totalorder %s11, 0
    %p108 = por %p106, %p107
    %p109 = scmp.ne.s32.totalorder %s101, %s103
    %p110 = scmp.eq.s32.totalorder %s16, 3
    %p111 = por %p109, %p110
    %p112 = scmp.ne.s32.totalorder %s103, %s104
    %p113 = scmp.eq.s32.totalorder %s16, 0
    %p114 = por %p112, %p113
    %p115 = scmp.ne.s32.totalorder %s103, %s104
    %p116 = scmp.eq.s32.totalorder %s17, 3
    %p117 = por %p115, %p116
    %p119 = scmp.ne.s32.totalorder %s104, %s118
    %p120 = scmp.eq.s32.totalorder %s17, 0
    %p121 = por %p119, %p120
    %s123 = sadd.s32 %s122, 1
    %p126 = scmp.eq.s32.totalorder %s11, 3
    %p127 = scmp.ne.s32.totalorder %s122, %s124
    %p128 = scmp.eq.s32.totalorder %s11, 0
    %p129 = por %p127, %p128
    %p130 = scmp.ne.s32.totalorder %s122, %s124
    %p131 = scmp.eq.s32.totalorder %s16, 3
    %p132 = por %p130, %p131
    %p133 = scmp.ne.s32.totalorder %s124, %s125
    %p134 = scmp.eq.s32.totalorder %s16, 0
    %p135 = por %p133, %p134
    %p136 = scmp.ne.s32.totalorder %s124, %s125
    %p137 = scmp.eq.s32.totalorder %s17, 3
    %p138 = por %p136, %p137
    %p140 = scmp.ne.s32.totalorder %s125, %s139
    %p141 = scmp.eq.s32.totalorder %s17, 0
    %p142 = por %p140, %p141
    %s143 = ssub.s32 %s18, %s30
    %s144 = ssub.s32 %s19, %s26
    %s145 = sor.u32 %s143, %s144
    %p146 = scmp.eq.s32.totalorder %s145, 0
    %s148 = sadd.s32 %s147, 1
    %s149 = scalar_select %p146, %s147, %s148
    %p152 = pneg %p146
    %p153 = scmp.eq.s32.totalorder %s11, 3
    %p154 = por %p152, %p153
    %p155 = scmp.ne.s32.totalorder %s147, %s150
    %p156 = scmp.eq.s32.totalorder %s11, 0
    %p157 = por %p155, %p156
    %p158 = scmp.ne.s32.totalorder %s147, %s150
    %p159 = scmp.eq.s32.totalorder %s16, 3
    %p160 = por %p158, %p159
    %p161 = scmp.ne.s32.totalorder %s150, %s151
    %p162 = scmp.eq.s32.totalorder %s16, 0
    %p163 = por %p161, %p162
    %p164 = scmp.ne.s32.totalorder %s150, %s151
    %p165 = scmp.eq.s32.totalorder %s17, 3
    %p166 = por %p164, %p165
    %p168 = scmp.ne.s32.totalorder %s151, %s167
    %p169 = scmp.eq.s32.totalorder %s17, 0
    %p170 = por %p168, %p169
    %p171 = scmp.le.s32.totalorder 1, %s11
    %p172 = scmp.lt.s32.totalorder %s11, 5
    %p173 = pnand %p171, %p172
    %p174 = pneg %p173
    // Predicated region
    $region9: #{tpu_custom_call.1} parent=5 // pred_check
      _
    $region10: #{tpu_custom_call.1} parent=5 // pred_check_branch
      %176 = sbr.rel (%p173) target = $region12
    $region11: #{tpu_custom_call.1} parent=5 // pred_region
      %s177 = ssub.s32 %s11, 1
      // Predicated region
      $region13: #{tpu_custom_call.1} parent=11 // pred_check
        %p178 = pneg %p72
      $region14: #{tpu_custom_call.1} parent=11 // pred_check_branch
        %180 = sbr.rel (%p178) target = $region16
      $region15: #{tpu_custom_call.1} parent=11 // pred_region
        _
      $region16: #{tpu_custom_call.1} parent=11 // pred_fallthru
        _
      // Predicated region
      $region17: #{tpu_custom_call.1} parent=11 // pred_check
        %p181 = pneg %p93
      $region18: #{tpu_custom_call.1} parent=11 // pred_check_branch
        %183 = sbr.rel (%p181) target = $region20
      $region19: #{tpu_custom_call.1} parent=11 // pred_region
        _
      $region20: #{tpu_custom_call.1} parent=11 // pred_fallthru
        _
      // Predicated region
      $region21: #{tpu_custom_call.1} parent=11 // pred_check
        %p184 = pneg %p114
      $region22: #{tpu_custom_call.1} parent=11 // pred_check_branch
        %186 = sbr.rel (%p184) target = $region24
      $region23: #{tpu_custom_call.1} parent=11 // pred_region
        _
      $region24: #{tpu_custom_call.1} parent=11 // pred_fallthru
        _
      // Predicated region
      $region25: #{tpu_custom_call.1} parent=11 // pred_check
        %p187 = pneg %p135
      $region26: #{tpu_custom_call.1} parent=11 // pred_check_branch
        %189 = sbr.rel (%p187) target = $region28
      $region27: #{tpu_custom_call.1} parent=11 // pred_region
        _
      $region28: #{tpu_custom_call.1} parent=11 // pred_fallthru
        _
    $region12: #{tpu_custom_call.1} parent=5 // pred_fallthru
      _
    %p190 = scmp.lt.s32.totalorder %s11, 4
    // Predicated region
    $region29: #{tpu_custom_call.1} parent=5 // pred_check
      %p191 = pneg %p190
    $region30: #{tpu_custom_call.1} parent=5 // pred_check_branch
      %193 = sbr.rel (%p191) target = $region32
    $region31: #{tpu_custom_call.1} parent=5 // pred_region
      // Predicated region
      $region33: #{tpu_custom_call.1} parent=31 // pred_check
        %p194 = pneg %p45
      $region34: #{tpu_custom_call.1} parent=31 // pred_check_branch
        %196 = sbr.rel (%p194) target = $region36
      $region35: #{tpu_custom_call.1} parent=31 // pred_region
        %p197 = scmp.lt.s32.totalorder %s18, 1
        %s198 = scalar_select %p197, %s18, 1
        %p199 = scmp.lt.s32.totalorder %s19, 1
        %s200 = scalar_select %p199, %s19, 1
        %s201 = smul.addr %s200, 42
        %s202 = smul.addr %s198, 84
        %s203 = sadd.s32 %s201, %s202
        %s204 = smul.addr %s203, 4
        %s205 = scalar_lea.vmem %s0, %s204
      $region36: #{tpu_custom_call.1} parent=31 // pred_fallthru
        _
    $region32: #{tpu_custom_call.1} parent=5 // pred_fallthru
      _
    %p206 = scmp.le.s32.totalorder 1, %s11
    %p207 = scmp.lt.s32.totalorder %s11, 5
    %p208 = pnand %p206, %p207
    %p209 = pneg %p208
    // Predicated region
    $region37: #{tpu_custom_call.1} parent=5 // pred_check
      _
    $region38: #{tpu_custom_call.1} parent=5 // pred_check_branch
      %211 = sbr.rel (%p208) target = $region40
    $region39: #{tpu_custom_call.1} parent=5 // pred_region
      %s212 = ssub.s32 %s11, 1
      %p213 = scmp.lt.s32.totalorder %s20, 1
      %s214 = scalar_select %p213, %s20, 1
      %p215 = scmp.lt.s32.totalorder %s21, 1
      %s216 = scalar_select %p215, %s21, 1
      %s217 = smul.addr %s216, 42
      %s218 = smul.addr %s214, 84
      %s219 = sadd.s32 %s217, %s218
      %s220 = smul.addr %s219, 4
      %s221 = scalar_lea.vmem %s0, %s220
      %p222 = pneg %p51
      %p223 = pneg %p48
      %p224 = pneg %p72
      %p225 = pneg %p69
      %p226 = pneg %p93
      %p227 = pneg %p90
      %p228 = pneg %p114
      %p229 = pneg %p111
      %p230 = pneg %p135
      %p231 = pneg %p132
      %p232 = pneg %p163
      %p233 = pneg %p160
      %s234 = smul.u32 32, %s21
      %p235 = scmp.lt.s32.totalorder %s20, 1
      %s236 = scalar_select %p235, %s20, 1
      %p237 = scmp.lt.s32.totalorder %s234, 63
      %s238 = scalar_select %p237, %s234, 63
      %s239 = smul.addr %s236, 64
      %s240 = sadd.s32 %s238, %s239
      %s241 = smul.addr %s240, 4
      %s242 = scalar_lea.vmem %s5, %s241
      %p243 = scmp.lt.s32.totalorder %s20, 1
      %s244 = scalar_select %p243, %s20, 1
      %p245 = scmp.lt.s32.totalorder %s21, 1
      %s246 = scalar_select %p245, %s21, 1
      %s247 = smul.addr %s246, 42
      %s248 = smul.addr %s244, 84
      %s249 = sadd.s32 %s247, %s248
      %s250 = smul.addr %s249, 4
      %s251 = scalar_lea.vmem %s0, %s250
      %s252 = smul.u32 32, %s21
      %p253 = scmp.lt.s32.totalorder %s20, 1
      %s254 = scalar_select %p253, %s20, 1
      %p255 = scmp.lt.s32.totalorder %s252, 63
      %s256 = scalar_select %p255, %s252, 63
      %s257 = smul.addr %s254, 64
      %s258 = sadd.s32 %s256, %s257
      %s259 = smul.addr %s258, 4
      %s260 = scalar_lea.vmem %s5, %s259
      %s261 = smul.u32 32, %s21
      %v263 = vld [vmem:[%s251] sm:$0xf]
      %v264 = vld [vmem:[%s251 + $0x4] sm:$0xf]
      %v265 = vld [vmem:[%s251 + $0x8] sm:$0xf]
      %v266 = vld [vmem:[%s251 + $0xc] sm:$0xf]
      %v267 = vld [vmem:[%s251 + $0x10] sm:$0xf]
      %v268 = vld [vmem:[%s251 + $0x14] sm:$0xf]
      %v269 = vld [vmem:[%s251 + $0x18] sm:$0xf]
      %v270 = vld [vmem:[%s251 + $0x1c] sm:$0xf]
      %v271 = vld [vmem:[%s251 + $0x20] sm:$0xf]
      %v272 = vld [vmem:[%s251 + $0x24] sm:$0xf]
      %v273 = vld [vmem:[%s251 + $0x28] sm:$0xf]
      %v274 = vld [vmem:[%s251 + $0x2c] sm:$0xf]
      %v275 = vld [vmem:[%s251 + $0x30] sm:$0xf]
      %v276 = vld [vmem:[%s251 + $0x34] sm:$0xf]
      %v277 = vld [vmem:[%s251 + $0x38] sm:$0xf]
      %v278 = vld [vmem:[%s251 + $0x3c] sm:$0xf]
      %v279 = vld [vmem:[%s251 + $0x40] sm:$0xf]
      %v280 = vld [vmem:[%s251 + $0x44] sm:$0xf]
      %v281 = vld [vmem:[%s251 + $0x48] sm:$0xf]
      %v282 = vld [vmem:[%s251 + $0x4c] sm:$0xf]
      %v283 = vld [vmem:[%s251 + $0x50] sm:$0xf]
      %v284 = vld [vmem:[%s251 + $0x54] sm:$0xf]
      %v285 = vld [vmem:[%s251 + $0x58] sm:$0xf]
      %v286 = vld [vmem:[%s251 + $0x5c] sm:$0xf]
      %v287 = vld [vmem:[%s251 + $0x60] sm:$0xf]
      %v288 = vld [vmem:[%s251 + $0x64] sm:$0xf]
      %v289 = vld [vmem:[%s251 + $0x68] sm:$0xf]
      %v290 = vld [vmem:[%s251 + $0x6c] sm:$0xf]
      %v291 = vld [vmem:[%s251 + $0x70] sm:$0xf]
      %v292 = vld [vmem:[%s251 + $0x74] sm:$0xf]
      %v293 = vld [vmem:[%s251 + $0x78] sm:$0xf]
      %v294 = vld [vmem:[%s251 + $0x7c] sm:$0xf]
      %v295 = vld [vmem:[%s1] sm:$0xf]
      %v296 = vld [vmem:[%s1 + $0x4] sm:$0xf]
      %v329 = vunpack.c.l.b16 %v263
      %v330 = vunpack.c.l.b16 %v264
      %v331 = vunpack.c.l.b16 %v265
      %v332 = vunpack.c.l.b16 %v266
      %v333 = vunpack.c.l.b16 %v267
      %v334 = vunpack.c.l.b16 %v268
      %v335 = vunpack.c.l.b16 %v269
      %v336 = vunpack.c.l.b16 %v270
      %v337 = vunpack.c.l.b16 %v271
      %v338 = vunpack.c.l.b16 %v272
      %v339 = vunpack.c.l.b16 %v273
      %v340 = vunpack.c.l.b16 %v274
      %v341 = vunpack.c.l.b16 %v275
      %v342 = vunpack.c.l.b16 %v276
      %v343 = vunpack.c.l.b16 %v277
      %v344 = vunpack.c.l.b16 %v278
      %v345 = vunpack.c.l.b16 %v279
      %v346 = vunpack.c.l.b16 %v280
      %v347 = vunpack.c.l.b16 %v281
      %v348 = vunpack.c.l.b16 %v282
      %v349 = vunpack.c.l.b16 %v283
      %v350 = vunpack.c.l.b16 %v284
      %v351 = vunpack.c.l.b16 %v285
      %v352 = vunpack.c.l.b16 %v286
      %v353 = vunpack.c.l.b16 %v287
      %v354 = vunpack.c.l.b16 %v288
      %v355 = vunpack.c.l.b16 %v289
      %v356 = vunpack.c.l.b16 %v290
      %v357 = vunpack.c.l.b16 %v291
      %v358 = vunpack.c.l.b16 %v292
      %v359 = vunpack.c.l.b16 %v293
      %v360 = vunpack.c.l.b16 %v294
      %v361 = vpack.c.b16 %v330, %v329
      %v362 = vpack.c.b16 %v332, %v331
      %v363 = vpack.c.b16 %v334, %v333
      %v364 = vpack.c.b16 %v336, %v335
      %v365 = vpack.c.b16 %v338, %v337
      %v366 = vpack.c.b16 %v340, %v339
      %v367 = vpack.c.b16 %v342, %v341
      %v368 = vpack.c.b16 %v344, %v343
      %v369 = vpack.c.b16 %v346, %v345
      %v370 = vpack.c.b16 %v348, %v347
      %v371 = vpack.c.b16 %v350, %v349
      %v372 = vpack.c.b16 %v352, %v351
      %v373 = vpack.c.b16 %v354, %v353
      %v374 = vpack.c.b16 %v356, %v355
      %v375 = vpack.c.b16 %v358, %v357
      %v376 = vpack.c.b16 %v360, %v359
      %v379 = vunpack.c.l.b16 %v295
      %v380 = vunpack.c.l.b16 %v296
      %v381 = vpack.c.b16 %v380, %v379
      %vm383 = vcmask 130048
      %v385 = vsel %vm383, %v361, 0
      %v388 = vsel %vm383, %v362, 0
      %v391 = vsel %vm383, %v363, 0
      %v394 = vsel %vm383, %v364, 0
      %v397 = vsel %vm383, %v365, 0
      %v400 = vsel %vm383, %v366, 0
      %v403 = vsel %vm383, %v367, 0
      %v406 = vsel %vm383, %v368, 0
      %v409 = vsel %vm383, %v369, 0
      %v412 = vsel %vm383, %v370, 0
      %v415 = vsel %vm383, %v371, 0
      %v418 = vsel %vm383, %v372, 0
      %v421 = vsel %vm383, %v373, 0
      %v424 = vsel %vm383, %v374, 0
      %v427 = vsel %vm383, %v375, 0
      %v430 = vsel %vm383, %v376, 0
      %432 = vmatpush.bf16.msra.mxu0 0
      %433 = vmatpush.bf16.msra.mxu0 0
      %434 = vmatpush.bf16.msra.mxu0 0
      %435 = vmatpush.bf16.msra.mxu0 0
      %436 = vmatpush.bf16.msra.mxu0 0
      %437 = vmatpush.bf16.msra.mxu0 0
      %438 = vmatpush.bf16.msra.mxu0 0
      %439 = vmatpush.bf16.msra.mxu0 %v381
      %440 = vmatmul.bf16.gmra.mxu0 %v385
      %v441 = vpop.f32.mrf.mxu0
      %v442 = vadd.f32 0.0, %v441
      %v443 = vpop.f32.mrf.mxu0
      %v444 = vadd.f32 0.0, %v443
      %445 = vmatmul.bf16.gmra.mxu0 %v388
      %v446 = vpop.f32.mrf.mxu0
      %v447 = vadd.f32 0.0, %v446
      %v448 = vpop.f32.mrf.mxu0
      %v449 = vadd.f32 0.0, %v448
      %450 = vmatmul.bf16.gmra.mxu0 %v391
      %v451 = vpop.f32.mrf.mxu0
      %v452 = vadd.f32 0.0, %v451
      %v453 = vpop.f32.mrf.mxu0
      %v454 = vadd.f32 0.0, %v453
      %455 = vmatmul.bf16.gmra.mxu0 %v394
      %v456 = vpop.f32.mrf.mxu0
      %v457 = vadd.f32 0.0, %v456
      %v458 = vpop.f32.mrf.mxu0
      %v459 = vadd.f32 0.0, %v458
      %460 = vmatmul.bf16.gmra.mxu0 %v397
      %v461 = vpop.f32.mrf.mxu0
      %v462 = vadd.f32 0.0, %v461
      %v463 = vpop.f32.mrf.mxu0
      %v464 = vadd.f32 0.0, %v463
      %465 = vmatmul.bf16.gmra.mxu0 %v400
      %v466 = vpop.f32.mrf.mxu0
      %v467 = vadd.f32 0.0, %v466
      %v468 = vpop.f32.mrf.mxu0
      %v469 = vadd.f32 0.0, %v468
      %470 = vmatmul.bf16.gmra.mxu0 %v403
      %v471 = vpop.f32.mrf.mxu0
      %v472 = vadd.f32 0.0, %v471
      %v473 = vpop.f32.mrf.mxu0
      %v474 = vadd.f32 0.0, %v473
      %475 = vmatmul.bf16.gmra.mxu0 %v406
      %v476 = vpop.f32.mrf.mxu0
      %v477 = vadd.f32 0.0, %v476
      %v478 = vpop.f32.mrf.mxu0
      %v479 = vadd.f32 0.0, %v478
      %480 = vmatmul.bf16.gmra.mxu0 %v409
      %v481 = vpop.f32.mrf.mxu0
      %v482 = vadd.f32 0.0, %v481
      %v483 = vpop.f32.mrf.mxu0
      %v484 = vadd.f32 0.0, %v483
      %485 = vmatmul.bf16.gmra.mxu0 %v412
      %v486 = vpop.f32.mrf.mxu0
      %v487 = vadd.f32 0.0, %v486
      %v488 = vpop.f32.mrf.mxu0
      %v489 = vadd.f32 0.0, %v488
      %490 = vmatmul.bf16.gmra.mxu0 %v415
      %v491 = vpop.f32.mrf.mxu0
      %v492 = vadd.f32 0.0, %v491
      %v493 = vpop.f32.mrf.mxu0
      %v494 = vadd.f32 0.0, %v493
      %495 = vmatmul.bf16.gmra.mxu0 %v418
      %v496 = vpop.f32.mrf.mxu0
      %v497 = vadd.f32 0.0, %v496
      %v498 = vpop.f32.mrf.mxu0
      %v499 = vadd.f32 0.0, %v498
      %500 = vmatmul.bf16.gmra.mxu0 %v421
      %v501 = vpop.f32.mrf.mxu0
      %v502 = vadd.f32 0.0, %v501
      %v503 = vpop.f32.mrf.mxu0
      %v504 = vadd.f32 0.0, %v503
      %505 = vmatmul.bf16.gmra.mxu0 %v424
      %v506 = vpop.f32.mrf.mxu0
      %v507 = vadd.f32 0.0, %v506
      %v508 = vpop.f32.mrf.mxu0
      %v509 = vadd.f32 0.0, %v508
      %510 = vmatmul.bf16.gmra.mxu0 %v427
      %v511 = vpop.f32.mrf.mxu0
      %v512 = vadd.f32 0.0, %v511
      %v513 = vpop.f32.mrf.mxu0
      %v514 = vadd.f32 0.0, %v513
      %515 = vmatmul.bf16.gmra.mxu0 %v430
      %v516 = vpop.f32.mrf.mxu0
      %v517 = vadd.f32 0.0, %v516
      %v518 = vpop.f32.mrf.mxu0
      %v519 = vadd.f32 0.0, %v518
      %520 = vdwg.mxu0
      %vm521 = vcmask 31744
      %522 = vst.msk [vmem:[#allocation2] sm:$0xff] %vm521, %v442
      %523 = vst.msk [vmem:[#allocation2 + $0x8] sm:$0xff] %vm521, %v444
      %524 = vst.msk [vmem:[#allocation2 + $0x10] sm:$0xff] %vm521, %v447
      %525 = vst.msk [vmem:[#allocation2 + $0x18] sm:$0xff] %vm521, %v449
      %526 = vst.msk [vmem:[#allocation2 + $0x20] sm:$0xff] %vm521, %v452
      %527 = vst.msk [vmem:[#allocation2 + $0x28] sm:$0xff] %vm521, %v454
      %528 = vst.msk [vmem:[#allocation2 + $0x30] sm:$0xff] %vm521, %v457
      %529 = vst.msk [vmem:[#allocation2 + $0x38] sm:$0xff] %vm521, %v459
      %530 = vst.msk [vmem:[#allocation2 + $0x40] sm:$0xff] %vm521, %v462
      %531 = vst.msk [vmem:[#allocation2 + $0x48] sm:$0xff] %vm521, %v464
      %532 = vst.msk [vmem:[#allocation2 + $0x50] sm:$0xff] %vm521, %v467
      %533 = vst.msk [vmem:[#allocation2 + $0x58] sm:$0xff] %vm521, %v469
      %534 = vst.msk [vmem:[#allocation2 + $0x60] sm:$0xff] %vm521, %v472
      %535 = vst.msk [vmem:[#allocation2 + $0x68] sm:$0xff] %vm521, %v474
      %536 = vst.msk [vmem:[#allocation2 + $0x70] sm:$0xff] %vm521, %v477
      %537 = vst.msk [vmem:[#allocation2 + $0x78] sm:$0xff] %vm521, %v479
      %538 = vst.msk [vmem:[#allocation2 + $0x80] sm:$0xff] %vm521, %v482
      %539 = vst.msk [vmem:[#allocation2 + $0x88] sm:$0xff] %vm521, %v484
      %540 = vst.msk [vmem:[#allocation2 + $0x90] sm:$0xff] %vm521, %v487
      %541 = vst.msk [vmem:[#allocation2 + $0x98] sm:$0xff] %vm521, %v489
      %542 = vst.msk [vmem:[#allocation2 + $0xa0] sm:$0xff] %vm521, %v492
      %543 = vst.msk [vmem:[#allocation2 + $0xa8] sm:$0xff] %vm521, %v494
      %544 = vst.msk [vmem:[#allocation2 + $0xb0] sm:$0xff] %vm521, %v497
      %545 = vst.msk [vmem:[#allocation2 + $0xb8] sm:$0xff] %vm521, %v499
      %546 = vst.msk [vmem:[#allocation2 + $0xc0] sm:$0xff] %vm521, %v502
      %547 = vst.msk [vmem:[#allocation2 + $0xc8] sm:$0xff] %vm521, %v504
      %548 = vst.msk [vmem:[#allocation2 + $0xd0] sm:$0xff] %vm521, %v507
      %549 = vst.msk [vmem:[#allocation2 + $0xd8] sm:$0xff] %vm521, %v509
      %550 = vst.msk [vmem:[#allocation2 + $0xe0] sm:$0xff] %vm521, %v512
      %551 = vst.msk [vmem:[#allocation2 + $0xe8] sm:$0xff] %vm521, %v514
      %552 = vst.msk [vmem:[#allocation2 + $0xf0] sm:$0xff] %vm521, %v517
      %553 = vst.msk [vmem:[#allocation2 + $0xf8] sm:$0xff] %vm521, %v519
      %v554 = vld [vmem:[%s251] sm:$0xf]
      %v555 = vld [vmem:[%s251 + $0x4] sm:$0xf]
      %v556 = vld [vmem:[%s251 + $0x8] sm:$0xf]
      %v557 = vld [vmem:[%s251 + $0xc] sm:$0xf]
      %v558 = vld [vmem:[%s251 + $0x10] sm:$0xf]
      %v559 = vld [vmem:[%s251 + $0x14] sm:$0xf]
      %v560 = vld [vmem:[%s251 + $0x18] sm:$0xf]
      %v561 = vld [vmem:[%s251 + $0x1c] sm:$0xf]
      %v562 = vld [vmem:[%s251 + $0x20] sm:$0xf]
      %v563 = vld [vmem:[%s251 + $0x24] sm:$0xf]
      %v564 = vld [vmem:[%s251 + $0x28] sm:$0xf]
      %v565 = vld [vmem:[%s251 + $0x2c] sm:$0xf]
      %v566 = vld [vmem:[%s251 + $0x30] sm:$0xf]
      %v567 = vld [vmem:[%s251 + $0x34] sm:$0xf]
      %v568 = vld [vmem:[%s251 + $0x38] sm:$0xf]
      %v569 = vld [vmem:[%s251 + $0x3c] sm:$0xf]
      %v570 = vld [vmem:[%s251 + $0x40] sm:$0xf]
      %v571 = vld [vmem:[%s251 + $0x44] sm:$0xf]
      %v572 = vld [vmem:[%s251 + $0x48] sm:$0xf]
      %v573 = vld [vmem:[%s251 + $0x4c] sm:$0xf]
      %v574 = vld [vmem:[%s251 + $0x50] sm:$0xf]
      %v575 = vld [vmem:[%s251 + $0x54] sm:$0xf]
      %v576 = vld [vmem:[%s251 + $0x58] sm:$0xf]
      %v577 = vld [vmem:[%s251 + $0x5c] sm:$0xf]
      %v578 = vld [vmem:[%s251 + $0x60] sm:$0xf]
      %v579 = vld [vmem:[%s251 + $0x64] sm:$0xf]
      %v580 = vld [vmem:[%s251 + $0x68] sm:$0xf]
      %v581 = vld [vmem:[%s251 + $0x6c] sm:$0xf]
      %v582 = vld [vmem:[%s251 + $0x70] sm:$0xf]
      %v583 = vld [vmem:[%s251 + $0x74] sm:$0xf]
      %v584 = vld [vmem:[%s251 + $0x78] sm:$0xf]
      %v585 = vld [vmem:[%s251 + $0x7c] sm:$0xf]
      %v586 = vld [vmem:[%s251 + $0x80] sm:$0x1]
      %s587 = scalar_lea.vmem %s1, 8
      %v588 = vld [vmem:[%s587] sm:$0xf]
      %v589 = vld [vmem:[%s587 + $0x4] sm:$0xf]
      %v623 = vunpack.c.l.b16 %v554
      %v624 = vunpack.c.l.b16 %v555
      %v625 = vunpack.c.l.b16 %v556
      %v626 = vunpack.c.l.b16 %v557
      %v627 = vunpack.c.l.b16 %v558
      %v628 = vunpack.c.l.b16 %v559
      %v629 = vunpack.c.l.b16 %v560
      %v630 = vunpack.c.l.b16 %v561
      %v631 = vunpack.c.l.b16 %v562
      %v632 = vunpack.c.l.b16 %v563
      %v633 = vunpack.c.l.b16 %v564
      %v634 = vunpack.c.l.b16 %v565
      %v635 = vunpack.c.l.b16 %v566
      %v636 = vunpack.c.l.b16 %v567
      %v637 = vunpack.c.l.b16 %v568
      %v638 = vunpack.c.l.b16 %v569
      %v639 = vunpack.c.l.b16 %v570
      %v640 = vunpack.c.l.b16 %v571
      %v641 = vunpack.c.l.b16 %v572
      %v642 = vunpack.c.l.b16 %v573
      %v643 = vunpack.c.l.b16 %v574
      %v644 = vunpack.c.l.b16 %v575
      %v645 = vunpack.c.l.b16 %v576
      %v646 = vunpack.c.l.b16 %v577
      %v647 = vunpack.c.l.b16 %v578
      %v648 = vunpack.c.l.b16 %v579
      %v649 = vunpack.c.l.b16 %v580
      %v650 = vunpack.c.l.b16 %v581
      %v651 = vunpack.c.l.b16 %v582
      %v652 = vunpack.c.l.b16 %v583
      %v653 = vunpack.c.l.b16 %v584
      %v654 = vunpack.c.l.b16 %v585
      %v655 = vunpack.c.l.b16 %v586
      %v656 = vpack.c.b16 %v624, %v623
      %v657 = vpack.c.b16 %v626, %v625
      %v658 = vpack.c.b16 %v628, %v627
      %v659 = vpack.c.b16 %v630, %v629
      %v660 = vpack.c.b16 %v632, %v631
      %v661 = vpack.c.b16 %v634, %v633
      %v662 = vpack.c.b16 %v636, %v635
      %v663 = vpack.c.b16 %v638, %v637
      %v664 = vpack.c.b16 %v640, %v639
      %v665 = vpack.c.b16 %v642, %v641
      %v666 = vpack.c.b16 %v644, %v643
      %v667 = vpack.c.b16 %v646, %v645
      %v668 = vpack.c.b16 %v648, %v647
      %v669 = vpack.c.b16 %v650, %v649
      %v670 = vpack.c.b16 %v652, %v651
      %v671 = vpack.c.b16 %v654, %v653
      %v672 = vpack.c.b16 %v655, %v655
      %vm673 = vsmask.f32 7424
      %v675 = vshrl.u32 %v656, 16
      %v677 = vshll.u32 %v656, 16
      %v679 = vrot.slane %v677, 1
      %v680 = vor.u32 %v675, %v679
      %v682 = vshll.u32 %v657, 16
      %v684 = vrot.slane %v682, 1
      %v685 = vsel %vm673, %v680, %v684
      %v686 = vshrl.u32 %v657, 16
      %v688 = vor.u32 %v686, %v684
      %v690 = vshll.u32 %v658, 16
      %v692 = vrot.slane %v690, 1
      %v693 = vsel %vm673, %v688, %v692
      %v694 = vshrl.u32 %v658, 16
      %v696 = vor.u32 %v694, %v692
      %v698 = vshll.u32 %v659, 16
      %v700 = vrot.slane %v698, 1
      %v701 = vsel %vm673, %v696, %v700
      %v702 = vshrl.u32 %v659, 16
      %v704 = vor.u32 %v702, %v700
      %v706 = vshll.u32 %v660, 16
      %v708 = vrot.slane %v706, 1
      %v709 = vsel %vm673, %v704, %v708
      %v710 = vshrl.u32 %v660, 16
      %v712 = vor.u32 %v710, %v708
      %v714 = vshll.u32 %v661, 16
      %v716 = vrot.slane %v714, 1
      %v717 = vsel %vm673, %v712, %v716
      %v718 = vshrl.u32 %v661, 16
      %v720 = vor.u32 %v718, %v716
      %v722 = vshll.u32 %v662, 16
      %v724 = vrot.slane %v722, 1
      %v725 = vsel %vm673, %v720, %v724
      %v726 = vshrl.u32 %v662, 16
      %v728 = vor.u32 %v726, %v724
      %v730 = vshll.u32 %v663, 16
      %v732 = vrot.slane %v730, 1
      %v733 = vsel %vm673, %v728, %v732
      %v734 = vshrl.u32 %v663, 16
      %v736 = vor.u32 %v734, %v732
      %v738 = vshll.u32 %v664, 16
      %v740 = vrot.slane %v738, 1
      %v741 = vsel %vm673, %v736, %v740
      %v742 = vshrl.u32 %v664, 16
      %v744 = vor.u32 %v742, %v740
      %v746 = vshll.u32 %v665, 16
      %v748 = vrot.slane %v746, 1
      %v749 = vsel %vm673, %v744, %v748
      %v750 = vshrl.u32 %v665, 16
      %v752 = vor.u32 %v750, %v748
      %v754 = vshll.u32 %v666, 16
      %v756 = vrot.slane %v754, 1
      %v757 = vsel %vm673, %v752, %v756
      %v758 = vshrl.u32 %v666, 16
      %v760 = vor.u32 %v758, %v756
      %v762 = vshll.u32 %v667, 16
      %v764 = vrot.slane %v762, 1
      %v765 = vsel %vm673, %v760, %v764
      %v766 = vshrl.u32 %v667, 16
      %v768 = vor.u32 %v766, %v764
      %v770 = vshll.u32 %v668, 16
      %v772 = vrot.slane %v770, 1
      %v773 = vsel %vm673, %v768, %v772
      %v774 = vshrl.u32 %v668, 16
      %v776 = vor.u32 %v774, %v772
      %v778 = vshll.u32 %v669, 16
      %v780 = vrot.slane %v778, 1
      %v781 = vsel %vm673, %v776, %v780
      %v782 = vshrl.u32 %v669, 16
      %v784 = vor.u32 %v782, %v780
      %v786 = vshll.u32 %v670, 16
      %v788 = vrot.slane %v786, 1
      %v789 = vsel %vm673, %v784, %v788
      %v790 = vshrl.u32 %v670, 16
      %v792 = vor.u32 %v790, %v788
      %v794 = vshll.u32 %v671, 16
      %v796 = vrot.slane %v794, 1
      %v797 = vsel %vm673, %v792, %v796
      %v798 = vshrl.u32 %v671, 16
      %v800 = vor.u32 %v798, %v796
      %v802 = vshll.u32 %v672, 16
      %v804 = vrot.slane %v802, 1
      %v805 = vsel %vm673, %v800, %v804
      %v808 = vunpack.c.l.b16 %v588
      %v809 = vunpack.c.l.b16 %v589
      %v810 = vpack.c.b16 %v809, %v808
      %v813 = vsel %vm383, %v685, 0
      %v816 = vsel %vm383, %v693, 0
      %v819 = vsel %vm383, %v701, 0
      %v822 = vsel %vm383, %v709, 0
      %v825 = vsel %vm383, %v717, 0
      %v828 = vsel %vm383, %v725, 0
      %v831 = vsel %vm383, %v733, 0
      %v834 = vsel %vm383, %v741, 0
      %v837 = vsel %vm383, %v749, 0
      %v840 = vsel %vm383, %v757, 0
      %v843 = vsel %vm383, %v765, 0
      %v846 = vsel %vm383, %v773, 0
      %v849 = vsel %vm383, %v781, 0
      %v852 = vsel %vm383, %v789, 0
      %v855 = vsel %vm383, %v797, 0
      %v858 = vsel %vm383, %v805, 0
      %860 = vmatpush.bf16.msra.mxu0 0
      %861 = vmatpush.bf16.msra.mxu0 0
      %862 = vmatpush.bf16.msra.mxu0 0
      %863 = vmatpush.bf16.msra.mxu0 0
      %864 = vmatpush.bf16.msra.mxu0 0
      %865 = vmatpush.bf16.msra.mxu0 0
      %866 = vmatpush.bf16.msra.mxu0 0
      %867 = vmatpush.bf16.msra.mxu0 %v810
      %868 = vmatmul.bf16.gmra.mxu0 %v813
      %v869 = vpop.f32.mrf.mxu0
      %v870 = vadd.f32 0.0, %v869
      %v871 = vpop.f32.mrf.mxu0
      %v872 = vadd.f32 0.0, %v871
      %873 = vmatmul.bf16.gmra.mxu0 %v816
      %v874 = vpop.f32.mrf.mxu0
      %v875 = vadd.f32 0.0, %v874
      %v876 = vpop.f32.mrf.mxu0
      %v877 = vadd.f32 0.0, %v876
      %878 = vmatmul.bf16.gmra.mxu0 %v819
      %v879 = vpop.f32.mrf.mxu0
      %v880 = vadd.f32 0.0, %v879
      %v881 = vpop.f32.mrf.mxu0
      %v882 = vadd.f32 0.0, %v881
      %883 = vmatmul.bf16.gmra.mxu0 %v822
      %v884 = vpop.f32.mrf.mxu0
      %v885 = vadd.f32 0.0, %v884
      %v886 = vpop.f32.mrf.mxu0
      %v887 = vadd.f32 0.0, %v886
      %888 = vmatmul.bf16.gmra.mxu0 %v825
      %v889 = vpop.f32.mrf.mxu0
      %v890 = vadd.f32 0.0, %v889
      %v891 = vpop.f32.mrf.mxu0
      %v892 = vadd.f32 0.0, %v891
      %893 = vmatmul.bf16.gmra.mxu0 %v828
      %v894 = vpop.f32.mrf.mxu0
      %v895 = vadd.f32 0.0, %v894
      %v896 = vpop.f32.mrf.mxu0
      %v897 = vadd.f32 0.0, %v896
      %898 = vmatmul.bf16.gmra.mxu0 %v831
      %v899 = vpop.f32.mrf.mxu0
      %v900 = vadd.f32 0.0, %v899
      %v901 = vpop.f32.mrf.mxu0
      %v902 = vadd.f32 0.0, %v901
      %903 = vmatmul.bf16.gmra.mxu0 %v834
      %v904 = vpop.f32.mrf.mxu0
      %v905 = vadd.f32 0.0, %v904
      %v906 = vpop.f32.mrf.mxu0
      %v907 = vadd.f32 0.0, %v906
      %908 = vmatmul.bf16.gmra.mxu0 %v837
      %v909 = vpop.f32.mrf.mxu0
      %v910 = vadd.f32 0.0, %v909
      %v911 = vpop.f32.mrf.mxu0
      %v912 = vadd.f32 0.0, %v911
      %913 = vmatmul.bf16.gmra.mxu0 %v840
      %v914 = vpop.f32.mrf.mxu0
      %v915 = vadd.f32 0.0, %v914
      %v916 = vpop.f32.mrf.mxu0
      %v917 = vadd.f32 0.0, %v916
      %918 = vmatmul.bf16.gmra.mxu0 %v843
      %v919 = vpop.f32.mrf.mxu0
      %v920 = vadd.f32 0.0, %v919
      %v921 = vpop.f32.mrf.mxu0
      %v922 = vadd.f32 0.0, %v921
      %923 = vmatmul.bf16.gmra.mxu0 %v846
      %v924 = vpop.f32.mrf.mxu0
      %v925 = vadd.f32 0.0, %v924
      %v926 = vpop.f32.mrf.mxu0
      %v927 = vadd.f32 0.0, %v926
      %928 = vmatmul.bf16.gmra.mxu0 %v849
      %v929 = vpop.f32.mrf.mxu0
      %v930 = vadd.f32 0.0, %v929
      %v931 = vpop.f32.mrf.mxu0
      %v932 = vadd.f32 0.0, %v931
      %933 = vmatmul.bf16.gmra.mxu0 %v852
      %v934 = vpop.f32.mrf.mxu0
      %v935 = vadd.f32 0.0, %v934
      %v936 = vpop.f32.mrf.mxu0
      %v937 = vadd.f32 0.0, %v936
      %938 = vmatmul.bf16.gmra.mxu0 %v855
      %v939 = vpop.f32.mrf.mxu0
      %v940 = vadd.f32 0.0, %v939
      %v941 = vpop.f32.mrf.mxu0
      %v942 = vadd.f32 0.0, %v941
      %943 = vmatmul.bf16.gmra.mxu0 %v858
      %v944 = vpop.f32.mrf.mxu0
      %v945 = vadd.f32 0.0, %v944
      %v946 = vpop.f32.mrf.mxu0
      %v947 = vadd.f32 0.0, %v946
      %948 = vdwg.mxu0
      %v949 = vld [vmem:[#allocation2] sm:$0xff]
      %v950 = vld [vmem:[#allocation2 + $0x8] sm:$0xff]
      %v951 = vld [vmem:[#allocation2 + $0x10] sm:$0xff]
      %v952 = vld [vmem:[#allocation2 + $0x18] sm:$0xff]
      %v953 = vld [vmem:[#allocation2 + $0x20] sm:$0xff]
      %v954 = vld [vmem:[#allocation2 + $0x28] sm:$0xff]
      %v955 = vld [vmem:[#allocation2 + $0x30] sm:$0xff]
      %v956 = vld [vmem:[#allocation2 + $0x38] sm:$0xff]
      %v957 = vld [vmem:[#allocation2 + $0x40] sm:$0xff]
      %v958 = vld [vmem:[#allocation2 + $0x48] sm:$0xff]
      %v959 = vld [vmem:[#allocation2 + $0x50] sm:$0xff]
      %v960 = vld [vmem:[#allocation2 + $0x58] sm:$0xff]
      %v961 = vld [vmem:[#allocation2 + $0x60] sm:$0xff]
      %v962 = vld [vmem:[#allocation2 + $0x68] sm:$0xff]
      %v963 = vld [vmem:[#allocation2 + $0x70] sm:$0xff]
      %v964 = vld [vmem:[#allocation2 + $0x78] sm:$0xff]
      %v965 = vld [vmem:[#allocation2 + $0x80] sm:$0xff]
      %v966 = vld [vmem:[#allocation2 + $0x88] sm:$0xff]
      %v967 = vld [vmem:[#allocation2 + $0x90] sm:$0xff]
      %v968 = vld [vmem:[#allocation2 + $0x98] sm:$0xff]
      %v969 = vld [vmem:[#allocation2 + $0xa0] sm:$0xff]
      %v970 = vld [vmem:[#allocation2 + $0xa8] sm:$0xff]
      %v971 = vld [vmem:[#allocation2 + $0xb0] sm:$0xff]
      %v972 = vld [vmem:[#allocation2 + $0xb8] sm:$0xff]
      %v973 = vld [vmem:[#allocation2 + $0xc0] sm:$0xff]
      %v974 = vld [vmem:[#allocation2 + $0xc8] sm:$0xff]
      %v975 = vld [vmem:[#allocation2 + $0xd0] sm:$0xff]
      %v976 = vld [vmem:[#allocation2 + $0xd8] sm:$0xff]
      %v977 = vld [vmem:[#allocation2 + $0xe0] sm:$0xff]
      %v978 = vld [vmem:[#allocation2 + $0xe8] sm:$0xff]
      %v979 = vld [vmem:[#allocation2 + $0xf0] sm:$0xff]
      %v980 = vld [vmem:[#allocation2 + $0xf8] sm:$0xff]
      %v981 = vadd.f32 %v949, %v870
      %v982 = vadd.f32 %v950, %v872
      %v983 = vadd.f32 %v951, %v875
      %v984 = vadd.f32 %v952, %v877
      %v985 = vadd.f32 %v953, %v880
      %v986 = vadd.f32 %v954, %v882
      %v987 = vadd.f32 %v955, %v885
      %v988 = vadd.f32 %v956, %v887
      %v989 = vadd.f32 %v957, %v890
      %v990 = vadd.f32 %v958, %v892
      %v991 = vadd.f32 %v959, %v895
      %v992 = vadd.f32 %v960, %v897
      %v993 = vadd.f32 %v961, %v900
      %v994 = vadd.f32 %v962, %v902
      %v995 = vadd.f32 %v963, %v905
      %v996 = vadd.f32 %v964, %v907
      %v997 = vadd.f32 %v965, %v910
      %v998 = vadd.f32 %v966, %v912
      %v999 = vadd.f32 %v967, %v915
      %v1000 = vadd.f32 %v968, %v917
      %v1001 = vadd.f32 %v969, %v920
      %v1002 = vadd.f32 %v970, %v922
      %v1003 = vadd.f32 %v971, %v925
      %v1004 = vadd.f32 %v972, %v927
      %v1005 = vadd.f32 %v973, %v930
      %v1006 = vadd.f32 %v974, %v932
      %v1007 = vadd.f32 %v975, %v935
      %v1008 = vadd.f32 %v976, %v937
      %v1009 = vadd.f32 %v977, %v940
      %v1010 = vadd.f32 %v978, %v942
      %v1011 = vadd.f32 %v979, %v945
      %v1012 = vadd.f32 %v980, %v947
      %1013 = vst.msk [vmem:[#allocation2] sm:$0xff] %vm521, %v981
      %1014 = vst.msk [vmem:[#allocation2 + $0x8] sm:$0xff] %vm521, %v982
      %1015 = vst.msk [vmem:[#allocation2 + $0x10] sm:$0xff] %vm521, %v983
      %1016 = vst.msk [vmem:[#allocation2 + $0x18] sm:$0xff] %vm521, %v984
      %1017 = vst.msk [vmem:[#allocation2 + $0x20] sm:$0xff] %vm521, %v985
      %1018 = vst.msk [vmem:[#allocation2 + $0x28] sm:$0xff] %vm521, %v986
      %1019 = vst.msk [vmem:[#allocation2 + $0x30] sm:$0xff] %vm521, %v987
      %1020 = vst.msk [vmem:[#allocation2 + $0x38] sm:$0xff] %vm521, %v988
      %1021 = vst.msk [vmem:[#allocation2 + $0x40] sm:$0xff] %vm521, %v989
      %1022 = vst.msk [vmem:[#allocation2 + $0x48] sm:$0xff] %vm521, %v990
      %1023 = vst.msk [vmem:[#allocation2 + $0x50] sm:$0xff] %vm521, %v991
      %1024 = vst.msk [vmem:[#allocation2 + $0x58] sm:$0xff] %vm521, %v992
      %1025 = vst.msk [vmem:[#allocation2 + $0x60] sm:$0xff] %vm521, %v993
      %1026 = vst.msk [vmem:[#allocation2 + $0x68] sm:$0xff] %vm521, %v994
      %1027 = vst.msk [vmem:[#allocation2 + $0x70] sm:$0xff] %vm521, %v995
      %1028 = vst.msk [vmem:[#allocation2 + $0x78] sm:$0xff] %vm521, %v996
      %1029 = vst.msk [vmem:[#allocation2 + $0x80] sm:$0xff] %vm521, %v997
      %1030 = vst.msk [vmem:[#allocation2 + $0x88] sm:$0xff] %vm521, %v998
      %1031 = vst.msk [vmem:[#allocation2 + $0x90] sm:$0xff] %vm521, %v999
      %1032 = vst.msk [vmem:[#allocation2 + $0x98] sm:$0xff] %vm521, %v1000
      %1033 = vst.msk [vmem:[#allocation2 + $0xa0] sm:$0xff] %vm521, %v1001
      %1034 = vst.msk [vmem:[#allocation2 + $0xa8] sm:$0xff] %vm521, %v1002
      %1035 = vst.msk [vmem:[#allocation2 + $0xb0] sm:$0xff] %vm521, %v1003
      %1036 = vst.msk [vmem:[#allocation2 + $0xb8] sm:$0xff] %vm521, %v1004
      %1037 = vst.msk [vmem:[#allocation2 + $0xc0] sm:$0xff] %vm521, %v1005
      %1038 = vst.msk [vmem:[#allocation2 + $0xc8] sm:$0xff] %vm521, %v1006
      %1039 = vst.msk [vmem:[#allocation2 + $0xd0] sm:$0xff] %vm521, %v1007
      %1040 = vst.msk [vmem:[#allocation2 + $0xd8] sm:$0xff] %vm521, %v1008
      %1041 = vst.msk [vmem:[#allocation2 + $0xe0] sm:$0xff] %vm521, %v1009
      %1042 = vst.msk [vmem:[#allocation2 + $0xe8] sm:$0xff] %vm521, %v1010
      %1043 = vst.msk [vmem:[#allocation2 + $0xf0] sm:$0xff] %vm521, %v1011
      %1044 = vst.msk [vmem:[#allocation2 + $0xf8] sm:$0xff] %vm521, %v1012
      %v1045 = vld [vmem:[%s251] sm:$0xe]
      %v1046 = vld [vmem:[%s251 + $0x4] sm:$0xf]
      %v1047 = vld [vmem:[%s251 + $0x8] sm:$0xf]
      %v1048 = vld [vmem:[%s251 + $0xc] sm:$0xf]
      %v1049 = vld [vmem:[%s251 + $0x10] sm:$0xf]
      %v1050 = vld [vmem:[%s251 + $0x14] sm:$0xf]
      %v1051 = vld [vmem:[%s251 + $0x18] sm:$0xf]
      %v1052 = vld [vmem:[%s251 + $0x1c] sm:$0xf]
      %v1053 = vld [vmem:[%s251 + $0x20] sm:$0xf]
      %v1054 = vld [vmem:[%s251 + $0x24] sm:$0xf]
      %v1055 = vld [vmem:[%s251 + $0x28] sm:$0xf]
      %v1056 = vld [vmem:[%s251 + $0x2c] sm:$0xf]
      %v1057 = vld [vmem:[%s251 + $0x30] sm:$0xf]
      %v1058 = vld [vmem:[%s251 + $0x34] sm:$0xf]
      %v1059 = vld [vmem:[%s251 + $0x38] sm:$0xf]
      %v1060 = vld [vmem:[%s251 + $0x3c] sm:$0xf]
      %v1061 = vld [vmem:[%s251 + $0x40] sm:$0xf]
      %v1062 = vld [vmem:[%s251 + $0x44] sm:$0xf]
      %v1063 = vld [vmem:[%s251 + $0x48] sm:$0xf]
      %v1064 = vld [vmem:[%s251 + $0x4c] sm:$0xf]
      %v1065 = vld [vmem:[%s251 + $0x50] sm:$0xf]
      %v1066 = vld [vmem:[%s251 + $0x54] sm:$0xf]
      %v1067 = vld [vmem:[%s251 + $0x58] sm:$0xf]
      %v1068 = vld [vmem:[%s251 + $0x5c] sm:$0xf]
      %v1069 = vld [vmem:[%s251 + $0x60] sm:$0xf]
      %v1070 = vld [vmem:[%s251 + $0x64] sm:$0xf]
      %v1071 = vld [vmem:[%s251 + $0x68] sm:$0xf]
      %v1072 = vld [vmem:[%s251 + $0x6c] sm:$0xf]
      %v1073 = vld [vmem:[%s251 + $0x70] sm:$0xf]
      %v1074 = vld [vmem:[%s251 + $0x74] sm:$0xf]
      %v1075 = vld [vmem:[%s251 + $0x78] sm:$0xf]
      %v1076 = vld [vmem:[%s251 + $0x7c] sm:$0xf]
      %v1077 = vld [vmem:[%s251 + $0x80] sm:$0x1]
      %s1078 = scalar_lea.vmem %s1, 16
      %v1079 = vld [vmem:[%s1078] sm:$0xf]
      %v1080 = vld [vmem:[%s1078 + $0x4] sm:$0xf]
      %v1114 = vunpack.c.l.b16 %v1045
      %v1115 = vunpack.c.l.b16 %v1046
      %v1116 = vunpack.c.l.b16 %v1047
      %v1117 = vunpack.c.l.b16 %v1048
      %v1118 = vunpack.c.l.b16 %v1049
      %v1119 = vunpack.c.l.b16 %v1050
      %v1120 = vunpack.c.l.b16 %v1051
      %v1121 = vunpack.c.l.b16 %v1052
      %v1122 = vunpack.c.l.b16 %v1053
      %v1123 = vunpack.c.l.b16 %v1054
      %v1124 = vunpack.c.l.b16 %v1055
      %v1125 = vunpack.c.l.b16 %v1056
      %v1126 = vunpack.c.l.b16 %v1057
      %v1127 = vunpack.c.l.b16 %v1058
      %v1128 = vunpack.c.l.b16 %v1059
      %v1129 = vunpack.c.l.b16 %v1060
      %v1130 = vunpack.c.l.b16 %v1061
      %v1131 = vunpack.c.l.b16 %v1062
      %v1132 = vunpack.c.l.b16 %v1063
      %v1133 = vunpack.c.l.b16 %v1064
      %v1134 = vunpack.c.l.b16 %v1065
      %v1135 = vunpack.c.l.b16 %v1066
      %v1136 = vunpack.c.l.b16 %v1067
      %v1137 = vunpack.c.l.b16 %v1068
      %v1138 = vunpack.c.l.b16 %v1069
      %v1139 = vunpack.c.l.b16 %v1070
      %v1140 = vunpack.c.l.b16 %v1071
      %v1141 = vunpack.c.l.b16 %v1072
      %v1142 = vunpack.c.l.b16 %v1073
      %v1143 = vunpack.c.l.b16 %v1074
      %v1144 = vunpack.c.l.b16 %v1075
      %v1145 = vunpack.c.l.b16 %v1076
      %v1146 = vunpack.c.l.b16 %v1077
      %v1147 = vpack.c.b16 %v1115, %v1114
      %v1148 = vpack.c.b16 %v1117, %v1116
      %v1149 = vpack.c.b16 %v1119, %v1118
      %v1150 = vpack.c.b16 %v1121, %v1120
      %v1151 = vpack.c.b16 %v1123, %v1122
      %v1152 = vpack.c.b16 %v1125, %v1124
      %v1153 = vpack.c.b16 %v1127, %v1126
      %v1154 = vpack.c.b16 %v1129, %v1128
      %v1155 = vpack.c.b16 %v1131, %v1130
      %v1156 = vpack.c.b16 %v1133, %v1132
      %v1157 = vpack.c.b16 %v1135, %v1134
      %v1158 = vpack.c.b16 %v1137, %v1136
      %v1159 = vpack.c.b16 %v1139, %v1138
      %v1160 = vpack.c.b16 %v1141, %v1140
      %v1161 = vpack.c.b16 %v1143, %v1142
      %v1162 = vpack.c.b16 %v1145, %v1144
      %v1163 = vpack.c.b16 %v1146, %v1146
      %vm1164 = vcmask 1046528
      %v1165 = vrot.slane %v1147, 1
      %v1166 = vrot.slane %v1148, 1
      %v1167 = vsel %vm1164, %v1165, %v1166
      %v1168 = vrot.slane %v1149, 1
      %v1169 = vsel %vm1164, %v1166, %v1168
      %v1170 = vrot.slane %v1150, 1
      %v1171 = vsel %vm1164, %v1168, %v1170
      %v1172 = vrot.slane %v1151, 1
      %v1173 = vsel %vm1164, %v1170, %v1172
      %v1174 = vrot.slane %v1152, 1
      %v1175 = vsel %vm1164, %v1172, %v1174
      %v1176 = vrot.slane %v1153, 1
      %v1177 = vsel %vm1164, %v1174, %v1176
      %v1178 = vrot.slane %v1154, 1
      %v1179 = vsel %vm1164, %v1176, %v1178
      %v1180 = vrot.slane %v1155, 1
      %v1181 = vsel %vm1164, %v1178, %v1180
      %v1182 = vrot.slane %v1156, 1
      %v1183 = vsel %vm1164, %v1180, %v1182
      %v1184 = vrot.slane %v1157, 1
      %v1185 = vsel %vm1164, %v1182, %v1184
      %v1186 = vrot.slane %v1158, 1
      %v1187 = vsel %vm1164, %v1184, %v1186
      %v1188 = vrot.slane %v1159, 1
      %v1189 = vsel %vm1164, %v1186, %v1188
      %v1190 = vrot.slane %v1160, 1
      %v1191 = vsel %vm1164, %v1188, %v1190
      %v1192 = vrot.slane %v1161, 1
      %v1193 = vsel %vm1164, %v1190, %v1192
      %v1194 = vrot.slane %v1162, 1
      %v1195 = vsel %vm1164, %v1192, %v1194
      %v1196 = vrot.slane %v1163, 1
      %v1197 = vsel %vm1164, %v1194, %v1196
      %v1200 = vunpack.c.l.b16 %v1079
      %v1201 = vunpack.c.l.b16 %v1080
      %v1202 = vpack.c.b16 %v1201, %v1200
      %v1205 = vsel %vm383, %v1167, 0
      %v1208 = vsel %vm383, %v1169, 0
      %v1211 = vsel %vm383, %v1171, 0
      %v1214 = vsel %vm383, %v1173, 0
      %v1217 = vsel %vm383, %v1175, 0
      %v1220 = vsel %vm383, %v1177, 0
      %v1223 = vsel %vm383, %v1179, 0
      %v1226 = vsel %vm383, %v1181, 0
      %v1229 = vsel %vm383, %v1183, 0
      %v1232 = vsel %vm383, %v1185, 0
      %v1235 = vsel %vm383, %v1187, 0
      %v1238 = vsel %vm383, %v1189, 0
      %v1241 = vsel %vm383, %v1191, 0
      %v1244 = vsel %vm383, %v1193, 0
      %v1247 = vsel %vm383, %v1195, 0
      %v1250 = vsel %vm383, %v1197, 0
      %1252 = vmatpush.bf16.msra.mxu0 0
      %1253 = vmatpush.bf16.msra.mxu0 0
      %1254 = vmatpush.bf16.msra.mxu0 0
      %1255 = vmatpush.bf16.msra.mxu0 0
      %1256 = vmatpush.bf16.msra.mxu0 0
      %1257 = vmatpush.bf16.msra.mxu0 0
      %1258 = vmatpush.bf16.msra.mxu0 0
      %1259 = vmatpush.bf16.msra.mxu0 %v1202
      %1260 = vmatmul.bf16.gmra.mxu0 %v1205
      %v1261 = vpop.f32.mrf.mxu0
      %v1262 = vadd.f32 0.0, %v1261
      %v1263 = vpop.f32.mrf.mxu0
      %v1264 = vadd.f32 0.0, %v1263
      %1265 = vmatmul.bf16.gmra.mxu0 %v1208
      %v1266 = vpop.f32.mrf.mxu0
      %v1267 = vadd.f32 0.0, %v1266
      %v1268 = vpop.f32.mrf.mxu0
      %v1269 = vadd.f32 0.0, %v1268
      %1270 = vmatmul.bf16.gmra.mxu0 %v1211
      %v1271 = vpop.f32.mrf.mxu0
      %v1272 = vadd.f32 0.0, %v1271
      %v1273 = vpop.f32.mrf.mxu0
      %v1274 = vadd.f32 0.0, %v1273
      %1275 = vmatmul.bf16.gmra.mxu0 %v1214
      %v1276 = vpop.f32.mrf.mxu0
      %v1277 = vadd.f32 0.0, %v1276
      %v1278 = vpop.f32.mrf.mxu0
      %v1279 = vadd.f32 0.0, %v1278
      %1280 = vmatmul.bf16.gmra.mxu0 %v1217
      %v1281 = vpop.f32.mrf.mxu0
      %v1282 = vadd.f32 0.0, %v1281
      %v1283 = vpop.f32.mrf.mxu0
      %v1284 = vadd.f32 0.0, %v1283
      %1285 = vmatmul.bf16.gmra.mxu0 %v1220
      %v1286 = vpop.f32.mrf.mxu0
      %v1287 = vadd.f32 0.0, %v1286
      %v1288 = vpop.f32.mrf.mxu0
      %v1289 = vadd.f32 0.0, %v1288
      %1290 = vmatmul.bf16.gmra.mxu0 %v1223
      %v1291 = vpop.f32.mrf.mxu0
      %v1292 = vadd.f32 0.0, %v1291
      %v1293 = vpop.f32.mrf.mxu0
      %v1294 = vadd.f32 0.0, %v1293
      %1295 = vmatmul.bf16.gmra.mxu0 %v1226
      %v1296 = vpop.f32.mrf.mxu0
      %v1297 = vadd.f32 0.0, %v1296
      %v1298 = vpop.f32.mrf.mxu0
      %v1299 = vadd.f32 0.0, %v1298
      %1300 = vmatmul.bf16.gmra.mxu0 %v1229
      %v1301 = vpop.f32.mrf.mxu0
      %v1302 = vadd.f32 0.0, %v1301
      %v1303 = vpop.f32.mrf.mxu0
      %v1304 = vadd.f32 0.0, %v1303
      %1305 = vmatmul.bf16.gmra.mxu0 %v1232
      %v1306 = vpop.f32.mrf.mxu0
      %v1307 = vadd.f32 0.0, %v1306
      %v1308 = vpop.f32.mrf.mxu0
      %v1309 = vadd.f32 0.0, %v1308
      %1310 = vmatmul.bf16.gmra.mxu0 %v1235
      %v1311 = vpop.f32.mrf.mxu0
      %v1312 = vadd.f32 0.0, %v1311
      %v1313 = vpop.f32.mrf.mxu0
      %v1314 = vadd.f32 0.0, %v1313
      %1315 = vmatmul.bf16.gmra.mxu0 %v1238
      %v1316 = vpop.f32.mrf.mxu0
      %v1317 = vadd.f32 0.0, %v1316
      %v1318 = vpop.f32.mrf.mxu0
      %v1319 = vadd.f32 0.0, %v1318
      %1320 = vmatmul.bf16.gmra.mxu0 %v1241
      %v1321 = vpop.f32.mrf.mxu0
      %v1322 = vadd.f32 0.0, %v1321
      %v1323 = vpop.f32.mrf.mxu0
      %v1324 = vadd.f32 0.0, %v1323
      %1325 = vmatmul.bf16.gmra.mxu0 %v1244
      %v1326 = vpop.f32.mrf.mxu0
      %v1327 = vadd.f32 0.0, %v1326
      %v1328 = vpop.f32.mrf.mxu0
      %v1329 = vadd.f32 0.0, %v1328
      %1330 = vmatmul.bf16.gmra.mxu0 %v1247
      %v1331 = vpop.f32.mrf.mxu0
      %v1332 = vadd.f32 0.0, %v1331
      %v1333 = vpop.f32.mrf.mxu0
      %v1334 = vadd.f32 0.0, %v1333
      %1335 = vmatmul.bf16.gmra.mxu0 %v1250
      %v1336 = vpop.f32.mrf.mxu0
      %v1337 = vadd.f32 0.0, %v1336
      %v1338 = vpop.f32.mrf.mxu0
      %v1339 = vadd.f32 0.0, %v1338
      %1340 = vdwg.mxu0
      %v1341 = vld [vmem:[#allocation2] sm:$0xff]
      %v1342 = vld [vmem:[#allocation2 + $0x8] sm:$0xff]
      %v1343 = vld [vmem:[#allocation2 + $0x10] sm:$0xff]
      %v1344 = vld [vmem:[#allocation2 + $0x18] sm:$0xff]
      %v1345 = vld [vmem:[#allocation2 + $0x20] sm:$0xff]
      %v1346 = vld [vmem:[#allocation2 + $0x28] sm:$0xff]
      %v1347 = vld [vmem:[#allocation2 + $0x30] sm:$0xff]
      %v1348 = vld [vmem:[#allocation2 + $0x38] sm:$0xff]
      %v1349 = vld [vmem:[#allocation2 + $0x40] sm:$0xff]
      %v1350 = vld [vmem:[#allocation2 + $0x48] sm:$0xff]
      %v1351 = vld [vmem:[#allocation2 + $0x50] sm:$0xff]
      %v1352 = vld [vmem:[#allocation2 + $0x58] sm:$0xff]
      %v1353 = vld [vmem:[#allocation2 + $0x60] sm:$0xff]
      %v1354 = vld [vmem:[#allocation2 + $0x68] sm:$0xff]
      %v1355 = vld [vmem:[#allocation2 + $0x70] sm:$0xff]
      %v1356 = vld [vmem:[#allocation2 + $0x78] sm:$0xff]
      %v1357 = vld [vmem:[#allocation2 + $0x80] sm:$0xff]
      %v1358 = vld [vmem:[#allocation2 + $0x88] sm:$0xff]
      %v1359 = vld [vmem:[#allocation2 + $0x90] sm:$0xff]
      %v1360 = vld [vmem:[#allocation2 + $0x98] sm:$0xff]
      %v1361 = vld [vmem:[#allocation2 + $0xa0] sm:$0xff]
      %v1362 = vld [vmem:[#allocation2 + $0xa8] sm:$0xff]
      %v1363 = vld [vmem:[#allocation2 + $0xb0] sm:$0xff]
      %v1364 = vld [vmem:[#allocation2 + $0xb8] sm:$0xff]
      %v1365 = vld [vmem:[#allocation2 + $0xc0] sm:$0xff]
      %v1366 = vld [vmem:[#allocation2 + $0xc8] sm:$0xff]
      %v1367 = vld [vmem:[#allocation2 + $0xd0] sm:$0xff]
      %v1368 = vld [vmem:[#allocation2 + $0xd8] sm:$0xff]
      %v1369 = vld [vmem:[#allocation2 + $0xe0] sm:$0xff]
      %v1370 = vld [vmem:[#allocation2 + $0xe8] sm:$0xff]
      %v1371 = vld [vmem:[#allocation2 + $0xf0] sm:$0xff]
      %v1372 = vld [vmem:[#allocation2 + $0xf8] sm:$0xff]
      %v1373 = vadd.f32 %v1341, %v1262
      %v1374 = vadd.f32 %v1342, %v1264
      %v1375 = vadd.f32 %v1343, %v1267
      %v1376 = vadd.f32 %v1344, %v1269
      %v1377 = vadd.f32 %v1345, %v1272
      %v1378 = vadd.f32 %v1346, %v1274
      %v1379 = vadd.f32 %v1347, %v1277
      %v1380 = vadd.f32 %v1348, %v1279
      %v1381 = vadd.f32 %v1349, %v1282
      %v1382 = vadd.f32 %v1350, %v1284
      %v1383 = vadd.f32 %v1351, %v1287
      %v1384 = vadd.f32 %v1352, %v1289
      %v1385 = vadd.f32 %v1353, %v1292
      %v1386 = vadd.f32 %v1354, %v1294
      %v1387 = vadd.f32 %v1355, %v1297
      %v1388 = vadd.f32 %v1356, %v1299
      %v1389 = vadd.f32 %v1357, %v1302
      %v1390 = vadd.f32 %v1358, %v1304
      %v1391 = vadd.f32 %v1359, %v1307
      %v1392 = vadd.f32 %v1360, %v1309
      %v1393 = vadd.f32 %v1361, %v1312
      %v1394 = vadd.f32 %v1362, %v1314
      %v1395 = vadd.f32 %v1363, %v1317
      %v1396 = vadd.f32 %v1364, %v1319
      %v1397 = vadd.f32 %v1365, %v1322
      %v1398 = vadd.f32 %v1366, %v1324
      %v1399 = vadd.f32 %v1367, %v1327
      %v1400 = vadd.f32 %v1368, %v1329
      %v1401 = vadd.f32 %v1369, %v1332
      %v1402 = vadd.f32 %v1370, %v1334
      %v1403 = vadd.f32 %v1371, %v1337
      %v1404 = vadd.f32 %v1372, %v1339
      %1405 = vst.msk [vmem:[#allocation2] sm:$0xff] %vm521, %v1373
      %1406 = vst.msk [vmem:[#allocation2 + $0x8] sm:$0xff] %vm521, %v1374
      %1407 = vst.msk [vmem:[#allocation2 + $0x10] sm:$0xff] %vm521, %v1375
      %1408 = vst.msk [vmem:[#allocation2 + $0x18] sm:$0xff] %vm521, %v1376
      %1409 = vst.msk [vmem:[#allocation2 + $0x20] sm:$0xff] %vm521, %v1377
      %1410 = vst.msk [vmem:[#allocation2 + $0x28] sm:$0xff] %vm521, %v1378
      %1411 = vst.msk [vmem:[#allocation2 + $0x30] sm:$0xff] %vm521, %v1379
      %1412 = vst.msk [vmem:[#allocation2 + $0x38] sm:$0xff] %vm521, %v1380
      %1413 = vst.msk [vmem:[#allocation2 + $0x40] sm:$0xff] %vm521, %v1381
      %1414 = vst.msk [vmem:[#allocation2 + $0x48] sm:$0xff] %vm521, %v1382
      %1415 = vst.msk [vmem:[#allocation2 + $0x50] sm:$0xff] %vm521, %v1383
      %1416 = vst.msk [vmem:[#allocation2 + $0x58] sm:$0xff] %vm521, %v1384
      %1417 = vst.msk [vmem:[#allocation2 + $0x60] sm:$0xff] %vm521, %v1385
      %1418 = vst.msk [vmem:[#allocation2 + $0x68] sm:$0xff] %vm521, %v1386
      %1419 = vst.msk [vmem:[#allocation2 + $0x70] sm:$0xff] %vm521, %v1387
      %1420 = vst.msk [vmem:[#allocation2 + $0x78] sm:$0xff] %vm521, %v1388
      %1421 = vst.msk [vmem:[#allocation2 + $0x80] sm:$0xff] %vm521, %v1389
      %1422 = vst.msk [vmem:[#allocation2 + $0x88] sm:$0xff] %vm521, %v1390
      %1423 = vst.msk [vmem:[#allocation2 + $0x90] sm:$0xff] %vm521, %v1391
      %1424 = vst.msk [vmem:[#allocation2 + $0x98] sm:$0xff] %vm521, %v1392
      %1425 = vst.msk [vmem:[#allocation2 + $0xa0] sm:$0xff] %vm521, %v1393
      %1426 = vst.msk [vmem:[#allocation2 + $0xa8] sm:$0xff] %vm521, %v1394
      %1427 = vst.msk [vmem:[#allocation2 + $0xb0] sm:$0xff] %vm521, %v1395
      %1428 = vst.msk [vmem:[#allocation2 + $0xb8] sm:$0xff] %vm521, %v1396
      %1429 = vst.msk [vmem:[#allocation2 + $0xc0] sm:$0xff] %vm521, %v1397
      %1430 = vst.msk [vmem:[#allocation2 + $0xc8] sm:$0xff] %vm521, %v1398
      %1431 = vst.msk [vmem:[#allocation2 + $0xd0] sm:$0xff] %vm521, %v1399
      %1432 = vst.msk [vmem:[#allocation2 + $0xd8] sm:$0xff] %vm521, %v1400
      %1433 = vst.msk [vmem:[#allocation2 + $0xe0] sm:$0xff] %vm521, %v1401
      %1434 = vst.msk [vmem:[#allocation2 + $0xe8] sm:$0xff] %vm521, %v1402
      %1435 = vst.msk [vmem:[#allocation2 + $0xf0] sm:$0xff] %vm521, %v1403
      %1436 = vst.msk [vmem:[#allocation2 + $0xf8] sm:$0xff] %vm521, %v1404
      %v1437 = vld [vmem:[%s251 + $0x10] sm:$0xf]
      %v1438 = vld [vmem:[%s251 + $0x14] sm:$0xf]
      %v1439 = vld [vmem:[%s251 + $0x18] sm:$0xf]
      %v1440 = vld [vmem:[%s251 + $0x1c] sm:$0xf]
      %v1441 = vld [vmem:[%s251 + $0x20] sm:$0xf]
      %v1442 = vld [vmem:[%s251 + $0x24] sm:$0xf]
      %v1443 = vld [vmem:[%s251 + $0x28] sm:$0xf]
      %v1444 = vld [vmem:[%s251 + $0x2c] sm:$0xf]
      %v1445 = vld [vmem:[%s251 + $0x30] sm:$0xf]
      %v1446 = vld [vmem:[%s251 + $0x34] sm:$0xf]
      %v1447 = vld [vmem:[%s251 + $0x38] sm:$0xf]
      %v1448 = vld [vmem:[%s251 + $0x3c] sm:$0xf]
      %v1449 = vld [vmem:[%s251 + $0x40] sm:$0xf]
      %v1450 = vld [vmem:[%s251 + $0x44] sm:$0xf]
      %v1451 = vld [vmem:[%s251 + $0x48] sm:$0xf]
      %v1452 = vld [vmem:[%s251 + $0x4c] sm:$0xf]
      %v1453 = vld [vmem:[%s251 + $0x50] sm:$0xf]
      %v1454 = vld [vmem:[%s251 + $0x54] sm:$0xf]
      %v1455 = vld [vmem:[%s251 + $0x58] sm:$0xf]
      %v1456 = vld [vmem:[%s251 + $0x5c] sm:$0xf]
      %v1457 = vld [vmem:[%s251 + $0x60] sm:$0xf]
      %v1458 = vld [vmem:[%s251 + $0x64] sm:$0xf]
      %v1459 = vld [vmem:[%s251 + $0x68] sm:$0xf]
      %v1460 = vld [vmem:[%s251 + $0x6c] sm:$0xf]
      %v1461 = vld [vmem:[%s251 + $0x70] sm:$0xf]
      %v1462 = vld [vmem:[%s251 + $0x74] sm:$0xf]
      %v1463 = vld [vmem:[%s251 + $0x78] sm:$0xf]
      %v1464 = vld [vmem:[%s251 + $0x7c] sm:$0xf]
      %v1465 = vld [vmem:[%s251 + $0x80] sm:$0xf]
      %v1466 = vld [vmem:[%s251 + $0x84] sm:$0xf]
      %v1467 = vld [vmem:[%s251 + $0x88] sm:$0xf]
      %v1468 = vld [vmem:[%s251 + $0x8c] sm:$0xf]
      %s1469 = scalar_lea.vmem %s1, 24
      %v1470 = vld [vmem:[%s1469] sm:$0xf]
      %v1471 = vld [vmem:[%s1469 + $0x4] sm:$0xf]
      %v1504 = vunpack.c.l.b16 %v1437
      %v1505 = vunpack.c.l.b16 %v1438
      %v1506 = vunpack.c.l.b16 %v1439
      %v1507 = vunpack.c.l.b16 %v1440
      %v1508 = vunpack.c.l.b16 %v1441
      %v1509 = vunpack.c.l.b16 %v1442
      %v1510 = vunpack.c.l.b16 %v1443
      %v1511 = vunpack.c.l.b16 %v1444
      %v1512 = vunpack.c.l.b16 %v1445
      %v1513 = vunpack.c.l.b16 %v1446
      %v1514 = vunpack.c.l.b16 %v1447
      %v1515 = vunpack.c.l.b16 %v1448
      %v1516 = vunpack.c.l.b16 %v1449
      %v1517 = vunpack.c.l.b16 %v1450
      %v1518 = vunpack.c.l.b16 %v1451
      %v1519 = vunpack.c.l.b16 %v1452
      %v1520 = vunpack.c.l.b16 %v1453
      %v1521 = vunpack.c.l.b16 %v1454
      %v1522 = vunpack.c.l.b16 %v1455
      %v1523 = vunpack.c.l.b16 %v1456
      %v1524 = vunpack.c.l.b16 %v1457
      %v1525 = vunpack.c.l.b16 %v1458
      %v1526 = vunpack.c.l.b16 %v1459
      %v1527 = vunpack.c.l.b16 %v1460
      %v1528 = vunpack.c.l.b16 %v1461
      %v1529 = vunpack.c.l.b16 %v1462
      %v1530 = vunpack.c.l.b16 %v1463
      %v1531 = vunpack.c.l.b16 %v1464
      %v1532 = vunpack.c.l.b16 %v1465
      %v1533 = vunpack.c.l.b16 %v1466
      %v1534 = vunpack.c.l.b16 %v1467
      %v1535 = vunpack.c.l.b16 %v1468
      %v1536 = vpack.c.b16 %v1505, %v1504
      %v1537 = vpack.c.b16 %v1507, %v1506
      %v1538 = vpack.c.b16 %v1509, %v1508
      %v1539 = vpack.c.b16 %v1511, %v1510
      %v1540 = vpack.c.b16 %v1513, %v1512
      %v1541 = vpack.c.b16 %v1515, %v1514
      %v1542 = vpack.c.b16 %v1517, %v1516
      %v1543 = vpack.c.b16 %v1519, %v1518
      %v1544 = vpack.c.b16 %v1521, %v1520
      %v1545 = vpack.c.b16 %v1523, %v1522
      %v1546 = vpack.c.b16 %v1525, %v1524
      %v1547 = vpack.c.b16 %v1527, %v1526
      %v1548 = vpack.c.b16 %v1529, %v1528
      %v1549 = vpack.c.b16 %v1531, %v1530
      %v1550 = vpack.c.b16 %v1533, %v1532
      %v1551 = vpack.c.b16 %v1535, %v1534
      %v1554 = vunpack.c.l.b16 %v1470
      %v1555 = vunpack.c.l.b16 %v1471
      %v1556 = vpack.c.b16 %v1555, %v1554
      %v1559 = vsel %vm383, %v1536, 0
      %v1562 = vsel %vm383, %v1537, 0
      %v1565 = vsel %vm383, %v1538, 0
      %v1568 = vsel %vm383, %v1539, 0
      %v1571 = vsel %vm383, %v1540, 0
      %v1574 = vsel %vm383, %v1541, 0
      %v1577 = vsel %vm383, %v1542, 0
      %v1580 = vsel %vm383, %v1543, 0
      %v1583 = vsel %vm383, %v1544, 0
      %v1586 = vsel %vm383, %v1545, 0
      %v1589 = vsel %vm383, %v1546, 0
      %v1592 = vsel %vm383, %v1547, 0
      %v1595 = vsel %vm383, %v1548, 0
      %v1598 = vsel %vm383, %v1549, 0
      %v1601 = vsel %vm383, %v1550, 0
      %v1604 = vsel %vm383, %v1551, 0
      %1606 = vmatpush.bf16.msra.mxu0 0
      %1607 = vmatpush.bf16.msra.mxu0 0
      %1608 = vmatpush.bf16.msra.mxu0 0
      %1609 = vmatpush.bf16.msra.mxu0 0
      %1610 = vmatpush.bf16.msra.mxu0 0
      %1611 = vmatpush.bf16.msra.mxu0 0
      %1612 = vmatpush.bf16.msra.mxu0 0
      %1613 = vmatpush.bf16.msra.mxu0 %v1556
      %1614 = vmatmul.bf16.gmra.mxu0 %v1559
      %v1615 = vpop.f32.mrf.mxu0
      %v1616 = vadd.f32 0.0, %v1615
      %v1617 = vpop.f32.mrf.mxu0
      %v1618 = vadd.f32 0.0, %v1617
      %1619 = vmatmul.bf16.gmra.mxu0 %v1562
      %v1620 = vpop.f32.mrf.mxu0
      %v1621 = vadd.f32 0.0, %v1620
      %v1622 = vpop.f32.mrf.mxu0
      %v1623 = vadd.f32 0.0, %v1622
      %1624 = vmatmul.bf16.gmra.mxu0 %v1565
      %v1625 = vpop.f32.mrf.mxu0
      %v1626 = vadd.f32 0.0, %v1625
      %v1627 = vpop.f32.mrf.mxu0
      %v1628 = vadd.f32 0.0, %v1627
      %1629 = vmatmul.bf16.gmra.mxu0 %v1568
      %v1630 = vpop.f32.mrf.mxu0
      %v1631 = vadd.f32 0.0, %v1630
      %v1632 = vpop.f32.mrf.mxu0
      %v1633 = vadd.f32 0.0, %v1632
      %1634 = vmatmul.bf16.gmra.mxu0 %v1571
      %v1635 = vpop.f32.mrf.mxu0
      %v1636 = vadd.f32 0.0, %v1635
      %v1637 = vpop.f32.mrf.mxu0
      %v1638 = vadd.f32 0.0, %v1637
      %1639 = vmatmul.bf16.gmra.mxu0 %v1574
      %v1640 = vpop.f32.mrf.mxu0
      %v1641 = vadd.f32 0.0, %v1640
      %v1642 = vpop.f32.mrf.mxu0
      %v1643 = vadd.f32 0.0, %v1642
      %1644 = vmatmul.bf16.gmra.mxu0 %v1577
      %v1645 = vpop.f32.mrf.mxu0
      %v1646 = vadd.f32 0.0, %v1645
      %v1647 = vpop.f32.mrf.mxu0
      %v1648 = vadd.f32 0.0, %v1647
      %1649 = vmatmul.bf16.gmra.mxu0 %v1580
      %v1650 = vpop.f32.mrf.mxu0
      %v1651 = vadd.f32 0.0, %v1650
      %v1652 = vpop.f32.mrf.mxu0
      %v1653 = vadd.f32 0.0, %v1652
      %1654 = vmatmul.bf16.gmra.mxu0 %v1583
      %v1655 = vpop.f32.mrf.mxu0
      %v1656 = vadd.f32 0.0, %v1655
      %v1657 = vpop.f32.mrf.mxu0
      %v1658 = vadd.f32 0.0, %v1657
      %1659 = vmatmul.bf16.gmra.mxu0 %v1586
      %v1660 = vpop.f32.mrf.mxu0
      %v1661 = vadd.f32 0.0, %v1660
      %v1662 = vpop.f32.mrf.mxu0
      %v1663 = vadd.f32 0.0, %v1662
      %1664 = vmatmul.bf16.gmra.mxu0 %v1589
      %v1665 = vpop.f32.mrf.mxu0
      %v1666 = vadd.f32 0.0, %v1665
      %v1667 = vpop.f32.mrf.mxu0
      %v1668 = vadd.f32 0.0, %v1667
      %1669 = vmatmul.bf16.gmra.mxu0 %v1592
      %v1670 = vpop.f32.mrf.mxu0
      %v1671 = vadd.f32 0.0, %v1670
      %v1672 = vpop.f32.mrf.mxu0
      %v1673 = vadd.f32 0.0, %v1672
      %1674 = vmatmul.bf16.gmra.mxu0 %v1595
      %v1675 = vpop.f32.mrf.mxu0
      %v1676 = vadd.f32 0.0, %v1675
      %v1677 = vpop.f32.mrf.mxu0
      %v1678 = vadd.f32 0.0, %v1677
      %1679 = vmatmul.bf16.gmra.mxu0 %v1598
      %v1680 = vpop.f32.mrf.mxu0
      %v1681 = vadd.f32 0.0, %v1680
      %v1682 = vpop.f32.mrf.mxu0
      %v1683 = vadd.f32 0.0, %v1682
      %1684 = vmatmul.bf16.gmra.mxu0 %v1601
      %v1685 = vpop.f32.mrf.mxu0
      %v1686 = vadd.f32 0.0, %v1685
      %v1687 = vpop.f32.mrf.mxu0
      %v1688 = vadd.f32 0.0, %v1687
      %1689 = vmatmul.bf16.gmra.mxu0 %v1604
      %v1690 = vpop.f32.mrf.mxu0
      %v1691 = vadd.f32 0.0, %v1690
      %v1692 = vpop.f32.mrf.mxu0
      %v1693 = vadd.f32 0.0, %v1692
      %1694 = vdwg.mxu0
      %v1695 = vld [vmem:[#allocation2] sm:$0xff]
      %v1696 = vld [vmem:[#allocation2 + $0x8] sm:$0xff]
      %v1697 = vld [vmem:[#allocation2 + $0x10] sm:$0xff]
      %v1698 = vld [vmem:[#allocation2 + $0x18] sm:$0xff]
      %v1699 = vld [vmem:[#allocation2 + $0x20] sm:$0xff]
      %v1700 = vld [vmem:[#allocation2 + $0x28] sm:$0xff]
      %v1701 = vld [vmem:[#allocation2 + $0x30] sm:$0xff]
      %v1702 = vld [vmem:[#allocation2 + $0x38] sm:$0xff]
      %v1703 = vld [vmem:[#allocation2 + $0x40] sm:$0xff]
      %v1704 = vld [vmem:[#allocation2 + $0x48] sm:$0xff]
      %v1705 = vld [vmem:[#allocation2 + $0x50] sm:$0xff]
      %v1706 = vld [vmem:[#allocation2 + $0x58] sm:$0xff]
      %v1707 = vld [vmem:[#allocation2 + $0x60] sm:$0xff]
      %v1708 = vld [vmem:[#allocation2 + $0x68] sm:$0xff]
      %v1709 = vld [vmem:[#allocation2 + $0x70] sm:$0xff]
      %v1710 = vld [vmem:[#allocation2 + $0x78] sm:$0xff]
      %v1711 = vld [vmem:[#allocation2 + $0x80] sm:$0xff]
      %v1712 = vld [vmem:[#allocation2 + $0x88] sm:$0xff]
      %v1713 = vld [vmem:[#allocation2 + $0x90] sm:$0xff]
      %v1714 = vld [vmem:[#allocation2 + $0x98] sm:$0xff]
      %v1715 = vld [vmem:[#allocation2 + $0xa0] sm:$0xff]
      %v1716 = vld [vmem:[#allocation2 + $0xa8] sm:$0xff]
      %v1717 = vld [vmem:[#allocation2 + $0xb0] sm:$0xff]
      %v1718 = vld [vmem:[#allocation2 + $0xb8] sm:$0xff]
      %v1719 = vld [vmem:[#allocation2 + $0xc0] sm:$0xff]
      %v1720 = vld [vmem:[#allocation2 + $0xc8] sm:$0xff]
      %v1721 = vld [vmem:[#allocation2 + $0xd0] sm:$0xff]
      %v1722 = vld [vmem:[#allocation2 + $0xd8] sm:$0xff]
      %v1723 = vld [vmem:[#allocation2 + $0xe0] sm:$0xff]
      %v1724 = vld [vmem:[#allocation2 + $0xe8] sm:$0xff]
      %v1725 = vld [vmem:[#allocation2 + $0xf0] sm:$0xff]
      %v1726 = vld [vmem:[#allocation2 + $0xf8] sm:$0xff]
      %v1727 = vadd.f32 %v1695, %v1616
      %v1728 = vadd.f32 %v1696, %v1618
      %v1729 = vadd.f32 %v1697, %v1621
      %v1730 = vadd.f32 %v1698, %v1623
      %v1731 = vadd.f32 %v1699, %v1626
      %v1732 = vadd.f32 %v1700, %v1628
      %v1733 = vadd.f32 %v1701, %v1631
      %v1734 = vadd.f32 %v1702, %v1633
      %v1735 = vadd.f32 %v1703, %v1636
      %v1736 = vadd.f32 %v1704, %v1638
      %v1737 = vadd.f32 %v1705, %v1641
      %v1738 = vadd.f32 %v1706, %v1643
      %v1739 = vadd.f32 %v1707, %v1646
      %v1740 = vadd.f32 %v1708, %v1648
      %v1741 = vadd.f32 %v1709, %v1651
      %v1742 = vadd.f32 %v1710, %v1653
      %v1743 = vadd.f32 %v1711, %v1656
      %v1744 = vadd.f32 %v1712, %v1658
      %v1745 = vadd.f32 %v1713, %v1661
      %v1746 = vadd.f32 %v1714, %v1663
      %v1747 = vadd.f32 %v1715, %v1666
      %v1748 = vadd.f32 %v1716, %v1668
      %v1749 = vadd.f32 %v1717, %v1671
      %v1750 = vadd.f32 %v1718, %v1673
      %v1751 = vadd.f32 %v1719, %v1676
      %v1752 = vadd.f32 %v1720, %v1678
      %v1753 = vadd.f32 %v1721, %v1681
      %v1754 = vadd.f32 %v1722, %v1683
      %v1755 = vadd.f32 %v1723, %v1686
      %v1756 = vadd.f32 %v1724, %v1688
      %v1757 = vadd.f32 %v1725, %v1691
      %v1758 = vadd.f32 %v1726, %v1693
      %1759 = vst.msk [vmem:[#allocation2] sm:$0xff] %vm521, %v1727
      %1760 = vst.msk [vmem:[#allocation2 + $0x8] sm:$0xff] %vm521, %v1728
      %1761 = vst.msk [vmem:[#allocation2 + $0x10] sm:$0xff] %vm521, %v1729
      %1762 = vst.msk [vmem:[#allocation2 + $0x18] sm:$0xff] %vm521, %v1730
      %1763 = vst.msk [vmem:[#allocation2 + $0x20] sm:$0xff] %vm521, %v1731
      %1764 = vst.msk [vmem:[#allocation2 + $0x28] sm:$0xff] %vm521, %v1732
      %1765 = vst.msk [vmem:[#allocation2 + $0x30] sm:$0xff] %vm521, %v1733
      %1766 = vst.msk [vmem:[#allocation2 + $0x38] sm:$0xff] %vm521, %v1734
      %1767 = vst.msk [vmem:[#allocation2 + $0x40] sm:$0xff] %vm521, %v1735
      %1768 = vst.msk [vmem:[#allocation2 + $0x48] sm:$0xff] %vm521, %v1736
      %1769 = vst.msk [vmem:[#allocation2 + $0x50] sm:$0xff] %vm521, %v1737
      %1770 = vst.msk [vmem:[#allocation2 + $0x58] sm:$0xff] %vm521, %v1738
      %1771 = vst.msk [vmem:[#allocation2 + $0x60] sm:$0xff] %vm521, %v1739
      %1772 = vst.msk [vmem:[#allocation2 + $0x68] sm:$0xff] %vm521, %v1740
      %1773 = vst.msk [vmem:[#allocation2 + $0x70] sm:$0xff] %vm521, %v1741
      %1774 = vst.msk [vmem:[#allocation2 + $0x78] sm:$0xff] %vm521, %v1742
      %1775 = vst.msk [vmem:[#allocation2 + $0x80] sm:$0xff] %vm521, %v1743
      %1776 = vst.msk [vmem:[#allocation2 + $0x88] sm:$0xff] %vm521, %v1744
      %1777 = vst.msk [vmem:[#allocation2 + $0x90] sm:$0xff] %vm521, %v1745
      %1778 = vst.msk [vmem:[#allocation2 + $0x98] sm:$0xff] %vm521, %v1746
      %1779 = vst.msk [vmem:[#allocation2 + $0xa0] sm:$0xff] %vm521, %v1747
      %1780 = vst.msk [vmem:[#allocation2 + $0xa8] sm:$0xff] %vm521, %v1748
      %1781 = vst.msk [vmem:[#allocation2 + $0xb0] sm:$0xff] %vm521, %v1749
      %1782 = vst.msk [vmem:[#allocation2 + $0xb8] sm:$0xff] %vm521, %v1750
      %1783 = vst.msk [vmem:[#allocation2 + $0xc0] sm:$0xff] %vm521, %v1751
      %1784 = vst.msk [vmem:[#allocation2 + $0xc8] sm:$0xff] %vm521, %v1752
      %1785 = vst.msk [vmem:[#allocation2 + $0xd0] sm:$0xff] %vm521, %v1753
      %1786 = vst.msk [vmem:[#allocation2 + $0xd8] sm:$0xff] %vm521, %v1754
      %1787 = vst.msk [vmem:[#allocation2 + $0xe0] sm:$0xff] %vm521, %v1755
      %1788 = vst.msk [vmem:[#allocation2 + $0xe8] sm:$0xff] %vm521, %v1756
      %1789 = vst.msk [vmem:[#allocation2 + $0xf0] sm:$0xff] %vm521, %v1757
      %1790 = vst.msk [vmem:[#allocation2 + $0xf8] sm:$0xff] %vm521, %v1758
      %v1791 = vld [vmem:[%s251 + $0x10] sm:$0xf]
      %v1792 = vld [vmem:[%s251 + $0x14] sm:$0xf]
      %v1793 = vld [vmem:[%s251 + $0x18] sm:$0xf]
      %v1794 = vld [vmem:[%s251 + $0x1c] sm:$0xf]
      %v1795 = vld [vmem:[%s251 + $0x20] sm:$0xf]
      %v1796 = vld [vmem:[%s251 + $0x24] sm:$0xf]
      %v1797 = vld [vmem:[%s251 + $0x28] sm:$0xf]
      %v1798 = vld [vmem:[%s251 + $0x2c] sm:$0xf]
      %v1799 = vld [vmem:[%s251 + $0x30] sm:$0xf]
      %v1800 = vld [vmem:[%s251 + $0x34] sm:$0xf]
      %v1801 = vld [vmem:[%s251 + $0x38] sm:$0xf]
      %v1802 = vld [vmem:[%s251 + $0x3c] sm:$0xf]
      %v1803 = vld [vmem:[%s251 + $0x40] sm:$0xf]
      %v1804 = vld [vmem:[%s251 + $0x44] sm:$0xf]
      %v1805 = vld [vmem:[%s251 + $0x48] sm:$0xf]
      %v1806 = vld [vmem:[%s251 + $0x4c] sm:$0xf]
      %v1807 = vld [vmem:[%s251 + $0x50] sm:$0xf]
      %v1808 = vld [vmem:[%s251 + $0x54] sm:$0xf]
      %v1809 = vld [vmem:[%s251 + $0x58] sm:$0xf]
      %v1810 = vld [vmem:[%s251 + $0x5c] sm:$0xf]
      %v1811 = vld [vmem:[%s251 + $0x60] sm:$0xf]
      %v1812 = vld [vmem:[%s251 + $0x64] sm:$0xf]
      %v1813 = vld [vmem:[%s251 + $0x68] sm:$0xf]
      %v1814 = vld [vmem:[%s251 + $0x6c] sm:$0xf]
      %v1815 = vld [vmem:[%s251 + $0x70] sm:$0xf]
      %v1816 = vld [vmem:[%s251 + $0x74] sm:$0xf]
      %v1817 = vld [vmem:[%s251 + $0x78] sm:$0xf]
      %v1818 = vld [vmem:[%s251 + $0x7c] sm:$0xf]
      %v1819 = vld [vmem:[%s251 + $0x80] sm:$0xf]
      %v1820 = vld [vmem:[%s251 + $0x84] sm:$0xf]
      %v1821 = vld [vmem:[%s251 + $0x88] sm:$0xf]
      %v1822 = vld [vmem:[%s251 + $0x8c] sm:$0xf]
      %v1823 = vld [vmem:[%s251 + $0x90] sm:$0x1]
      %s1824 = scalar_lea.vmem %s1, 32
      %v1825 = vld [vmem:[%s1824] sm:$0xf]
      %v1826 = vld [vmem:[%s1824 + $0x4] sm:$0xf]
      %v1860 = vunpack.c.l.b16 %v1791
      %v1861 = vunpack.c.l.b16 %v1792
      %v1862 = vunpack.c.l.b16 %v1793
      %v1863 = vunpack.c.l.b16 %v1794
      %v1864 = vunpack.c.l.b16 %v1795
      %v1865 = vunpack.c.l.b16 %v1796
      %v1866 = vunpack.c.l.b16 %v1797
      %v1867 = vunpack.c.l.b16 %v1798
      %v1868 = vunpack.c.l.b16 %v1799
      %v1869 = vunpack.c.l.b16 %v1800
      %v1870 = vunpack.c.l.b16 %v1801
      %v1871 = vunpack.c.l.b16 %v1802
      %v1872 = vunpack.c.l.b16 %v1803
      %v1873 = vunpack.c.l.b16 %v1804
      %v1874 = vunpack.c.l.b16 %v1805
      %v1875 = vunpack.c.l.b16 %v1806
      %v1876 = vunpack.c.l.b16 %v1807
      %v1877 = vunpack.c.l.b16 %v1808
      %v1878 = vunpack.c.l.b16 %v1809
      %v1879 = vunpack.c.l.b16 %v1810
      %v1880 = vunpack.c.l.b16 %v1811
      %v1881 = vunpack.c.l.b16 %v1812
      %v1882 = vunpack.c.l.b16 %v1813
      %v1883 = vunpack.c.l.b16 %v1814
      %v1884 = vunpack.c.l.b16 %v1815
      %v1885 = vunpack.c.l.b16 %v1816
      %v1886 = vunpack.c.l.b16 %v1817
      %v1887 = vunpack.c.l.b16 %v1818
      %v1888 = vunpack.c.l.b16 %v1819
      %v1889 = vunpack.c.l.b16 %v1820
      %v1890 = vunpack.c.l.b16 %v1821
      %v1891 = vunpack.c.l.b16 %v1822
      %v1892 = vunpack.c.l.b16 %v1823
      %v1893 = vpack.c.b16 %v1861, %v1860
      %v1894 = vpack.c.b16 %v1863, %v1862
      %v1895 = vpack.c.b16 %v1865, %v1864
      %v1896 = vpack.c.b16 %v1867, %v1866
      %v1897 = vpack.c.b16 %v1869, %v1868
      %v1898 = vpack.c.b16 %v1871, %v1870
      %v1899 = vpack.c.b16 %v1873, %v1872
      %v1900 = vpack.c.b16 %v1875, %v1874
      %v1901 = vpack.c.b16 %v1877, %v1876
      %v1902 = vpack.c.b16 %v1879, %v1878
      %v1903 = vpack.c.b16 %v1881, %v1880
      %v1904 = vpack.c.b16 %v1883, %v1882
      %v1905 = vpack.c.b16 %v1885, %v1884
      %v1906 = vpack.c.b16 %v1887, %v1886
      %v1907 = vpack.c.b16 %v1889, %v1888
      %v1908 = vpack.c.b16 %v1891, %v1890
      %v1909 = vpack.c.b16 %v1892, %v1892
      %v1911 = vshrl.u32 %v1893, 16
      %v1913 = vshll.u32 %v1893, 16
      %v1915 = vrot.slane %v1913, 1
      %v1916 = vor.u32 %v1911, %v1915
      %v1918 = vshll.u32 %v1894, 16
      %v1920 = vrot.slane %v1918, 1
      %v1921 = vsel %vm673, %v1916, %v1920
      %v1922 = vshrl.u32 %v1894, 16
      %v1924 = vor.u32 %v1922, %v1920
      %v1926 = vshll.u32 %v1895, 16
      %v1928 = vrot.slane %v1926, 1
      %v1929 = vsel %vm673, %v1924, %v1928
      %v1930 = vshrl.u32 %v1895, 16
      %v1932 = vor.u32 %v1930, %v1928
      %v1934 = vshll.u32 %v1896, 16
      %v1936 = vrot.slane %v1934, 1
      %v1937 = vsel %vm673, %v1932, %v1936
      %v1938 = vshrl.u32 %v1896, 16
      %v1940 = vor.u32 %v1938, %v1936
      %v1942 = vshll.u32 %v1897, 16
      %v1944 = vrot.slane %v1942, 1
      %v1945 = vsel %vm673, %v1940, %v1944
      %v1946 = vshrl.u32 %v1897, 16
      %v1948 = vor.u32 %v1946, %v1944
      %v1950 = vshll.u32 %v1898, 16
      %v1952 = vrot.slane %v1950, 1
      %v1953 = vsel %vm673, %v1948, %v1952
      %v1954 = vshrl.u32 %v1898, 16
      %v1956 = vor.u32 %v1954, %v1952
      %v1958 = vshll.u32 %v1899, 16
      %v1960 = vrot.slane %v1958, 1
      %v1961 = vsel %vm673, %v1956, %v1960
      %v1962 = vshrl.u32 %v1899, 16
      %v1964 = vor.u32 %v1962, %v1960
      %v1966 = vshll.u32 %v1900, 16
      %v1968 = vrot.slane %v1966, 1
      %v1969 = vsel %vm673, %v1964, %v1968
      %v1970 = vshrl.u32 %v1900, 16
      %v1972 = vor.u32 %v1970, %v1968
      %v1974 = vshll.u32 %v1901, 16
      %v1976 = vrot.slane %v1974, 1
      %v1977 = vsel %vm673, %v1972, %v1976
      %v1978 = vshrl.u32 %v1901, 16
      %v1980 = vor.u32 %v1978, %v1976
      %v1982 = vshll.u32 %v1902, 16
      %v1984 = vrot.slane %v1982, 1
      %v1985 = vsel %vm673, %v1980, %v1984
      %v1986 = vshrl.u32 %v1902, 16
      %v1988 = vor.u32 %v1986, %v1984
      %v1990 = vshll.u32 %v1903, 16
      %v1992 = vrot.slane %v1990, 1
      %v1993 = vsel %vm673, %v1988, %v1992
      %v1994 = vshrl.u32 %v1903, 16
      %v1996 = vor.u32 %v1994, %v1992
      %v1998 = vshll.u32 %v1904, 16
      %v2000 = vrot.slane %v1998, 1
      %v2001 = vsel %vm673, %v1996, %v2000
      %v2002 = vshrl.u32 %v1904, 16
      %v2004 = vor.u32 %v2002, %v2000
      %v2006 = vshll.u32 %v1905, 16
      %v2008 = vrot.slane %v2006, 1
      %v2009 = vsel %vm673, %v2004, %v2008
      %v2010 = vshrl.u32 %v1905, 16
      %v2012 = vor.u32 %v2010, %v2008
      %v2014 = vshll.u32 %v1906, 16
      %v2016 = vrot.slane %v2014, 1
      %v2017 = vsel %vm673, %v2012, %v2016
      %v2018 = vshrl.u32 %v1906, 16
      %v2020 = vor.u32 %v2018, %v2016
      %v2022 = vshll.u32 %v1907, 16
      %v2024 = vrot.slane %v2022, 1
      %v2025 = vsel %vm673, %v2020, %v2024
      %v2026 = vshrl.u32 %v1907, 16
      %v2028 = vor.u32 %v2026, %v2024
      %v2030 = vshll.u32 %v1908, 16
      %v2032 = vrot.slane %v2030, 1
      %v2033 = vsel %vm673, %v2028, %v2032
      %v2034 = vshrl.u32 %v1908, 16
      %v2036 = vor.u32 %v2034, %v2032
      %v2038 = vshll.u32 %v1909, 16
      %v2040 = vrot.slane %v2038, 1
      %v2041 = vsel %vm673, %v2036, %v2040
      %v2044 = vunpack.c.l.b16 %v1825
      %v2045 = vunpack.c.l.b16 %v1826
      %v2046 = vpack.c.b16 %v2045, %v2044
      %v2049 = vsel %vm383, %v1921, 0
      %v2052 = vsel %vm383, %v1929, 0
      %v2055 = vsel %vm383, %v1937, 0
      %v2058 = vsel %vm383, %v1945, 0
      %v2061 = vsel %vm383, %v1953, 0
      %v2064 = vsel %vm383, %v1961, 0
      %v2067 = vsel %vm383, %v1969, 0
      %v2070 = vsel %vm383, %v1977, 0
      %v2073 = vsel %vm383, %v1985, 0
      %v2076 = vsel %vm383, %v1993, 0
      %v2079 = vsel %vm383, %v2001, 0
      %v2082 = vsel %vm383, %v2009, 0
      %v2085 = vsel %vm383, %v2017, 0
      %v2088 = vsel %vm383, %v2025, 0
      %v2091 = vsel %vm383, %v2033, 0
      %v2094 = vsel %vm383, %v2041, 0
      %2096 = vmatpush.bf16.msra.mxu0 0
      %2097 = vmatpush.bf16.msra.mxu0 0
      %2098 = vmatpush.bf16.msra.mxu0 0
      %2099 = vmatpush.bf16.msra.mxu0 0
      %2100 = vmatpush.bf16.msra.mxu0 0
      %2101 = vmatpush.bf16.msra.mxu0 0
      %2102 = vmatpush.bf16.msra.mxu0 0
      %2103 = vmatpush.bf16.msra.mxu0 %v2046
      %2104 = vmatmul.bf16.gmra.mxu0 %v2049
      %v2105 = vpop.f32.mrf.mxu0
      %v2106 = vadd.f32 0.0, %v2105
      %v2107 = vpop.f32.mrf.mxu0
      %v2108 = vadd.f32 0.0, %v2107
      %2109 = vmatmul.bf16.gmra.mxu0 %v2052
      %v2110 = vpop.f32.mrf.mxu0
      %v2111 = vadd.f32 0.0, %v2110
      %v2112 = vpop.f32.mrf.mxu0
      %v2113 = vadd.f32 0.0, %v2112
      %2114 = vmatmul.bf16.gmra.mxu0 %v2055
      %v2115 = vpop.f32.mrf.mxu0
      %v2116 = vadd.f32 0.0, %v2115
      %v2117 = vpop.f32.mrf.mxu0
      %v2118 = vadd.f32 0.0, %v2117
      %2119 = vmatmul.bf16.gmra.mxu0 %v2058
      %v2120 = vpop.f32.mrf.mxu0
      %v2121 = vadd.f32 0.0, %v2120
      %v2122 = vpop.f32.mrf.mxu0
      %v2123 = vadd.f32 0.0, %v2122
      %2124 = vmatmul.bf16.gmra.mxu0 %v2061
      %v2125 = vpop.f32.mrf.mxu0
      %v2126 = vadd.f32 0.0, %v2125
      %v2127 = vpop.f32.mrf.mxu0
      %v2128 = vadd.f32 0.0, %v2127
      %2129 = vmatmul.bf16.gmra.mxu0 %v2064
      %v2130 = vpop.f32.mrf.mxu0
      %v2131 = vadd.f32 0.0, %v2130
      %v2132 = vpop.f32.mrf.mxu0
      %v2133 = vadd.f32 0.0, %v2132
      %2134 = vmatmul.bf16.gmra.mxu0 %v2067
      %v2135 = vpop.f32.mrf.mxu0
      %v2136 = vadd.f32 0.0, %v2135
      %v2137 = vpop.f32.mrf.mxu0
      %v2138 = vadd.f32 0.0, %v2137
      %2139 = vmatmul.bf16.gmra.mxu0 %v2070
      %v2140 = vpop.f32.mrf.mxu0
      %v2141 = vadd.f32 0.0, %v2140
      %v2142 = vpop.f32.mrf.mxu0
      %v2143 = vadd.f32 0.0, %v2142
      %2144 = vmatmul.bf16.gmra.mxu0 %v2073
      %v2145 = vpop.f32.mrf.mxu0
      %v2146 = vadd.f32 0.0, %v2145
      %v2147 = vpop.f32.mrf.mxu0
      %v2148 = vadd.f32 0.0, %v2147
      %2149 = vmatmul.bf16.gmra.mxu0 %v2076
      %v2150 = vpop.f32.mrf.mxu0
      %v2151 = vadd.f32 0.0, %v2150
      %v2152 = vpop.f32.mrf.mxu0
      %v2153 = vadd.f32 0.0, %v2152
      %2154 = vmatmul.bf16.gmra.mxu0 %v2079
      %v2155 = vpop.f32.mrf.mxu0
      %v2156 = vadd.f32 0.0, %v2155
      %v2157 = vpop.f32.mrf.mxu0
      %v2158 = vadd.f32 0.0, %v2157
      %2159 = vmatmul.bf16.gmra.mxu0 %v2082
      %v2160 = vpop.f32.mrf.mxu0
      %v2161 = vadd.f32 0.0, %v2160
      %v2162 = vpop.f32.mrf.mxu0
      %v2163 = vadd.f32 0.0, %v2162
      %2164 = vmatmul.bf16.gmra.mxu0 %v2085
      %v2165 = vpop.f32.mrf.mxu0
      %v2166 = vadd.f32 0.0, %v2165
      %v2167 = vpop.f32.mrf.mxu0
      %v2168 = vadd.f32 0.0, %v2167
      %2169 = vmatmul.bf16.gmra.mxu0 %v2088
      %v2170 = vpop.f32.mrf.mxu0
      %v2171 = vadd.f32 0.0, %v2170
      %v2172 = vpop.f32.mrf.mxu0
      %v2173 = vadd.f32 0.0, %v2172
      %2174 = vmatmul.bf16.gmra.mxu0 %v2091
      %v2175 = vpop.f32.mrf.mxu0
      %v2176 = vadd.f32 0.0, %v2175
      %v2177 = vpop.f32.mrf.mxu0
      %v2178 = vadd.f32 0.0, %v2177
      %2179 = vmatmul.bf16.gmra.mxu0 %v2094
      %v2180 = vpop.f32.mrf.mxu0
      %v2181 = vadd.f32 0.0, %v2180
      %v2182 = vpop.f32.mrf.mxu0
      %v2183 = vadd.f32 0.0, %v2182
      %2184 = vdwg.mxu0
      %v2185 = vld [vmem:[#allocation2] sm:$0xff]
      %v2186 = vld [vmem:[#allocation2 + $0x8] sm:$0xff]
      %v2187 = vld [vmem:[#allocation2 + $0x10] sm:$0xff]
      %v2188 = vld [vmem:[#allocation2 + $0x18] sm:$0xff]
      %v2189 = vld [vmem:[#allocation2 + $0x20] sm:$0xff]
      %v2190 = vld [vmem:[#allocation2 + $0x28] sm:$0xff]
      %v2191 = vld [vmem:[#allocation2 + $0x30] sm:$0xff]
      %v2192 = vld [vmem:[#allocation2 + $0x38] sm:$0xff]
      %v2193 = vld [vmem:[#allocation2 + $0x40] sm:$0xff]
      %v2194 = vld [vmem:[#allocation2 + $0x48] sm:$0xff]
      %v2195 = vld [vmem:[#allocation2 + $0x50] sm:$0xff]
      %v2196 = vld [vmem:[#allocation2 + $0x58] sm:$0xff]
      %v2197 = vld [vmem:[#allocation2 + $0x60] sm:$0xff]
      %v2198 = vld [vmem:[#allocation2 + $0x68] sm:$0xff]
      %v2199 = vld [vmem:[#allocation2 + $0x70] sm:$0xff]
      %v2200 = vld [vmem:[#allocation2 + $0x78] sm:$0xff]
      %v2201 = vld [vmem:[#allocation2 + $0x80] sm:$0xff]
      %v2202 = vld [vmem:[#allocation2 + $0x88] sm:$0xff]
      %v2203 = vld [vmem:[#allocation2 + $0x90] sm:$0xff]
      %v2204 = vld [vmem:[#allocation2 + $0x98] sm:$0xff]
      %v2205 = vld [vmem:[#allocation2 + $0xa0] sm:$0xff]
      %v2206 = vld [vmem:[#allocation2 + $0xa8] sm:$0xff]
      %v2207 = vld [vmem:[#allocation2 + $0xb0] sm:$0xff]
      %v2208 = vld [vmem:[#allocation2 + $0xb8] sm:$0xff]
      %v2209 = vld [vmem:[#allocation2 + $0xc0] sm:$0xff]
      %v2210 = vld [vmem:[#allocation2 + $0xc8] sm:$0xff]
      %v2211 = vld [vmem:[#allocation2 + $0xd0] sm:$0xff]
      %v2212 = vld [vmem:[#allocation2 + $0xd8] sm:$0xff]
      %v2213 = vld [vmem:[#allocation2 + $0xe0] sm:$0xff]
      %v2214 = vld [vmem:[#allocation2 + $0xe8] sm:$0xff]
      %v2215 = vld [vmem:[#allocation2 + $0xf0] sm:$0xff]
      %v2216 = vld [vmem:[#allocation2 + $0xf8] sm:$0xff]
      %v2217 = vadd.f32 %v2185, %v2106
      %v2218 = vadd.f32 %v2186, %v2108
      %v2219 = vadd.f32 %v2187, %v2111
      %v2220 = vadd.f32 %v2188, %v2113
      %v2221 = vadd.f32 %v2189, %v2116
      %v2222 = vadd.f32 %v2190, %v2118
      %v2223 = vadd.f32 %v2191, %v2121
      %v2224 = vadd.f32 %v2192, %v2123
      %v2225 = vadd.f32 %v2193, %v2126
      %v2226 = vadd.f32 %v2194, %v2128
      %v2227 = vadd.f32 %v2195, %v2131
      %v2228 = vadd.f32 %v2196, %v2133
      %v2229 = vadd.f32 %v2197, %v2136
      %v2230 = vadd.f32 %v2198, %v2138
      %v2231 = vadd.f32 %v2199, %v2141
      %v2232 = vadd.f32 %v2200, %v2143
      %v2233 = vadd.f32 %v2201, %v2146
      %v2234 = vadd.f32 %v2202, %v2148
      %v2235 = vadd.f32 %v2203, %v2151
      %v2236 = vadd.f32 %v2204, %v2153
      %v2237 = vadd.f32 %v2205, %v2156
      %v2238 = vadd.f32 %v2206, %v2158
      %v2239 = vadd.f32 %v2207, %v2161
      %v2240 = vadd.f32 %v2208, %v2163
      %v2241 = vadd.f32 %v2209, %v2166
      %v2242 = vadd.f32 %v2210, %v2168
      %v2243 = vadd.f32 %v2211, %v2171
      %v2244 = vadd.f32 %v2212, %v2173
      %v2245 = vadd.f32 %v2213, %v2176
      %v2246 = vadd.f32 %v2214, %v2178
      %v2247 = vadd.f32 %v2215, %v2181
      %v2248 = vadd.f32 %v2216, %v2183
      %2249 = vst.msk [vmem:[#allocation2] sm:$0xff] %vm521, %v2217
      %2250 = vst.msk [vmem:[#allocation2 + $0x8] sm:$0xff] %vm521, %v2218
      %2251 = vst.msk [vmem:[#allocation2 + $0x10] sm:$0xff] %vm521, %v2219
      %2252 = vst.msk [vmem:[#allocation2 + $0x18] sm:$0xff] %vm521, %v2220
      %2253 = vst.msk [vmem:[#allocation2 + $0x20] sm:$0xff] %vm521, %v2221
      %2254 = vst.msk [vmem:[#allocation2 + $0x28] sm:$0xff] %vm521, %v2222
      %2255 = vst.msk [vmem:[#allocation2 + $0x30] sm:$0xff] %vm521, %v2223
      %2256 = vst.msk [vmem:[#allocation2 + $0x38] sm:$0xff] %vm521, %v2224
      %2257 = vst.msk [vmem:[#allocation2 + $0x40] sm:$0xff] %vm521, %v2225
      %2258 = vst.msk [vmem:[#allocation2 + $0x48] sm:$0xff] %vm521, %v2226
      %2259 = vst.msk [vmem:[#allocation2 + $0x50] sm:$0xff] %vm521, %v2227
      %2260 = vst.msk [vmem:[#allocation2 + $0x58] sm:$0xff] %vm521, %v2228
      %2261 = vst.msk [vmem:[#allocation2 + $0x60] sm:$0xff] %vm521, %v2229
      %2262 = vst.msk [vmem:[#allocation2 + $0x68] sm:$0xff] %vm521, %v2230
      %2263 = vst.msk [vmem:[#allocation2 + $0x70] sm:$0xff] %vm521, %v2231
      %2264 = vst.msk [vmem:[#allocation2 + $0x78] sm:$0xff] %vm521, %v2232
      %2265 = vst.msk [vmem:[#allocation2 + $0x80] sm:$0xff] %vm521, %v2233
      %2266 = vst.msk [vmem:[#allocation2 + $0x88] sm:$0xff] %vm521, %v2234
      %2267 = vst.msk [vmem:[#allocation2 + $0x90] sm:$0xff] %vm521, %v2235
      %2268 = vst.msk [vmem:[#allocation2 + $0x98] sm:$0xff] %vm521, %v2236
      %2269 = vst.msk [vmem:[#allocation2 + $0xa0] sm:$0xff] %vm521, %v2237
      %2270 = vst.msk [vmem:[#allocation2 + $0xa8] sm:$0xff] %vm521, %v2238
      %2271 = vst.msk [vmem:[#allocation2 + $0xb0] sm:$0xff] %vm521, %v2239
      %2272 = vst.msk [vmem:[#allocation2 + $0xb8] sm:$0xff] %vm521, %v2240
      %2273 = vst.msk [vmem:[#allocation2 + $0xc0] sm:$0xff] %vm521, %v2241
      %2274 = vst.msk [vmem:[#allocation2 + $0xc8] sm:$0xff] %vm521, %v2242
      %2275 = vst.msk [vmem:[#allocation2 + $0xd0] sm:$0xff] %vm521, %v2243
      %2276 = vst.msk [vmem:[#allocation2 + $0xd8] sm:$0xff] %vm521, %v2244
      %2277 = vst.msk [vmem:[#allocation2 + $0xe0] sm:$0xff] %vm521, %v2245
      %2278 = vst.msk [vmem:[#allocation2 + $0xe8] sm:$0xff] %vm521, %v2246
      %2279 = vst.msk [vmem:[#allocation2 + $0xf0] sm:$0xff] %vm521, %v2247
      %2280 = vst.msk [vmem:[#allocation2 + $0xf8] sm:$0xff] %vm521, %v2248
      %v2281 = vld [vmem:[%s251 + $0x10] sm:$0xe]
      %v2282 = vld [vmem:[%s251 + $0x14] sm:$0xf]
      %v2283 = vld [vmem:[%s251 + $0x18] sm:$0xf]
      %v2284 = vld [vmem:[%s251 + $0x1c] sm:$0xf]
      %v2285 = vld [vmem:[%s251 + $0x20] sm:$0xf]
      %v2286 = vld [vmem:[%s251 + $0x24] sm:$0xf]
      %v2287 = vld [vmem:[%s251 + $0x28] sm:$0xf]
      %v2288 = vld [vmem:[%s251 + $0x2c] sm:$0xf]
      %v2289 = vld [vmem:[%s251 + $0x30] sm:$0xf]
      %v2290 = vld [vmem:[%s251 + $0x34] sm:$0xf]
      %v2291 = vld [vmem:[%s251 + $0x38] sm:$0xf]
      %v2292 = vld [vmem:[%s251 + $0x3c] sm:$0xf]
      %v2293 = vld [vmem:[%s251 + $0x40] sm:$0xf]
      %v2294 = vld [vmem:[%s251 + $0x44] sm:$0xf]
      %v2295 = vld [vmem:[%s251 + $0x48] sm:$0xf]
      %v2296 = vld [vmem:[%s251 + $0x4c] sm:$0xf]
      %v2297 = vld [vmem:[%s251 + $0x50] sm:$0xf]
      %v2298 = vld [vmem:[%s251 + $0x54] sm:$0xf]
      %v2299 = vld [vmem:[%s251 + $0x58] sm:$0xf]
      %v2300 = vld [vmem:[%s251 + $0x5c] sm:$0xf]
      %v2301 = vld [vmem:[%s251 + $0x60] sm:$0xf]
      %v2302 = vld [vmem:[%s251 + $0x64] sm:$0xf]
      %v2303 = vld [vmem:[%s251 + $0x68] sm:$0xf]
      %v2304 = vld [vmem:[%s251 + $0x6c] sm:$0xf]
      %v2305 = vld [vmem:[%s251 + $0x70] sm:$0xf]
      %v2306 = vld [vmem:[%s251 + $0x74] sm:$0xf]
      %v2307 = vld [vmem:[%s251 + $0x78] sm:$0xf]
      %v2308 = vld [vmem:[%s251 + $0x7c] sm:$0xf]
      %v2309 = vld [vmem:[%s251 + $0x80] sm:$0xf]
      %v2310 = vld [vmem:[%s251 + $0x84] sm:$0xf]
      %v2311 = vld [vmem:[%s251 + $0x88] sm:$0xf]
      %v2312 = vld [vmem:[%s251 + $0x8c] sm:$0xf]
      %v2313 = vld [vmem:[%s251 + $0x90] sm:$0x1]
      %s2314 = scalar_lea.vmem %s1, 40
      %v2315 = vld [vmem:[%s2314] sm:$0xf]
      %v2316 = vld [vmem:[%s2314 + $0x4] sm:$0xf]
      %v2350 = vunpack.c.l.b16 %v2281
      %v2351 = vunpack.c.l.b16 %v2282
      %v2352 = vunpack.c.l.b16 %v2283
      %v2353 = vunpack.c.l.b16 %v2284
      %v2354 = vunpack.c.l.b16 %v2285
      %v2355 = vunpack.c.l.b16 %v2286
      %v2356 = vunpack.c.l.b16 %v2287
      %v2357 = vunpack.c.l.b16 %v2288
      %v2358 = vunpack.c.l.b16 %v2289
      %v2359 = vunpack.c.l.b16 %v2290
      %v2360 = vunpack.c.l.b16 %v2291
      %v2361 = vunpack.c.l.b16 %v2292
      %v2362 = vunpack.c.l.b16 %v2293
      %v2363 = vunpack.c.l.b16 %v2294
      %v2364 = vunpack.c.l.b16 %v2295
      %v2365 = vunpack.c.l.b16 %v2296
      %v2366 = vunpack.c.l.b16 %v2297
      %v2367 = vunpack.c.l.b16 %v2298
      %v2368 = vunpack.c.l.b16 %v2299
      %v2369 = vunpack.c.l.b16 %v2300
      %v2370 = vunpack.c.l.b16 %v2301
      %v2371 = vunpack.c.l.b16 %v2302
      %v2372 = vunpack.c.l.b16 %v2303
      %v2373 = vunpack.c.l.b16 %v2304
      %v2374 = vunpack.c.l.b16 %v2305
      %v2375 = vunpack.c.l.b16 %v2306
      %v2376 = vunpack.c.l.b16 %v2307
      %v2377 = vunpack.c.l.b16 %v2308
      %v2378 = vunpack.c.l.b16 %v2309
      %v2379 = vunpack.c.l.b16 %v2310
      %v2380 = vunpack.c.l.b16 %v2311
      %v2381 = vunpack.c.l.b16 %v2312
      %v2382 = vunpack.c.l.b16 %v2313
      %v2383 = vpack.c.b16 %v2351, %v2350
      %v2384 = vpack.c.b16 %v2353, %v2352
      %v2385 = vpack.c.b16 %v2355, %v2354
      %v2386 = vpack.c.b16 %v2357, %v2356
      %v2387 = vpack.c.b16 %v2359, %v2358
      %v2388 = vpack.c.b16 %v2361, %v2360
      %v2389 = vpack.c.b16 %v2363, %v2362
      %v2390 = vpack.c.b16 %v2365, %v2364
      %v2391 = vpack.c.b16 %v2367, %v2366
      %v2392 = vpack.c.b16 %v2369, %v2368
      %v2393 = vpack.c.b16 %v2371, %v2370
      %v2394 = vpack.c.b16 %v2373, %v2372
      %v2395 = vpack.c.b16 %v2375, %v2374
      %v2396 = vpack.c.b16 %v2377, %v2376
      %v2397 = vpack.c.b16 %v2379, %v2378
      %v2398 = vpack.c.b16 %v2381, %v2380
      %v2399 = vpack.c.b16 %v2382, %v2382
      %v2400 = vrot.slane %v2383, 1
      %v2401 = vrot.slane %v2384, 1
      %v2402 = vsel %vm1164, %v2400, %v2401
      %v2403 = vrot.slane %v2385, 1
      %v2404 = vsel %vm1164, %v2401, %v2403
      %v2405 = vrot.slane %v2386, 1
      %v2406 = vsel %vm1164, %v2403, %v2405
      %v2407 = vrot.slane %v2387, 1
      %v2408 = vsel %vm1164, %v2405, %v2407
      %v2409 = vrot.slane %v2388, 1
      %v2410 = vsel %vm1164, %v2407, %v2409
      %v2411 = vrot.slane %v2389, 1
      %v2412 = vsel %vm1164, %v2409, %v2411
      %v2413 = vrot.slane %v2390, 1
      %v2414 = vsel %vm1164, %v2411, %v2413
      %v2415 = vrot.slane %v2391, 1
      %v2416 = vsel %vm1164, %v2413, %v2415
      %v2417 = vrot.slane %v2392, 1
      %v2418 = vsel %vm1164, %v2415, %v2417
      %v2419 = vrot.slane %v2393, 1
      %v2420 = vsel %vm1164, %v2417, %v2419
      %v2421 = vrot.slane %v2394, 1
      %v2422 = vsel %vm1164, %v2419, %v2421
      %v2423 = vrot.slane %v2395, 1
      %v2424 = vsel %vm1164, %v2421, %v2423
      %v2425 = vrot.slane %v2396, 1
      %v2426 = vsel %vm1164, %v2423, %v2425
      %v2427 = vrot.slane %v2397, 1
      %v2428 = vsel %vm1164, %v2425, %v2427
      %v2429 = vrot.slane %v2398, 1
      %v2430 = vsel %vm1164, %v2427, %v2429
      %v2431 = vrot.slane %v2399, 1
      %v2432 = vsel %vm1164, %v2429, %v2431
      %v2435 = vunpack.c.l.b16 %v2315
      %v2436 = vunpack.c.l.b16 %v2316
      %v2437 = vpack.c.b16 %v2436, %v2435
      %v2440 = vsel %vm383, %v2402, 0
      %v2443 = vsel %vm383, %v2404, 0
      %v2446 = vsel %vm383, %v2406, 0
      %v2449 = vsel %vm383, %v2408, 0
      %v2452 = vsel %vm383, %v2410, 0
      %v2455 = vsel %vm383, %v2412, 0
      %v2458 = vsel %vm383, %v2414, 0
      %v2461 = vsel %vm383, %v2416, 0
      %v2464 = vsel %vm383, %v2418, 0
      %v2467 = vsel %vm383, %v2420, 0
      %v2470 = vsel %vm383, %v2422, 0
      %v2473 = vsel %vm383, %v2424, 0
      %v2476 = vsel %vm383, %v2426, 0
      %v2479 = vsel %vm383, %v2428, 0
      %v2482 = vsel %vm383, %v2430, 0
      %v2485 = vsel %vm383, %v2432, 0
      %2487 = vmatpush.bf16.msra.mxu0 0
      %2488 = vmatpush.bf16.msra.mxu0 0
      %2489 = vmatpush.bf16.msra.mxu0 0
      %2490 = vmatpush.bf16.msra.mxu0 0
      %2491 = vmatpush.bf16.msra.mxu0 0
      %2492 = vmatpush.bf16.msra.mxu0 0
      %2493 = vmatpush.bf16.msra.mxu0 0
      %2494 = vmatpush.bf16.msra.mxu0 %v2437
      %2495 = vmatmul.bf16.gmra.mxu0 %v2440
      %v2496 = vpop.f32.mrf.mxu0
      %v2497 = vadd.f32 0.0, %v2496
      %v2498 = vpop.f32.mrf.mxu0
      %v2499 = vadd.f32 0.0, %v2498
      %2500 = vmatmul.bf16.gmra.mxu0 %v2443
      %v2501 = vpop.f32.mrf.mxu0
      %v2502 = vadd.f32 0.0, %v2501
      %v2503 = vpop.f32.mrf.mxu0
      %v2504 = vadd.f32 0.0, %v2503
      %2505 = vmatmul.bf16.gmra.mxu0 %v2446
      %v2506 = vpop.f32.mrf.mxu0
      %v2507 = vadd.f32 0.0, %v2506
      %v2508 = vpop.f32.mrf.mxu0
      %v2509 = vadd.f32 0.0, %v2508
      %2510 = vmatmul.bf16.gmra.mxu0 %v2449
      %v2511 = vpop.f32.mrf.mxu0
      %v2512 = vadd.f32 0.0, %v2511
      %v2513 = vpop.f32.mrf.mxu0
      %v2514 = vadd.f32 0.0, %v2513
      %2515 = vmatmul.bf16.gmra.mxu0 %v2452
      %v2516 = vpop.f32.mrf.mxu0
      %v2517 = vadd.f32 0.0, %v2516
      %v2518 = vpop.f32.mrf.mxu0
      %v2519 = vadd.f32 0.0, %v2518
      %2520 = vmatmul.bf16.gmra.mxu0 %v2455
      %v2521 = vpop.f32.mrf.mxu0
      %v2522 = vadd.f32 0.0, %v2521
      %v2523 = vpop.f32.mrf.mxu0
      %v2524 = vadd.f32 0.0, %v2523
      %2525 = vmatmul.bf16.gmra.mxu0 %v2458
      %v2526 = vpop.f32.mrf.mxu0
      %v2527 = vadd.f32 0.0, %v2526
      %v2528 = vpop.f32.mrf.mxu0
      %v2529 = vadd.f32 0.0, %v2528
      %2530 = vmatmul.bf16.gmra.mxu0 %v2461
      %v2531 = vpop.f32.mrf.mxu0
      %v2532 = vadd.f32 0.0, %v2531
      %v2533 = vpop.f32.mrf.mxu0
      %v2534 = vadd.f32 0.0, %v2533
      %2535 = vmatmul.bf16.gmra.mxu0 %v2464
      %v2536 = vpop.f32.mrf.mxu0
      %v2537 = vadd.f32 0.0, %v2536
      %v2538 = vpop.f32.mrf.mxu0
      %v2539 = vadd.f32 0.0, %v2538
      %2540 = vmatmul.bf16.gmra.mxu0 %v2467
      %v2541 = vpop.f32.mrf.mxu0
      %v2542 = vadd.f32 0.0, %v2541
      %v2543 = vpop.f32.mrf.mxu0
      %v2544 = vadd.f32 0.0, %v2543
      %2545 = vmatmul.bf16.gmra.mxu0 %v2470
      %v2546 = vpop.f32.mrf.mxu0
      %v2547 = vadd.f32 0.0, %v2546
      %v2548 = vpop.f32.mrf.mxu0
      %v2549 = vadd.f32 0.0, %v2548
      %2550 = vmatmul.bf16.gmra.mxu0 %v2473
      %v2551 = vpop.f32.mrf.mxu0
      %v2552 = vadd.f32 0.0, %v2551
      %v2553 = vpop.f32.mrf.mxu0
      %v2554 = vadd.f32 0.0, %v2553
      %2555 = vmatmul.bf16.gmra.mxu0 %v2476
      %v2556 = vpop.f32.mrf.mxu0
      %v2557 = vadd.f32 0.0, %v2556
      %v2558 = vpop.f32.mrf.mxu0
      %v2559 = vadd.f32 0.0, %v2558
      %2560 = vmatmul.bf16.gmra.mxu0 %v2479
      %v2561 = vpop.f32.mrf.mxu0
      %v2562 = vadd.f32 0.0, %v2561
      %v2563 = vpop.f32.mrf.mxu0
      %v2564 = vadd.f32 0.0, %v2563
      %2565 = vmatmul.bf16.gmra.mxu0 %v2482
      %v2566 = vpop.f32.mrf.mxu0
      %v2567 = vadd.f32 0.0, %v2566
      %v2568 = vpop.f32.mrf.mxu0
      %v2569 = vadd.f32 0.0, %v2568
      %2570 = vmatmul.bf16.gmra.mxu0 %v2485
      %v2571 = vpop.f32.mrf.mxu0
      %v2572 = vadd.f32 0.0, %v2571
      %v2573 = vpop.f32.mrf.mxu0
      %v2574 = vadd.f32 0.0, %v2573
      %2575 = vdwg.mxu0
      %v2576 = vld [vmem:[#allocation2] sm:$0xff]
      %v2577 = vld [vmem:[#allocation2 + $0x8] sm:$0xff]
      %v2578 = vld [vmem:[#allocation2 + $0x10] sm:$0xff]
      %v2579 = vld [vmem:[#allocation2 + $0x18] sm:$0xff]
      %v2580 = vld [vmem:[#allocation2 + $0x20] sm:$0xff]
      %v2581 = vld [vmem:[#allocation2 + $0x28] sm:$0xff]
      %v2582 = vld [vmem:[#allocation2 + $0x30] sm:$0xff]
      %v2583 = vld [vmem:[#allocation2 + $0x38] sm:$0xff]
      %v2584 = vld [vmem:[#allocation2 + $0x40] sm:$0xff]
      %v2585 = vld [vmem:[#allocation2 + $0x48] sm:$0xff]
      %v2586 = vld [vmem:[#allocation2 + $0x50] sm:$0xff]
      %v2587 = vld [vmem:[#allocation2 + $0x58] sm:$0xff]
      %v2588 = vld [vmem:[#allocation2 + $0x60] sm:$0xff]
      %v2589 = vld [vmem:[#allocation2 + $0x68] sm:$0xff]
      %v2590 = vld [vmem:[#allocation2 + $0x70] sm:$0xff]
      %v2591 = vld [vmem:[#allocation2 + $0x78] sm:$0xff]
      %v2592 = vld [vmem:[#allocation2 + $0x80] sm:$0xff]
      %v2593 = vld [vmem:[#allocation2 + $0x88] sm:$0xff]
      %v2594 = vld [vmem:[#allocation2 + $0x90] sm:$0xff]
      %v2595 = vld [vmem:[#allocation2 + $0x98] sm:$0xff]
      %v2596 = vld [vmem:[#allocation2 + $0xa0] sm:$0xff]
      %v2597 = vld [vmem:[#allocation2 + $0xa8] sm:$0xff]
      %v2598 = vld [vmem:[#allocation2 + $0xb0] sm:$0xff]
      %v2599 = vld [vmem:[#allocation2 + $0xb8] sm:$0xff]
      %v2600 = vld [vmem:[#allocation2 + $0xc0] sm:$0xff]
      %v2601 = vld [vmem:[#allocation2 + $0xc8] sm:$0xff]
      %v2602 = vld [vmem:[#allocation2 + $0xd0] sm:$0xff]
      %v2603 = vld [vmem:[#allocation2 + $0xd8] sm:$0xff]
      %v2604 = vld [vmem:[#allocation2 + $0xe0] sm:$0xff]
      %v2605 = vld [vmem:[#allocation2 + $0xe8] sm:$0xff]
      %v2606 = vld [vmem:[#allocation2 + $0xf0] sm:$0xff]
      %v2607 = vld [vmem:[#allocation2 + $0xf8] sm:$0xff]
      %v2608 = vadd.f32 %v2576, %v2497
      %v2609 = vadd.f32 %v2577, %v2499
      %v2610 = vadd.f32 %v2578, %v2502
      %v2611 = vadd.f32 %v2579, %v2504
      %v2612 = vadd.f32 %v2580, %v2507
      %v2613 = vadd.f32 %v2581, %v2509
      %v2614 = vadd.f32 %v2582, %v2512
      %v2615 = vadd.f32 %v2583, %v2514
      %v2616 = vadd.f32 %v2584, %v2517
      %v2617 = vadd.f32 %v2585, %v2519
      %v2618 = vadd.f32 %v2586, %v2522
      %v2619 = vadd.f32 %v2587, %v2524
      %v2620 = vadd.f32 %v2588, %v2527
      %v2621 = vadd.f32 %v2589, %v2529
      %v2622 = vadd.f32 %v2590, %v2532
      %v2623 = vadd.f32 %v2591, %v2534
      %v2624 = vadd.f32 %v2592, %v2537
      %v2625 = vadd.f32 %v2593, %v2539
      %v2626 = vadd.f32 %v2594, %v2542
      %v2627 = vadd.f32 %v2595, %v2544
      %v2628 = vadd.f32 %v2596, %v2547
      %v2629 = vadd.f32 %v2597, %v2549
      %v2630 = vadd.f32 %v2598, %v2552
      %v2631 = vadd.f32 %v2599, %v2554
      %v2632 = vadd.f32 %v2600, %v2557
      %v2633 = vadd.f32 %v2601, %v2559
      %v2634 = vadd.f32 %v2602, %v2562
      %v2635 = vadd.f32 %v2603, %v2564
      %v2636 = vadd.f32 %v2604, %v2567
      %v2637 = vadd.f32 %v2605, %v2569
      %v2638 = vadd.f32 %v2606, %v2572
      %v2639 = vadd.f32 %v2607, %v2574
      %2640 = vst.msk [vmem:[#allocation2] sm:$0xff] %vm521, %v2608
      %2641 = vst.msk [vmem:[#allocation2 + $0x8] sm:$0xff] %vm521, %v2609
      %2642 = vst.msk [vmem:[#allocation2 + $0x10] sm:$0xff] %vm521, %v2610
      %2643 = vst.msk [vmem:[#allocation2 + $0x18] sm:$0xff] %vm521, %v2611
      %2644 = vst.msk [vmem:[#allocation2 + $0x20] sm:$0xff] %vm521, %v2612
      %2645 = vst.msk [vmem:[#allocation2 + $0x28] sm:$0xff] %vm521, %v2613
      %2646 = vst.msk [vmem:[#allocation2 + $0x30] sm:$0xff] %vm521, %v2614
      %2647 = vst.msk [vmem:[#allocation2 + $0x38] sm:$0xff] %vm521, %v2615
      %2648 = vst.msk [vmem:[#allocation2 + $0x40] sm:$0xff] %vm521, %v2616
      %2649 = vst.msk [vmem:[#allocation2 + $0x48] sm:$0xff] %vm521, %v2617
      %2650 = vst.msk [vmem:[#allocation2 + $0x50] sm:$0xff] %vm521, %v2618
      %2651 = vst.msk [vmem:[#allocation2 + $0x58] sm:$0xff] %vm521, %v2619
      %2652 = vst.msk [vmem:[#allocation2 + $0x60] sm:$0xff] %vm521, %v2620
      %2653 = vst.msk [vmem:[#allocation2 + $0x68] sm:$0xff] %vm521, %v2621
      %2654 = vst.msk [vmem:[#allocation2 + $0x70] sm:$0xff] %vm521, %v2622
      %2655 = vst.msk [vmem:[#allocation2 + $0x78] sm:$0xff] %vm521, %v2623
      %2656 = vst.msk [vmem:[#allocation2 + $0x80] sm:$0xff] %vm521, %v2624
      %2657 = vst.msk [vmem:[#allocation2 + $0x88] sm:$0xff] %vm521, %v2625
      %2658 = vst.msk [vmem:[#allocation2 + $0x90] sm:$0xff] %vm521, %v2626
      %2659 = vst.msk [vmem:[#allocation2 + $0x98] sm:$0xff] %vm521, %v2627
      %2660 = vst.msk [vmem:[#allocation2 + $0xa0] sm:$0xff] %vm521, %v2628
      %2661 = vst.msk [vmem:[#allocation2 + $0xa8] sm:$0xff] %vm521, %v2629
      %2662 = vst.msk [vmem:[#allocation2 + $0xb0] sm:$0xff] %vm521, %v2630
      %2663 = vst.msk [vmem:[#allocation2 + $0xb8] sm:$0xff] %vm521, %v2631
      %2664 = vst.msk [vmem:[#allocation2 + $0xc0] sm:$0xff] %vm521, %v2632
      %2665 = vst.msk [vmem:[#allocation2 + $0xc8] sm:$0xff] %vm521, %v2633
      %2666 = vst.msk [vmem:[#allocation2 + $0xd0] sm:$0xff] %vm521, %v2634
      %2667 = vst.msk [vmem:[#allocation2 + $0xd8] sm:$0xff] %vm521, %v2635
      %2668 = vst.msk [vmem:[#allocation2 + $0xe0] sm:$0xff] %vm521, %v2636
      %2669 = vst.msk [vmem:[#allocation2 + $0xe8] sm:$0xff] %vm521, %v2637
      %2670 = vst.msk [vmem:[#allocation2 + $0xf0] sm:$0xff] %vm521, %v2638
      %2671 = vst.msk [vmem:[#allocation2 + $0xf8] sm:$0xff] %vm521, %v2639
      %v2672 = vld [vmem:[%s251 + $0x20] sm:$0xf]
      %v2673 = vld [vmem:[%s251 + $0x24] sm:$0xf]
      %v2674 = vld [vmem:[%s251 + $0x28] sm:$0xf]
      %v2675 = vld [vmem:[%s251 + $0x2c] sm:$0xf]
      %v2676 = vld [vmem:[%s251 + $0x30] sm:$0xf]
      %v2677 = vld [vmem:[%s251 + $0x34] sm:$0xf]
      %v2678 = vld [vmem:[%s251 + $0x38] sm:$0xf]
      %v2679 = vld [vmem:[%s251 + $0x3c] sm:$0xf]
      %v2680 = vld [vmem:[%s251 + $0x40] sm:$0xf]
      %v2681 = vld [vmem:[%s251 + $0x44] sm:$0xf]
      %v2682 = vld [vmem:[%s251 + $0x48] sm:$0xf]
      %v2683 = vld [vmem:[%s251 + $0x4c] sm:$0xf]
      %v2684 = vld [vmem:[%s251 + $0x50] sm:$0xf]
      %v2685 = vld [vmem:[%s251 + $0x54] sm:$0xf]
      %v2686 = vld [vmem:[%s251 + $0x58] sm:$0xf]
      %v2687 = vld [vmem:[%s251 + $0x5c] sm:$0xf]
      %v2688 = vld [vmem:[%s251 + $0x60] sm:$0xf]
      %v2689 = vld [vmem:[%s251 + $0x64] sm:$0xf]
      %v2690 = vld [vmem:[%s251 + $0x68] sm:$0xf]
      %v2691 = vld [vmem:[%s251 + $0x6c] sm:$0xf]
      %v2692 = vld [vmem:[%s251 + $0x70] sm:$0xf]
      %v2693 = vld [vmem:[%s251 + $0x74] sm:$0xf]
      %v2694 = vld [vmem:[%s251 + $0x78] sm:$0xf]
      %v2695 = vld [vmem:[%s251 + $0x7c] sm:$0xf]
      %v2696 = vld [vmem:[%s251 + $0x80] sm:$0xf]
      %v2697 = vld [vmem:[%s251 + $0x84] sm:$0xf]
      %v2698 = vld [vmem:[%s251 + $0x88] sm:$0xf]
      %v2699 = vld [vmem:[%s251 + $0x8c] sm:$0xf]
      %v2700 = vld [vmem:[%s251 + $0x90] sm:$0xf]
      %v2701 = vld [vmem:[%s251 + $0x94] sm:$0xf]
      %v2702 = vld [vmem:[%s251 + $0x98] sm:$0xf]
      %v2703 = vld [vmem:[%s251 + $0x9c] sm:$0xf]
      %s2704 = scalar_lea.vmem %s1, 48
      %v2705 = vld [vmem:[%s2704] sm:$0xf]
      %v2706 = vld [vmem:[%s2704 + $0x4] sm:$0xf]
      %v2739 = vunpack.c.l.b16 %v2672
      %v2740 = vunpack.c.l.b16 %v2673
      %v2741 = vunpack.c.l.b16 %v2674
      %v2742 = vunpack.c.l.b16 %v2675
      %v2743 = vunpack.c.l.b16 %v2676
      %v2744 = vunpack.c.l.b16 %v2677
      %v2745 = vunpack.c.l.b16 %v2678
      %v2746 = vunpack.c.l.b16 %v2679
      %v2747 = vunpack.c.l.b16 %v2680
      %v2748 = vunpack.c.l.b16 %v2681
      %v2749 = vunpack.c.l.b16 %v2682
      %v2750 = vunpack.c.l.b16 %v2683
      %v2751 = vunpack.c.l.b16 %v2684
      %v2752 = vunpack.c.l.b16 %v2685
      %v2753 = vunpack.c.l.b16 %v2686
      %v2754 = vunpack.c.l.b16 %v2687
      %v2755 = vunpack.c.l.b16 %v2688
      %v2756 = vunpack.c.l.b16 %v2689
      %v2757 = vunpack.c.l.b16 %v2690
      %v2758 = vunpack.c.l.b16 %v2691
      %v2759 = vunpack.c.l.b16 %v2692
      %v2760 = vunpack.c.l.b16 %v2693
      %v2761 = vunpack.c.l.b16 %v2694
      %v2762 = vunpack.c.l.b16 %v2695
      %v2763 = vunpack.c.l.b16 %v2696
      %v2764 = vunpack.c.l.b16 %v2697
      %v2765 = vunpack.c.l.b16 %v2698
      %v2766 = vunpack.c.l.b16 %v2699
      %v2767 = vunpack.c.l.b16 %v2700
      %v2768 = vunpack.c.l.b16 %v2701
      %v2769 = vunpack.c.l.b16 %v2702
      %v2770 = vunpack.c.l.b16 %v2703
      %v2771 = vpack.c.b16 %v2740, %v2739
      %v2772 = vpack.c.b16 %v2742, %v2741
      %v2773 = vpack.c.b16 %v2744, %v2743
      %v2774 = vpack.c.b16 %v2746, %v2745
      %v2775 = vpack.c.b16 %v2748, %v2747
      %v2776 = vpack.c.b16 %v2750, %v2749
      %v2777 = vpack.c.b16 %v2752, %v2751
      %v2778 = vpack.c.b16 %v2754, %v2753
      %v2779 = vpack.c.b16 %v2756, %v2755
      %v2780 = vpack.c.b16 %v2758, %v2757
      %v2781 = vpack.c.b16 %v2760, %v2759
      %v2782 = vpack.c.b16 %v2762, %v2761
      %v2783 = vpack.c.b16 %v2764, %v2763
      %v2784 = vpack.c.b16 %v2766, %v2765
      %v2785 = vpack.c.b16 %v2768, %v2767
      %v2786 = vpack.c.b16 %v2770, %v2769
      %v2789 = vunpack.c.l.b16 %v2705
      %v2790 = vunpack.c.l.b16 %v2706
      %v2791 = vpack.c.b16 %v2790, %v2789
      %v2794 = vsel %vm383, %v2771, 0
      %v2797 = vsel %vm383, %v2772, 0
      %v2800 = vsel %vm383, %v2773, 0
      %v2803 = vsel %vm383, %v2774, 0
      %v2806 = vsel %vm383, %v2775, 0
      %v2809 = vsel %vm383, %v2776, 0
      %v2812 = vsel %vm383, %v2777, 0
      %v2815 = vsel %vm383, %v2778, 0
      %v2818 = vsel %vm383, %v2779, 0
      %v2821 = vsel %vm383, %v2780, 0
      %v2824 = vsel %vm383, %v2781, 0
      %v2827 = vsel %vm383, %v2782, 0
      %v2830 = vsel %vm383, %v2783, 0
      %v2833 = vsel %vm383, %v2784, 0
      %v2836 = vsel %vm383, %v2785, 0
      %v2839 = vsel %vm383, %v2786, 0
      %2841 = vmatpush.bf16.msra.mxu0 0
      %2842 = vmatpush.bf16.msra.mxu0 0
      %2843 = vmatpush.bf16.msra.mxu0 0
      %2844 = vmatpush.bf16.msra.mxu0 0
      %2845 = vmatpush.bf16.msra.mxu0 0
      %2846 = vmatpush.bf16.msra.mxu0 0
      %2847 = vmatpush.bf16.msra.mxu0 0
      %2848 = vmatpush.bf16.msra.mxu0 %v2791
      %2849 = vmatmul.bf16.gmra.mxu0 %v2794
      %v2850 = vpop.f32.mrf.mxu0
      %v2851 = vadd.f32 0.0, %v2850
      %v2852 = vpop.f32.mrf.mxu0
      %v2853 = vadd.f32 0.0, %v2852
      %2854 = vmatmul.bf16.gmra.mxu0 %v2797
      %v2855 = vpop.f32.mrf.mxu0
      %v2856 = vadd.f32 0.0, %v2855
      %v2857 = vpop.f32.mrf.mxu0
      %v2858 = vadd.f32 0.0, %v2857
      %2859 = vmatmul.bf16.gmra.mxu0 %v2800
      %v2860 = vpop.f32.mrf.mxu0
      %v2861 = vadd.f32 0.0, %v2860
      %v2862 = vpop.f32.mrf.mxu0
      %v2863 = vadd.f32 0.0, %v2862
      %2864 = vmatmul.bf16.gmra.mxu0 %v2803
      %v2865 = vpop.f32.mrf.mxu0
      %v2866 = vadd.f32 0.0, %v2865
      %v2867 = vpop.f32.mrf.mxu0
      %v2868 = vadd.f32 0.0, %v2867
      %2869 = vmatmul.bf16.gmra.mxu0 %v2806
      %v2870 = vpop.f32.mrf.mxu0
      %v2871 = vadd.f32 0.0, %v2870
      %v2872 = vpop.f32.mrf.mxu0
      %v2873 = vadd.f32 0.0, %v2872
      %2874 = vmatmul.bf16.gmra.mxu0 %v2809
      %v2875 = vpop.f32.mrf.mxu0
      %v2876 = vadd.f32 0.0, %v2875
      %v2877 = vpop.f32.mrf.mxu0
      %v2878 = vadd.f32 0.0, %v2877
      %2879 = vmatmul.bf16.gmra.mxu0 %v2812
      %v2880 = vpop.f32.mrf.mxu0
      %v2881 = vadd.f32 0.0, %v2880
      %v2882 = vpop.f32.mrf.mxu0
      %v2883 = vadd.f32 0.0, %v2882
      %2884 = vmatmul.bf16.gmra.mxu0 %v2815
      %v2885 = vpop.f32.mrf.mxu0
      %v2886 = vadd.f32 0.0, %v2885
      %v2887 = vpop.f32.mrf.mxu0
      %v2888 = vadd.f32 0.0, %v2887
      %2889 = vmatmul.bf16.gmra.mxu0 %v2818
      %v2890 = vpop.f32.mrf.mxu0
      %v2891 = vadd.f32 0.0, %v2890
      %v2892 = vpop.f32.mrf.mxu0
      %v2893 = vadd.f32 0.0, %v2892
      %2894 = vmatmul.bf16.gmra.mxu0 %v2821
      %v2895 = vpop.f32.mrf.mxu0
      %v2896 = vadd.f32 0.0, %v2895
      %v2897 = vpop.f32.mrf.mxu0
      %v2898 = vadd.f32 0.0, %v2897
      %2899 = vmatmul.bf16.gmra.mxu0 %v2824
      %v2900 = vpop.f32.mrf.mxu0
      %v2901 = vadd.f32 0.0, %v2900
      %v2902 = vpop.f32.mrf.mxu0
      %v2903 = vadd.f32 0.0, %v2902
      %2904 = vmatmul.bf16.gmra.mxu0 %v2827
      %v2905 = vpop.f32.mrf.mxu0
      %v2906 = vadd.f32 0.0, %v2905
      %v2907 = vpop.f32.mrf.mxu0
      %v2908 = vadd.f32 0.0, %v2907
      %2909 = vmatmul.bf16.gmra.mxu0 %v2830
      %v2910 = vpop.f32.mrf.mxu0
      %v2911 = vadd.f32 0.0, %v2910
      %v2912 = vpop.f32.mrf.mxu0
      %v2913 = vadd.f32 0.0, %v2912
      %2914 = vmatmul.bf16.gmra.mxu0 %v2833
      %v2915 = vpop.f32.mrf.mxu0
      %v2916 = vadd.f32 0.0, %v2915
      %v2917 = vpop.f32.mrf.mxu0
      %v2918 = vadd.f32 0.0, %v2917
      %2919 = vmatmul.bf16.gmra.mxu0 %v2836
      %v2920 = vpop.f32.mrf.mxu0
      %v2921 = vadd.f32 0.0, %v2920
      %v2922 = vpop.f32.mrf.mxu0
      %v2923 = vadd.f32 0.0, %v2922
      %2924 = vmatmul.bf16.gmra.mxu0 %v2839
      %v2925 = vpop.f32.mrf.mxu0
      %v2926 = vadd.f32 0.0, %v2925
      %v2927 = vpop.f32.mrf.mxu0
      %v2928 = vadd.f32 0.0, %v2927
      %2929 = vdwg.mxu0
      %v2930 = vld [vmem:[#allocation2] sm:$0xff]
      %v2931 = vld [vmem:[#allocation2 + $0x8] sm:$0xff]
      %v2932 = vld [vmem:[#allocation2 + $0x10] sm:$0xff]
      %v2933 = vld [vmem:[#allocation2 + $0x18] sm:$0xff]
      %v2934 = vld [vmem:[#allocation2 + $0x20] sm:$0xff]
      %v2935 = vld [vmem:[#allocation2 + $0x28] sm:$0xff]
      %v2936 = vld [vmem:[#allocation2 + $0x30] sm:$0xff]
      %v2937 = vld [vmem:[#allocation2 + $0x38] sm:$0xff]
      %v2938 = vld [vmem:[#allocation2 + $0x40] sm:$0xff]
      %v2939 = vld [vmem:[#allocation2 + $0x48] sm:$0xff]
      %v2940 = vld [vmem:[#allocation2 + $0x50] sm:$0xff]
      %v2941 = vld [vmem:[#allocation2 + $0x58] sm:$0xff]
      %v2942 = vld [vmem:[#allocation2 + $0x60] sm:$0xff]
      %v2943 = vld [vmem:[#allocation2 + $0x68] sm:$0xff]
      %v2944 = vld [vmem:[#allocation2 + $0x70] sm:$0xff]
      %v2945 = vld [vmem:[#allocation2 + $0x78] sm:$0xff]
      %v2946 = vld [vmem:[#allocation2 + $0x80] sm:$0xff]
      %v2947 = vld [vmem:[#allocation2 + $0x88] sm:$0xff]
      %v2948 = vld [vmem:[#allocation2 + $0x90] sm:$0xff]
      %v2949 = vld [vmem:[#allocation2 + $0x98] sm:$0xff]
      %v2950 = vld [vmem:[#allocation2 + $0xa0] sm:$0xff]
      %v2951 = vld [vmem:[#allocation2 + $0xa8] sm:$0xff]
      %v2952 = vld [vmem:[#allocation2 + $0xb0] sm:$0xff]
      %v2953 = vld [vmem:[#allocation2 + $0xb8] sm:$0xff]
      %v2954 = vld [vmem:[#allocation2 + $0xc0] sm:$0xff]
      %v2955 = vld [vmem:[#allocation2 + $0xc8] sm:$0xff]
      %v2956 = vld [vmem:[#allocation2 + $0xd0] sm:$0xff]
      %v2957 = vld [vmem:[#allocation2 + $0xd8] sm:$0xff]
      %v2958 = vld [vmem:[#allocation2 + $0xe0] sm:$0xff]
      %v2959 = vld [vmem:[#allocation2 + $0xe8] sm:$0xff]
      %v2960 = vld [vmem:[#allocation2 + $0xf0] sm:$0xff]
      %v2961 = vld [vmem:[#allocation2 + $0xf8] sm:$0xff]
      %v2962 = vadd.f32 %v2930, %v2851
      %v2963 = vadd.f32 %v2931, %v2853
      %v2964 = vadd.f32 %v2932, %v2856
      %v2965 = vadd.f32 %v2933, %v2858
      %v2966 = vadd.f32 %v2934, %v2861
      %v2967 = vadd.f32 %v2935, %v2863
      %v2968 = vadd.f32 %v2936, %v2866
      %v2969 = vadd.f32 %v2937, %v2868
      %v2970 = vadd.f32 %v2938, %v2871
      %v2971 = vadd.f32 %v2939, %v2873
      %v2972 = vadd.f32 %v2940, %v2876
      %v2973 = vadd.f32 %v2941, %v2878
      %v2974 = vadd.f32 %v2942, %v2881
      %v2975 = vadd.f32 %v2943, %v2883
      %v2976 = vadd.f32 %v2944, %v2886
      %v2977 = vadd.f32 %v2945, %v2888
      %v2978 = vadd.f32 %v2946, %v2891
      %v2979 = vadd.f32 %v2947, %v2893
      %v2980 = vadd.f32 %v2948, %v2896
      %v2981 = vadd.f32 %v2949, %v2898
      %v2982 = vadd.f32 %v2950, %v2901
      %v2983 = vadd.f32 %v2951, %v2903
      %v2984 = vadd.f32 %v2952, %v2906
      %v2985 = vadd.f32 %v2953, %v2908
      %v2986 = vadd.f32 %v2954, %v2911
      %v2987 = vadd.f32 %v2955, %v2913
      %v2988 = vadd.f32 %v2956, %v2916
      %v2989 = vadd.f32 %v2957, %v2918
      %v2990 = vadd.f32 %v2958, %v2921
      %v2991 = vadd.f32 %v2959, %v2923
      %v2992 = vadd.f32 %v2960, %v2926
      %v2993 = vadd.f32 %v2961, %v2928
      %2994 = vst.msk [vmem:[#allocation2] sm:$0xff] %vm521, %v2962
      %2995 = vst.msk [vmem:[#allocation2 + $0x8] sm:$0xff] %vm521, %v2963
      %2996 = vst.msk [vmem:[#allocation2 + $0x10] sm:$0xff] %vm521, %v2964
      %2997 = vst.msk [vmem:[#allocation2 + $0x18] sm:$0xff] %vm521, %v2965
      %2998 = vst.msk [vmem:[#allocation2 + $0x20] sm:$0xff] %vm521, %v2966
      %2999 = vst.msk [vmem:[#allocation2 + $0x28] sm:$0xff] %vm521, %v2967
      %3000 = vst.msk [vmem:[#allocation2 + $0x30] sm:$0xff] %vm521, %v2968
      %3001 = vst.msk [vmem:[#allocation2 + $0x38] sm:$0xff] %vm521, %v2969
      %3002 = vst.msk [vmem:[#allocation2 + $0x40] sm:$0xff] %vm521, %v2970
      %3003 = vst.msk [vmem:[#allocation2 + $0x48] sm:$0xff] %vm521, %v2971
      %3004 = vst.msk [vmem:[#allocation2 + $0x50] sm:$0xff] %vm521, %v2972
      %3005 = vst.msk [vmem:[#allocation2 + $0x58] sm:$0xff] %vm521, %v2973
      %3006 = vst.msk [vmem:[#allocation2 + $0x60] sm:$0xff] %vm521, %v2974
      %3007 = vst.msk [vmem:[#allocation2 + $0x68] sm:$0xff] %vm521, %v2975
      %3008 = vst.msk [vmem:[#allocation2 + $0x70] sm:$0xff] %vm521, %v2976
      %3009 = vst.msk [vmem:[#allocation2 + $0x78] sm:$0xff] %vm521, %v2977
      %3010 = vst.msk [vmem:[#allocation2 + $0x80] sm:$0xff] %vm521, %v2978
      %3011 = vst.msk [vmem:[#allocation2 + $0x88] sm:$0xff] %vm521, %v2979
      %3012 = vst.msk [vmem:[#allocation2 + $0x90] sm:$0xff] %vm521, %v2980
      %3013 = vst.msk [vmem:[#allocation2 + $0x98] sm:$0xff] %vm521, %v2981
      %3014 = vst.msk [vmem:[#allocation2 + $0xa0] sm:$0xff] %vm521, %v2982
      %3015 = vst.msk [vmem:[#allocation2 + $0xa8] sm:$0xff] %vm521, %v2983
      %3016 = vst.msk [vmem:[#allocation2 + $0xb0] sm:$0xff] %vm521, %v2984
      %3017 = vst.msk [vmem:[#allocation2 + $0xb8] sm:$0xff] %vm521, %v2985
      %3018 = vst.msk [vmem:[#allocation2 + $0xc0] sm:$0xff] %vm521, %v2986
      %3019 = vst.msk [vmem:[#allocation2 + $0xc8] sm:$0xff] %vm521, %v2987
      %3020 = vst.msk [vmem:[#allocation2 + $0xd0] sm:$0xff] %vm521, %v2988
      %3021 = vst.msk [vmem:[#allocation2 + $0xd8] sm:$0xff] %vm521, %v2989
      %3022 = vst.msk [vmem:[#allocation2 + $0xe0] sm:$0xff] %vm521, %v2990
      %3023 = vst.msk [vmem:[#allocation2 + $0xe8] sm:$0xff] %vm521, %v2991
      %3024 = vst.msk [vmem:[#allocation2 + $0xf0] sm:$0xff] %vm521, %v2992
      %3025 = vst.msk [vmem:[#allocation2 + $0xf8] sm:$0xff] %vm521, %v2993
      %v3026 = vld [vmem:[%s251 + $0x20] sm:$0xf]
      %v3027 = vld [vmem:[%s251 + $0x24] sm:$0xf]
      %v3028 = vld [vmem:[%s251 + $0x28] sm:$0xf]
      %v3029 = vld [vmem:[%s251 + $0x2c] sm:$0xf]
      %v3030 = vld [vmem:[%s251 + $0x30] sm:$0xf]
      %v3031 = vld [vmem:[%s251 + $0x34] sm:$0xf]
      %v3032 = vld [vmem:[%s251 + $0x38] sm:$0xf]
      %v3033 = vld [vmem:[%s251 + $0x3c] sm:$0xf]
      %v3034 = vld [vmem:[%s251 + $0x40] sm:$0xf]
      %v3035 = vld [vmem:[%s251 + $0x44] sm:$0xf]
      %v3036 = vld [vmem:[%s251 + $0x48] sm:$0xf]
      %v3037 = vld [vmem:[%s251 + $0x4c] sm:$0xf]
      %v3038 = vld [vmem:[%s251 + $0x50] sm:$0xf]
      %v3039 = vld [vmem:[%s251 + $0x54] sm:$0xf]
      %v3040 = vld [vmem:[%s251 + $0x58] sm:$0xf]
      %v3041 = vld [vmem:[%s251 + $0x5c] sm:$0xf]
      %v3042 = vld [vmem:[%s251 + $0x60] sm:$0xf]
      %v3043 = vld [vmem:[%s251 + $0x64] sm:$0xf]
      %v3044 = vld [vmem:[%s251 + $0x68] sm:$0xf]
      %v3045 = vld [vmem:[%s251 + $0x6c] sm:$0xf]
      %v3046 = vld [vmem:[%s251 + $0x70] sm:$0xf]
      %v3047 = vld [vmem:[%s251 + $0x74] sm:$0xf]
      %v3048 = vld [vmem:[%s251 + $0x78] sm:$0xf]
      %v3049 = vld [vmem:[%s251 + $0x7c] sm:$0xf]
      %v3050 = vld [vmem:[%s251 + $0x80] sm:$0xf]
      %v3051 = vld [vmem:[%s251 + $0x84] sm:$0xf]
      %v3052 = vld [vmem:[%s251 + $0x88] sm:$0xf]
      %v3053 = vld [vmem:[%s251 + $0x8c] sm:$0xf]
      %v3054 = vld [vmem:[%s251 + $0x90] sm:$0xf]
      %v3055 = vld [vmem:[%s251 + $0x94] sm:$0xf]
      %v3056 = vld [vmem:[%s251 + $0x98] sm:$0xf]
      %v3057 = vld [vmem:[%s251 + $0x9c] sm:$0xf]
      %v3058 = vld [vmem:[%s251 + $0xa0] sm:$0x1]
      %s3059 = scalar_lea.vmem %s1, 56
      %v3060 = vld [vmem:[%s3059] sm:$0xf]
      %v3061 = vld [vmem:[%s3059 + $0x4] sm:$0xf]
      %v3095 = vunpack.c.l.b16 %v3026
      %v3096 = vunpack.c.l.b16 %v3027
      %v3097 = vunpack.c.l.b16 %v3028
      %v3098 = vunpack.c.l.b16 %v3029
      %v3099 = vunpack.c.l.b16 %v3030
      %v3100 = vunpack.c.l.b16 %v3031
      %v3101 = vunpack.c.l.b16 %v3032
      %v3102 = vunpack.c.l.b16 %v3033
      %v3103 = vunpack.c.l.b16 %v3034
      %v3104 = vunpack.c.l.b16 %v3035
      %v3105 = vunpack.c.l.b16 %v3036
      %v3106 = vunpack.c.l.b16 %v3037
      %v3107 = vunpack.c.l.b16 %v3038
      %v3108 = vunpack.c.l.b16 %v3039
      %v3109 = vunpack.c.l.b16 %v3040
      %v3110 = vunpack.c.l.b16 %v3041
      %v3111 = vunpack.c.l.b16 %v3042
      %v3112 = vunpack.c.l.b16 %v3043
      %v3113 = vunpack.c.l.b16 %v3044
      %v3114 = vunpack.c.l.b16 %v3045
      %v3115 = vunpack.c.l.b16 %v3046
      %v3116 = vunpack.c.l.b16 %v3047
      %v3117 = vunpack.c.l.b16 %v3048
      %v3118 = vunpack.c.l.b16 %v3049
      %v3119 = vunpack.c.l.b16 %v3050
      %v3120 = vunpack.c.l.b16 %v3051
      %v3121 = vunpack.c.l.b16 %v3052
      %v3122 = vunpack.c.l.b16 %v3053
      %v3123 = vunpack.c.l.b16 %v3054
      %v3124 = vunpack.c.l.b16 %v3055
      %v3125 = vunpack.c.l.b16 %v3056
      %v3126 = vunpack.c.l.b16 %v3057
      %v3127 = vunpack.c.l.b16 %v3058
      %v3128 = vpack.c.b16 %v3096, %v3095
      %v3129 = vpack.c.b16 %v3098, %v3097
      %v3130 = vpack.c.b16 %v3100, %v3099
      %v3131 = vpack.c.b16 %v3102, %v3101
      %v3132 = vpack.c.b16 %v3104, %v3103
      %v3133 = vpack.c.b16 %v3106, %v3105
      %v3134 = vpack.c.b16 %v3108, %v3107
      %v3135 = vpack.c.b16 %v3110, %v3109
      %v3136 = vpack.c.b16 %v3112, %v3111
      %v3137 = vpack.c.b16 %v3114, %v3113
      %v3138 = vpack.c.b16 %v3116, %v3115
      %v3139 = vpack.c.b16 %v3118, %v3117
      %v3140 = vpack.c.b16 %v3120, %v3119
      %v3141 = vpack.c.b16 %v3122, %v3121
      %v3142 = vpack.c.b16 %v3124, %v3123
      %v3143 = vpack.c.b16 %v3126, %v3125
      %v3144 = vpack.c.b16 %v3127, %v3127
      %v3146 = vshrl.u32 %v3128, 16
      %v3148 = vshll.u32 %v3128, 16
      %v3150 = vrot.slane %v3148, 1
      %v3151 = vor.u32 %v3146, %v3150
      %v3153 = vshll.u32 %v3129, 16
      %v3155 = vrot.slane %v3153, 1
      %v3156 = vsel %vm673, %v3151, %v3155
      %v3157 = vshrl.u32 %v3129, 16
      %v3159 = vor.u32 %v3157, %v3155
      %v3161 = vshll.u32 %v3130, 16
      %v3163 = vrot.slane %v3161, 1
      %v3164 = vsel %vm673, %v3159, %v3163
      %v3165 = vshrl.u32 %v3130, 16
      %v3167 = vor.u32 %v3165, %v3163
      %v3169 = vshll.u32 %v3131, 16
      %v3171 = vrot.slane %v3169, 1
      %v3172 = vsel %vm673, %v3167, %v3171
      %v3173 = vshrl.u32 %v3131, 16
      %v3175 = vor.u32 %v3173, %v3171
      %v3177 = vshll.u32 %v3132, 16
      %v3179 = vrot.slane %v3177, 1
      %v3180 = vsel %vm673, %v3175, %v3179
      %v3181 = vshrl.u32 %v3132, 16
      %v3183 = vor.u32 %v3181, %v3179
      %v3185 = vshll.u32 %v3133, 16
      %v3187 = vrot.slane %v3185, 1
      %v3188 = vsel %vm673, %v3183, %v3187
      %v3189 = vshrl.u32 %v3133, 16
      %v3191 = vor.u32 %v3189, %v3187
      %v3193 = vshll.u32 %v3134, 16
      %v3195 = vrot.slane %v3193, 1
      %v3196 = vsel %vm673, %v3191, %v3195
      %v3197 = vshrl.u32 %v3134, 16
      %v3199 = vor.u32 %v3197, %v3195
      %v3201 = vshll.u32 %v3135, 16
      %v3203 = vrot.slane %v3201, 1
      %v3204 = vsel %vm673, %v3199, %v3203
      %v3205 = vshrl.u32 %v3135, 16
      %v3207 = vor.u32 %v3205, %v3203
      %v3209 = vshll.u32 %v3136, 16
      %v3211 = vrot.slane %v3209, 1
      %v3212 = vsel %vm673, %v3207, %v3211
      %v3213 = vshrl.u32 %v3136, 16
      %v3215 = vor.u32 %v3213, %v3211
      %v3217 = vshll.u32 %v3137, 16
      %v3219 = vrot.slane %v3217, 1
      %v3220 = vsel %vm673, %v3215, %v3219
      %v3221 = vshrl.u32 %v3137, 16
      %v3223 = vor.u32 %v3221, %v3219
      %v3225 = vshll.u32 %v3138, 16
      %v3227 = vrot.slane %v3225, 1
      %v3228 = vsel %vm673, %v3223, %v3227
      %v3229 = vshrl.u32 %v3138, 16
      %v3231 = vor.u32 %v3229, %v3227
      %v3233 = vshll.u32 %v3139, 16
      %v3235 = vrot.slane %v3233, 1
      %v3236 = vsel %vm673, %v3231, %v3235
      %v3237 = vshrl.u32 %v3139, 16
      %v3239 = vor.u32 %v3237, %v3235
      %v3241 = vshll.u32 %v3140, 16
      %v3243 = vrot.slane %v3241, 1
      %v3244 = vsel %vm673, %v3239, %v3243
      %v3245 = vshrl.u32 %v3140, 16
      %v3247 = vor.u32 %v3245, %v3243
      %v3249 = vshll.u32 %v3141, 16
      %v3251 = vrot.slane %v3249, 1
      %v3252 = vsel %vm673, %v3247, %v3251
      %v3253 = vshrl.u32 %v3141, 16
      %v3255 = vor.u32 %v3253, %v3251
      %v3257 = vshll.u32 %v3142, 16
      %v3259 = vrot.slane %v3257, 1
      %v3260 = vsel %vm673, %v3255, %v3259
      %v3261 = vshrl.u32 %v3142, 16
      %v3263 = vor.u32 %v3261, %v3259
      %v3265 = vshll.u32 %v3143, 16
      %v3267 = vrot.slane %v3265, 1
      %v3268 = vsel %vm673, %v3263, %v3267
      %v3269 = vshrl.u32 %v3143, 16
      %v3271 = vor.u32 %v3269, %v3267
      %v3273 = vshll.u32 %v3144, 16
      %v3275 = vrot.slane %v3273, 1
      %v3276 = vsel %vm673, %v3271, %v3275
      %v3279 = vunpack.c.l.b16 %v3060
      %v3280 = vunpack.c.l.b16 %v3061
      %v3281 = vpack.c.b16 %v3280, %v3279
      %v3284 = vsel %vm383, %v3156, 0
      %v3287 = vsel %vm383, %v3164, 0
      %v3290 = vsel %vm383, %v3172, 0
      %v3293 = vsel %vm383, %v3180, 0
      %v3296 = vsel %vm383, %v3188, 0
      %v3299 = vsel %vm383, %v3196, 0
      %v3302 = vsel %vm383, %v3204, 0
      %v3305 = vsel %vm383, %v3212, 0
      %v3308 = vsel %vm383, %v3220, 0
      %v3311 = vsel %vm383, %v3228, 0
      %v3314 = vsel %vm383, %v3236, 0
      %v3317 = vsel %vm383, %v3244, 0
      %v3320 = vsel %vm383, %v3252, 0
      %v3323 = vsel %vm383, %v3260, 0
      %v3326 = vsel %vm383, %v3268, 0
      %v3329 = vsel %vm383, %v3276, 0
      %3331 = vmatpush.bf16.msra.mxu0 0
      %3332 = vmatpush.bf16.msra.mxu0 0
      %3333 = vmatpush.bf16.msra.mxu0 0
      %3334 = vmatpush.bf16.msra.mxu0 0
      %3335 = vmatpush.bf16.msra.mxu0 0
      %3336 = vmatpush.bf16.msra.mxu0 0
      %3337 = vmatpush.bf16.msra.mxu0 0
      %3338 = vmatpush.bf16.msra.mxu0 %v3281
      %3339 = vmatmul.bf16.gmra.mxu0 %v3284
      %v3340 = vpop.f32.mrf.mxu0
      %v3341 = vadd.f32 0.0, %v3340
      %v3342 = vpop.f32.mrf.mxu0
      %v3343 = vadd.f32 0.0, %v3342
      %3344 = vmatmul.bf16.gmra.mxu0 %v3287
      %v3345 = vpop.f32.mrf.mxu0
      %v3346 = vadd.f32 0.0, %v3345
      %v3347 = vpop.f32.mrf.mxu0
      %v3348 = vadd.f32 0.0, %v3347
      %3349 = vmatmul.bf16.gmra.mxu0 %v3290
      %v3350 = vpop.f32.mrf.mxu0
      %v3351 = vadd.f32 0.0, %v3350
      %v3352 = vpop.f32.mrf.mxu0
      %v3353 = vadd.f32 0.0, %v3352
      %3354 = vmatmul.bf16.gmra.mxu0 %v3293
      %v3355 = vpop.f32.mrf.mxu0
      %v3356 = vadd.f32 0.0, %v3355
      %v3357 = vpop.f32.mrf.mxu0
      %v3358 = vadd.f32 0.0, %v3357
      %3359 = vmatmul.bf16.gmra.mxu0 %v3296
      %v3360 = vpop.f32.mrf.mxu0
      %v3361 = vadd.f32 0.0, %v3360
      %v3362 = vpop.f32.mrf.mxu0
      %v3363 = vadd.f32 0.0, %v3362
      %3364 = vmatmul.bf16.gmra.mxu0 %v3299
      %v3365 = vpop.f32.mrf.mxu0
      %v3366 = vadd.f32 0.0, %v3365
      %v3367 = vpop.f32.mrf.mxu0
      %v3368 = vadd.f32 0.0, %v3367
      %3369 = vmatmul.bf16.gmra.mxu0 %v3302
      %v3370 = vpop.f32.mrf.mxu0
      %v3371 = vadd.f32 0.0, %v3370
      %v3372 = vpop.f32.mrf.mxu0
      %v3373 = vadd.f32 0.0, %v3372
      %3374 = vmatmul.bf16.gmra.mxu0 %v3305
      %v3375 = vpop.f32.mrf.mxu0
      %v3376 = vadd.f32 0.0, %v3375
      %v3377 = vpop.f32.mrf.mxu0
      %v3378 = vadd.f32 0.0, %v3377
      %3379 = vmatmul.bf16.gmra.mxu0 %v3308
      %v3380 = vpop.f32.mrf.mxu0
      %v3381 = vadd.f32 0.0, %v3380
      %v3382 = vpop.f32.mrf.mxu0
      %v3383 = vadd.f32 0.0, %v3382
      %3384 = vmatmul.bf16.gmra.mxu0 %v3311
      %v3385 = vpop.f32.mrf.mxu0
      %v3386 = vadd.f32 0.0, %v3385
      %v3387 = vpop.f32.mrf.mxu0
      %v3388 = vadd.f32 0.0, %v3387
      %3389 = vmatmul.bf16.gmra.mxu0 %v3314
      %v3390 = vpop.f32.mrf.mxu0
      %v3391 = vadd.f32 0.0, %v3390
      %v3392 = vpop.f32.mrf.mxu0
      %v3393 = vadd.f32 0.0, %v3392
      %3394 = vmatmul.bf16.gmra.mxu0 %v3317
      %v3395 = vpop.f32.mrf.mxu0
      %v3396 = vadd.f32 0.0, %v3395
      %v3397 = vpop.f32.mrf.mxu0
      %v3398 = vadd.f32 0.0, %v3397
      %3399 = vmatmul.bf16.gmra.mxu0 %v3320
      %v3400 = vpop.f32.mrf.mxu0
      %v3401 = vadd.f32 0.0, %v3400
      %v3402 = vpop.f32.mrf.mxu0
      %v3403 = vadd.f32 0.0, %v3402
      %3404 = vmatmul.bf16.gmra.mxu0 %v3323
      %v3405 = vpop.f32.mrf.mxu0
      %v3406 = vadd.f32 0.0, %v3405
      %v3407 = vpop.f32.mrf.mxu0
      %v3408 = vadd.f32 0.0, %v3407
      %3409 = vmatmul.bf16.gmra.mxu0 %v3326
      %v3410 = vpop.f32.mrf.mxu0
      %v3411 = vadd.f32 0.0, %v3410
      %v3412 = vpop.f32.mrf.mxu0
      %v3413 = vadd.f32 0.0, %v3412
      %3414 = vmatmul.bf16.gmra.mxu0 %v3329
      %v3415 = vpop.f32.mrf.mxu0
      %v3416 = vadd.f32 0.0, %v3415
      %v3417 = vpop.f32.mrf.mxu0
      %v3418 = vadd.f32 0.0, %v3417
      %3419 = vdwg.mxu0
      %v3420 = vld [vmem:[#allocation2] sm:$0xff]
      %v3421 = vld [vmem:[#allocation2 + $0x8] sm:$0xff]
      %v3422 = vld [vmem:[#allocation2 + $0x10] sm:$0xff]
      %v3423 = vld [vmem:[#allocation2 + $0x18] sm:$0xff]
      %v3424 = vld [vmem:[#allocation2 + $0x20] sm:$0xff]
      %v3425 = vld [vmem:[#allocation2 + $0x28] sm:$0xff]
      %v3426 = vld [vmem:[#allocation2 + $0x30] sm:$0xff]
      %v3427 = vld [vmem:[#allocation2 + $0x38] sm:$0xff]
      %v3428 = vld [vmem:[#allocation2 + $0x40] sm:$0xff]
      %v3429 = vld [vmem:[#allocation2 + $0x48] sm:$0xff]
      %v3430 = vld [vmem:[#allocation2 + $0x50] sm:$0xff]
      %v3431 = vld [vmem:[#allocation2 + $0x58] sm:$0xff]
      %v3432 = vld [vmem:[#allocation2 + $0x60] sm:$0xff]
      %v3433 = vld [vmem:[#allocation2 + $0x68] sm:$0xff]
      %v3434 = vld [vmem:[#allocation2 + $0x70] sm:$0xff]
      %v3435 = vld [vmem:[#allocation2 + $0x78] sm:$0xff]
      %v3436 = vld [vmem:[#allocation2 + $0x80] sm:$0xff]
      %v3437 = vld [vmem:[#allocation2 + $0x88] sm:$0xff]
      %v3438 = vld [vmem:[#allocation2 + $0x90] sm:$0xff]
      %v3439 = vld [vmem:[#allocation2 + $0x98] sm:$0xff]
      %v3440 = vld [vmem:[#allocation2 + $0xa0] sm:$0xff]
      %v3441 = vld [vmem:[#allocation2 + $0xa8] sm:$0xff]
      %v3442 = vld [vmem:[#allocation2 + $0xb0] sm:$0xff]
      %v3443 = vld [vmem:[#allocation2 + $0xb8] sm:$0xff]
      %v3444 = vld [vmem:[#allocation2 + $0xc0] sm:$0xff]
      %v3445 = vld [vmem:[#allocation2 + $0xc8] sm:$0xff]
      %v3446 = vld [vmem:[#allocation2 + $0xd0] sm:$0xff]
      %v3447 = vld [vmem:[#allocation2 + $0xd8] sm:$0xff]
      %v3448 = vld [vmem:[#allocation2 + $0xe0] sm:$0xff]
      %v3449 = vld [vmem:[#allocation2 + $0xe8] sm:$0xff]
      %v3450 = vld [vmem:[#allocation2 + $0xf0] sm:$0xff]
      %v3451 = vld [vmem:[#allocation2 + $0xf8] sm:$0xff]
      %v3452 = vadd.f32 %v3420, %v3341
      %v3453 = vadd.f32 %v3421, %v3343
      %v3454 = vadd.f32 %v3422, %v3346
      %v3455 = vadd.f32 %v3423, %v3348
      %v3456 = vadd.f32 %v3424, %v3351
      %v3457 = vadd.f32 %v3425, %v3353
      %v3458 = vadd.f32 %v3426, %v3356
      %v3459 = vadd.f32 %v3427, %v3358
      %v3460 = vadd.f32 %v3428, %v3361
      %v3461 = vadd.f32 %v3429, %v3363
      %v3462 = vadd.f32 %v3430, %v3366
      %v3463 = vadd.f32 %v3431, %v3368
      %v3464 = vadd.f32 %v3432, %v3371
      %v3465 = vadd.f32 %v3433, %v3373
      %v3466 = vadd.f32 %v3434, %v3376
      %v3467 = vadd.f32 %v3435, %v3378
      %v3468 = vadd.f32 %v3436, %v3381
      %v3469 = vadd.f32 %v3437, %v3383
      %v3470 = vadd.f32 %v3438, %v3386
      %v3471 = vadd.f32 %v3439, %v3388
      %v3472 = vadd.f32 %v3440, %v3391
      %v3473 = vadd.f32 %v3441, %v3393
      %v3474 = vadd.f32 %v3442, %v3396
      %v3475 = vadd.f32 %v3443, %v3398
      %v3476 = vadd.f32 %v3444, %v3401
      %v3477 = vadd.f32 %v3445, %v3403
      %v3478 = vadd.f32 %v3446, %v3406
      %v3479 = vadd.f32 %v3447, %v3408
      %v3480 = vadd.f32 %v3448, %v3411
      %v3481 = vadd.f32 %v3449, %v3413
      %v3482 = vadd.f32 %v3450, %v3416
      %v3483 = vadd.f32 %v3451, %v3418
      %3484 = vst.msk [vmem:[#allocation2] sm:$0xff] %vm521, %v3452
      %3485 = vst.msk [vmem:[#allocation2 + $0x8] sm:$0xff] %vm521, %v3453
      %3486 = vst.msk [vmem:[#allocation2 + $0x10] sm:$0xff] %vm521, %v3454
      %3487 = vst.msk [vmem:[#allocation2 + $0x18] sm:$0xff] %vm521, %v3455
      %3488 = vst.msk [vmem:[#allocation2 + $0x20] sm:$0xff] %vm521, %v3456
      %3489 = vst.msk [vmem:[#allocation2 + $0x28] sm:$0xff] %vm521, %v3457
      %3490 = vst.msk [vmem:[#allocation2 + $0x30] sm:$0xff] %vm521, %v3458
      %3491 = vst.msk [vmem:[#allocation2 + $0x38] sm:$0xff] %vm521, %v3459
      %3492 = vst.msk [vmem:[#allocation2 + $0x40] sm:$0xff] %vm521, %v3460
      %3493 = vst.msk [vmem:[#allocation2 + $0x48] sm:$0xff] %vm521, %v3461
      %3494 = vst.msk [vmem:[#allocation2 + $0x50] sm:$0xff] %vm521, %v3462
      %3495 = vst.msk [vmem:[#allocation2 + $0x58] sm:$0xff] %vm521, %v3463
      %3496 = vst.msk [vmem:[#allocation2 + $0x60] sm:$0xff] %vm521, %v3464
      %3497 = vst.msk [vmem:[#allocation2 + $0x68] sm:$0xff] %vm521, %v3465
      %3498 = vst.msk [vmem:[#allocation2 + $0x70] sm:$0xff] %vm521, %v3466
      %3499 = vst.msk [vmem:[#allocation2 + $0x78] sm:$0xff] %vm521, %v3467
      %3500 = vst.msk [vmem:[#allocation2 + $0x80] sm:$0xff] %vm521, %v3468
      %3501 = vst.msk [vmem:[#allocation2 + $0x88] sm:$0xff] %vm521, %v3469
      %3502 = vst.msk [vmem:[#allocation2 + $0x90] sm:$0xff] %vm521, %v3470
      %3503 = vst.msk [vmem:[#allocation2 + $0x98] sm:$0xff] %vm521, %v3471
      %3504 = vst.msk [vmem:[#allocation2 + $0xa0] sm:$0xff] %vm521, %v3472
      %3505 = vst.msk [vmem:[#allocation2 + $0xa8] sm:$0xff] %vm521, %v3473
      %3506 = vst.msk [vmem:[#allocation2 + $0xb0] sm:$0xff] %vm521, %v3474
      %3507 = vst.msk [vmem:[#allocation2 + $0xb8] sm:$0xff] %vm521, %v3475
      %3508 = vst.msk [vmem:[#allocation2 + $0xc0] sm:$0xff] %vm521, %v3476
      %3509 = vst.msk [vmem:[#allocation2 + $0xc8] sm:$0xff] %vm521, %v3477
      %3510 = vst.msk [vmem:[#allocation2 + $0xd0] sm:$0xff] %vm521, %v3478
      %3511 = vst.msk [vmem:[#allocation2 + $0xd8] sm:$0xff] %vm521, %v3479
      %3512 = vst.msk [vmem:[#allocation2 + $0xe0] sm:$0xff] %vm521, %v3480
      %3513 = vst.msk [vmem:[#allocation2 + $0xe8] sm:$0xff] %vm521, %v3481
      %3514 = vst.msk [vmem:[#allocation2 + $0xf0] sm:$0xff] %vm521, %v3482
      %3515 = vst.msk [vmem:[#allocation2 + $0xf8] sm:$0xff] %vm521, %v3483
      %v3516 = vld [vmem:[%s251 + $0x20] sm:$0xe]
      %v3517 = vld [vmem:[%s251 + $0x24] sm:$0xf]
      %v3518 = vld [vmem:[%s251 + $0x28] sm:$0xf]
      %v3519 = vld [vmem:[%s251 + $0x2c] sm:$0xf]
      %v3520 = vld [vmem:[%s251 + $0x30] sm:$0xf]
      %v3521 = vld [vmem:[%s251 + $0x34] sm:$0xf]
      %v3522 = vld [vmem:[%s251 + $0x38] sm:$0xf]
      %v3523 = vld [vmem:[%s251 + $0x3c] sm:$0xf]
      %v3524 = vld [vmem:[%s251 + $0x40] sm:$0xf]
      %v3525 = vld [vmem:[%s251 + $0x44] sm:$0xf]
      %v3526 = vld [vmem:[%s251 + $0x48] sm:$0xf]
      %v3527 = vld [vmem:[%s251 + $0x4c] sm:$0xf]
      %v3528 = vld [vmem:[%s251 + $0x50] sm:$0xf]
      %v3529 = vld [vmem:[%s251 + $0x54] sm:$0xf]
      %v3530 = vld [vmem:[%s251 + $0x58] sm:$0xf]
      %v3531 = vld [vmem:[%s251 + $0x5c] sm:$0xf]
      %v3532 = vld [vmem:[%s251 + $0x60] sm:$0xf]
      %v3533 = vld [vmem:[%s251 + $0x64] sm:$0xf]
      %v3534 = vld [vmem:[%s251 + $0x68] sm:$0xf]
      %v3535 = vld [vmem:[%s251 + $0x6c] sm:$0xf]
      %v3536 = vld [vmem:[%s251 + $0x70] sm:$0xf]
      %v3537 = vld [vmem:[%s251 + $0x74] sm:$0xf]
      %v3538 = vld [vmem:[%s251 + $0x78] sm:$0xf]
      %v3539 = vld [vmem:[%s251 + $0x7c] sm:$0xf]
      %v3540 = vld [vmem:[%s251 + $0x80] sm:$0xf]
      %v3541 = vld [vmem:[%s251 + $0x84] sm:$0xf]
      %v3542 = vld [vmem:[%s251 + $0x88] sm:$0xf]
      %v3543 = vld [vmem:[%s251 + $0x8c] sm:$0xf]
      %v3544 = vld [vmem:[%s251 + $0x90] sm:$0xf]
      %v3545 = vld [vmem:[%s251 + $0x94] sm:$0xf]
      %v3546 = vld [vmem:[%s251 + $0x98] sm:$0xf]
      %v3547 = vld [vmem:[%s251 + $0x9c] sm:$0xf]
      %v3548 = vld [vmem:[%s251 + $0xa0] sm:$0x1]
      %s3549 = scalar_lea.vmem %s1, 64
      %v3550 = vld [vmem:[%s3549] sm:$0xf]
      %v3551 = vld [vmem:[%s3549 + $0x4] sm:$0xf]
      %v3585 = vunpack.c.l.b16 %v3516
      %v3586 = vunpack.c.l.b16 %v3517
      %v3587 = vunpack.c.l.b16 %v3518
      %v3588 = vunpack.c.l.b16 %v3519
      %v3589 = vunpack.c.l.b16 %v3520
      %v3590 = vunpack.c.l.b16 %v3521
      %v3591 = vunpack.c.l.b16 %v3522
      %v3592 = vunpack.c.l.b16 %v3523
      %v3593 = vunpack.c.l.b16 %v3524
      %v3594 = vunpack.c.l.b16 %v3525
      %v3595 = vunpack.c.l.b16 %v3526
      %v3596 = vunpack.c.l.b16 %v3527
      %v3597 = vunpack.c.l.b16 %v3528
      %v3598 = vunpack.c.l.b16 %v3529
      %v3599 = vunpack.c.l.b16 %v3530
      %v3600 = vunpack.c.l.b16 %v3531
      %v3601 = vunpack.c.l.b16 %v3532
      %v3602 = vunpack.c.l.b16 %v3533
      %v3603 = vunpack.c.l.b16 %v3534
      %v3604 = vunpack.c.l.b16 %v3535
      %v3605 = vunpack.c.l.b16 %v3536
      %v3606 = vunpack.c.l.b16 %v3537
      %v3607 = vunpack.c.l.b16 %v3538
      %v3608 = vunpack.c.l.b16 %v3539
      %v3609 = vunpack.c.l.b16 %v3540
      %v3610 = vunpack.c.l.b16 %v3541
      %v3611 = vunpack.c.l.b16 %v3542
      %v3612 = vunpack.c.l.b16 %v3543
      %v3613 = vunpack.c.l.b16 %v3544
      %v3614 = vunpack.c.l.b16 %v3545
      %v3615 = vunpack.c.l.b16 %v3546
      %v3616 = vunpack.c.l.b16 %v3547
      %v3617 = vunpack.c.l.b16 %v3548
      %v3618 = vpack.c.b16 %v3586, %v3585
      %v3619 = vpack.c.b16 %v3588, %v3587
      %v3620 = vpack.c.b16 %v3590, %v3589
      %v3621 = vpack.c.b16 %v3592, %v3591
      %v3622 = vpack.c.b16 %v3594, %v3593
      %v3623 = vpack.c.b16 %v3596, %v3595
      %v3624 = vpack.c.b16 %v3598, %v3597
      %v3625 = vpack.c.b16 %v3600, %v3599
      %v3626 = vpack.c.b16 %v3602, %v3601
      %v3627 = vpack.c.b16 %v3604, %v3603
      %v3628 = vpack.c.b16 %v3606, %v3605
      %v3629 = vpack.c.b16 %v3608, %v3607
      %v3630 = vpack.c.b16 %v3610, %v3609
      %v3631 = vpack.c.b16 %v3612, %v3611
      %v3632 = vpack.c.b16 %v3614, %v3613
      %v3633 = vpack.c.b16 %v3616, %v3615
      %v3634 = vpack.c.b16 %v3617, %v3617
      %v3635 = vrot.slane %v3618, 1
      %v3636 = vrot.slane %v3619, 1
      %v3637 = vsel %vm1164, %v3635, %v3636
      %v3638 = vrot.slane %v3620, 1
      %v3639 = vsel %vm1164, %v3636, %v3638
      %v3640 = vrot.slane %v3621, 1
      %v3641 = vsel %vm1164, %v3638, %v3640
      %v3642 = vrot.slane %v3622, 1
      %v3643 = vsel %vm1164, %v3640, %v3642
      %v3644 = vrot.slane %v3623, 1
      %v3645 = vsel %vm1164, %v3642, %v3644
      %v3646 = vrot.slane %v3624, 1
      %v3647 = vsel %vm1164, %v3644, %v3646
      %v3648 = vrot.slane %v3625, 1
      %v3649 = vsel %vm1164, %v3646, %v3648
      %v3650 = vrot.slane %v3626, 1
      %v3651 = vsel %vm1164, %v3648, %v3650
      %v3652 = vrot.slane %v3627, 1
      %v3653 = vsel %vm1164, %v3650, %v3652
      %v3654 = vrot.slane %v3628, 1
      %v3655 = vsel %vm1164, %v3652, %v3654
      %v3656 = vrot.slane %v3629, 1
      %v3657 = vsel %vm1164, %v3654, %v3656
      %v3658 = vrot.slane %v3630, 1
      %v3659 = vsel %vm1164, %v3656, %v3658
      %v3660 = vrot.slane %v3631, 1
      %v3661 = vsel %vm1164, %v3658, %v3660
      %v3662 = vrot.slane %v3632, 1
      %v3663 = vsel %vm1164, %v3660, %v3662
      %v3664 = vrot.slane %v3633, 1
      %v3665 = vsel %vm1164, %v3662, %v3664
      %v3666 = vrot.slane %v3634, 1
      %v3667 = vsel %vm1164, %v3664, %v3666
      %v3670 = vunpack.c.l.b16 %v3550
      %v3671 = vunpack.c.l.b16 %v3551
      %v3672 = vpack.c.b16 %v3671, %v3670
      %v3675 = vsel %vm383, %v3637, 0
      %v3678 = vsel %vm383, %v3639, 0
      %v3681 = vsel %vm383, %v3641, 0
      %v3684 = vsel %vm383, %v3643, 0
      %v3687 = vsel %vm383, %v3645, 0
      %v3690 = vsel %vm383, %v3647, 0
      %v3693 = vsel %vm383, %v3649, 0
      %v3696 = vsel %vm383, %v3651, 0
      %v3699 = vsel %vm383, %v3653, 0
      %v3702 = vsel %vm383, %v3655, 0
      %v3705 = vsel %vm383, %v3657, 0
      %v3708 = vsel %vm383, %v3659, 0
      %v3711 = vsel %vm383, %v3661, 0
      %v3714 = vsel %vm383, %v3663, 0
      %v3717 = vsel %vm383, %v3665, 0
      %v3720 = vsel %vm383, %v3667, 0
      %3722 = vmatpush.bf16.msra.mxu0 0
      %3723 = vmatpush.bf16.msra.mxu0 0
      %3724 = vmatpush.bf16.msra.mxu0 0
      %3725 = vmatpush.bf16.msra.mxu0 0
      %3726 = vmatpush.bf16.msra.mxu0 0
      %3727 = vmatpush.bf16.msra.mxu0 0
      %3728 = vmatpush.bf16.msra.mxu0 0
      %3729 = vmatpush.bf16.msra.mxu0 %v3672
      %3730 = vmatmul.bf16.gmra.mxu0 %v3675
      %v3731 = vpop.f32.mrf.mxu0
      %v3732 = vadd.f32 0.0, %v3731
      %v3733 = vpop.f32.mrf.mxu0
      %v3734 = vadd.f32 0.0, %v3733
      %3735 = vmatmul.bf16.gmra.mxu0 %v3678
      %v3736 = vpop.f32.mrf.mxu0
      %v3737 = vadd.f32 0.0, %v3736
      %v3738 = vpop.f32.mrf.mxu0
      %v3739 = vadd.f32 0.0, %v3738
      %3740 = vmatmul.bf16.gmra.mxu0 %v3681
      %v3741 = vpop.f32.mrf.mxu0
      %v3742 = vadd.f32 0.0, %v3741
      %v3743 = vpop.f32.mrf.mxu0
      %v3744 = vadd.f32 0.0, %v3743
      %3745 = vmatmul.bf16.gmra.mxu0 %v3684
      %v3746 = vpop.f32.mrf.mxu0
      %v3747 = vadd.f32 0.0, %v3746
      %v3748 = vpop.f32.mrf.mxu0
      %v3749 = vadd.f32 0.0, %v3748
      %3750 = vmatmul.bf16.gmra.mxu0 %v3687
      %v3751 = vpop.f32.mrf.mxu0
      %v3752 = vadd.f32 0.0, %v3751
      %v3753 = vpop.f32.mrf.mxu0
      %v3754 = vadd.f32 0.0, %v3753
      %3755 = vmatmul.bf16.gmra.mxu0 %v3690
      %v3756 = vpop.f32.mrf.mxu0
      %v3757 = vadd.f32 0.0, %v3756
      %v3758 = vpop.f32.mrf.mxu0
      %v3759 = vadd.f32 0.0, %v3758
      %3760 = vmatmul.bf16.gmra.mxu0 %v3693
      %v3761 = vpop.f32.mrf.mxu0
      %v3762 = vadd.f32 0.0, %v3761
      %v3763 = vpop.f32.mrf.mxu0
      %v3764 = vadd.f32 0.0, %v3763
      %3765 = vmatmul.bf16.gmra.mxu0 %v3696
      %v3766 = vpop.f32.mrf.mxu0
      %v3767 = vadd.f32 0.0, %v3766
      %v3768 = vpop.f32.mrf.mxu0
      %v3769 = vadd.f32 0.0, %v3768
      %3770 = vmatmul.bf16.gmra.mxu0 %v3699
      %v3771 = vpop.f32.mrf.mxu0
      %v3772 = vadd.f32 0.0, %v3771
      %v3773 = vpop.f32.mrf.mxu0
      %v3774 = vadd.f32 0.0, %v3773
      %3775 = vmatmul.bf16.gmra.mxu0 %v3702
      %v3776 = vpop.f32.mrf.mxu0
      %v3777 = vadd.f32 0.0, %v3776
      %v3778 = vpop.f32.mrf.mxu0
      %v3779 = vadd.f32 0.0, %v3778
      %3780 = vmatmul.bf16.gmra.mxu0 %v3705
      %v3781 = vpop.f32.mrf.mxu0
      %v3782 = vadd.f32 0.0, %v3781
      %v3783 = vpop.f32.mrf.mxu0
      %v3784 = vadd.f32 0.0, %v3783
      %3785 = vmatmul.bf16.gmra.mxu0 %v3708
      %v3786 = vpop.f32.mrf.mxu0
      %v3787 = vadd.f32 0.0, %v3786
      %v3788 = vpop.f32.mrf.mxu0
      %v3789 = vadd.f32 0.0, %v3788
      %3790 = vmatmul.bf16.gmra.mxu0 %v3711
      %v3791 = vpop.f32.mrf.mxu0
      %v3792 = vadd.f32 0.0, %v3791
      %v3793 = vpop.f32.mrf.mxu0
      %v3794 = vadd.f32 0.0, %v3793
      %3795 = vmatmul.bf16.gmra.mxu0 %v3714
      %v3796 = vpop.f32.mrf.mxu0
      %v3797 = vadd.f32 0.0, %v3796
      %v3798 = vpop.f32.mrf.mxu0
      %v3799 = vadd.f32 0.0, %v3798
      %3800 = vmatmul.bf16.gmra.mxu0 %v3717
      %v3801 = vpop.f32.mrf.mxu0
      %v3802 = vadd.f32 0.0, %v3801
      %v3803 = vpop.f32.mrf.mxu0
      %v3804 = vadd.f32 0.0, %v3803
      %3805 = vmatmul.bf16.gmra.mxu0 %v3720
      %v3806 = vpop.f32.mrf.mxu0
      %v3807 = vadd.f32 0.0, %v3806
      %v3808 = vpop.f32.mrf.mxu0
      %v3809 = vadd.f32 0.0, %v3808
      %3810 = vdwg.mxu0
      %v3811 = vld [vmem:[#allocation2] sm:$0xff]
      %v3812 = vld [vmem:[#allocation2 + $0x8] sm:$0xff]
      %v3813 = vld [vmem:[#allocation2 + $0x10] sm:$0xff]
      %v3814 = vld [vmem:[#allocation2 + $0x18] sm:$0xff]
      %v3815 = vld [vmem:[#allocation2 + $0x20] sm:$0xff]
      %v3816 = vld [vmem:[#allocation2 + $0x28] sm:$0xff]
      %v3817 = vld [vmem:[#allocation2 + $0x30] sm:$0xff]
      %v3818 = vld [vmem:[#allocation2 + $0x38] sm:$0xff]
      %v3819 = vld [vmem:[#allocation2 + $0x40] sm:$0xff]
      %v3820 = vld [vmem:[#allocation2 + $0x48] sm:$0xff]
      %v3821 = vld [vmem:[#allocation2 + $0x50] sm:$0xff]
      %v3822 = vld [vmem:[#allocation2 + $0x58] sm:$0xff]
      %v3823 = vld [vmem:[#allocation2 + $0x60] sm:$0xff]
      %v3824 = vld [vmem:[#allocation2 + $0x68] sm:$0xff]
      %v3825 = vld [vmem:[#allocation2 + $0x70] sm:$0xff]
      %v3826 = vld [vmem:[#allocation2 + $0x78] sm:$0xff]
      %v3827 = vld [vmem:[#allocation2 + $0x80] sm:$0xff]
      %v3828 = vld [vmem:[#allocation2 + $0x88] sm:$0xff]
      %v3829 = vld [vmem:[#allocation2 + $0x90] sm:$0xff]
      %v3830 = vld [vmem:[#allocation2 + $0x98] sm:$0xff]
      %v3831 = vld [vmem:[#allocation2 + $0xa0] sm:$0xff]
      %v3832 = vld [vmem:[#allocation2 + $0xa8] sm:$0xff]
      %v3833 = vld [vmem:[#allocation2 + $0xb0] sm:$0xff]
      %v3834 = vld [vmem:[#allocation2 + $0xb8] sm:$0xff]
      %v3835 = vld [vmem:[#allocation2 + $0xc0] sm:$0xff]
      %v3836 = vld [vmem:[#allocation2 + $0xc8] sm:$0xff]
      %v3837 = vld [vmem:[#allocation2 + $0xd0] sm:$0xff]
      %v3838 = vld [vmem:[#allocation2 + $0xd8] sm:$0xff]
      %v3839 = vld [vmem:[#allocation2 + $0xe0] sm:$0xff]
      %v3840 = vld [vmem:[#allocation2 + $0xe8] sm:$0xff]
      %v3841 = vld [vmem:[#allocation2 + $0xf0] sm:$0xff]
      %v3842 = vld [vmem:[#allocation2 + $0xf8] sm:$0xff]
      %v3843 = vadd.f32 %v3811, %v3732
      %v3844 = vadd.f32 %v3812, %v3734
      %v3845 = vadd.f32 %v3813, %v3737
      %v3846 = vadd.f32 %v3814, %v3739
      %v3847 = vadd.f32 %v3815, %v3742
      %v3848 = vadd.f32 %v3816, %v3744
      %v3849 = vadd.f32 %v3817, %v3747
      %v3850 = vadd.f32 %v3818, %v3749
      %v3851 = vadd.f32 %v3819, %v3752
      %v3852 = vadd.f32 %v3820, %v3754
      %v3853 = vadd.f32 %v3821, %v3757
      %v3854 = vadd.f32 %v3822, %v3759
      %v3855 = vadd.f32 %v3823, %v3762
      %v3856 = vadd.f32 %v3824, %v3764
      %v3857 = vadd.f32 %v3825, %v3767
      %v3858 = vadd.f32 %v3826, %v3769
      %v3859 = vadd.f32 %v3827, %v3772
      %v3860 = vadd.f32 %v3828, %v3774
      %v3861 = vadd.f32 %v3829, %v3777
      %v3862 = vadd.f32 %v3830, %v3779
      %v3863 = vadd.f32 %v3831, %v3782
      %v3864 = vadd.f32 %v3832, %v3784
      %v3865 = vadd.f32 %v3833, %v3787
      %v3866 = vadd.f32 %v3834, %v3789
      %v3867 = vadd.f32 %v3835, %v3792
      %v3868 = vadd.f32 %v3836, %v3794
      %v3869 = vadd.f32 %v3837, %v3797
      %v3870 = vadd.f32 %v3838, %v3799
      %v3871 = vadd.f32 %v3839, %v3802
      %v3872 = vadd.f32 %v3840, %v3804
      %v3873 = vadd.f32 %v3841, %v3807
      %v3874 = vadd.f32 %v3842, %v3809
      %3875 = vst.msk [vmem:[#allocation2] sm:$0xff] %vm521, %v3843
      %3876 = vst.msk [vmem:[#allocation2 + $0x8] sm:$0xff] %vm521, %v3844
      %3877 = vst.msk [vmem:[#allocation2 + $0x10] sm:$0xff] %vm521, %v3845
      %3878 = vst.msk [vmem:[#allocation2 + $0x18] sm:$0xff] %vm521, %v3846
      %3879 = vst.msk [vmem:[#allocation2 + $0x20] sm:$0xff] %vm521, %v3847
      %3880 = vst.msk [vmem:[#allocation2 + $0x28] sm:$0xff] %vm521, %v3848
      %3881 = vst.msk [vmem:[#allocation2 + $0x30] sm:$0xff] %vm521, %v3849
      %3882 = vst.msk [vmem:[#allocation2 + $0x38] sm:$0xff] %vm521, %v3850
      %3883 = vst.msk [vmem:[#allocation2 + $0x40] sm:$0xff] %vm521, %v3851
      %3884 = vst.msk [vmem:[#allocation2 + $0x48] sm:$0xff] %vm521, %v3852
      %3885 = vst.msk [vmem:[#allocation2 + $0x50] sm:$0xff] %vm521, %v3853
      %3886 = vst.msk [vmem:[#allocation2 + $0x58] sm:$0xff] %vm521, %v3854
      %3887 = vst.msk [vmem:[#allocation2 + $0x60] sm:$0xff] %vm521, %v3855
      %3888 = vst.msk [vmem:[#allocation2 + $0x68] sm:$0xff] %vm521, %v3856
      %3889 = vst.msk [vmem:[#allocation2 + $0x70] sm:$0xff] %vm521, %v3857
      %3890 = vst.msk [vmem:[#allocation2 + $0x78] sm:$0xff] %vm521, %v3858
      %3891 = vst.msk [vmem:[#allocation2 + $0x80] sm:$0xff] %vm521, %v3859
      %3892 = vst.msk [vmem:[#allocation2 + $0x88] sm:$0xff] %vm521, %v3860
      %3893 = vst.msk [vmem:[#allocation2 + $0x90] sm:$0xff] %vm521, %v3861
      %3894 = vst.msk [vmem:[#allocation2 + $0x98] sm:$0xff] %vm521, %v3862
      %3895 = vst.msk [vmem:[#allocation2 + $0xa0] sm:$0xff] %vm521, %v3863
      %3896 = vst.msk [vmem:[#allocation2 + $0xa8] sm:$0xff] %vm521, %v3864
      %3897 = vst.msk [vmem:[#allocation2 + $0xb0] sm:$0xff] %vm521, %v3865
      %3898 = vst.msk [vmem:[#allocation2 + $0xb8] sm:$0xff] %vm521, %v3866
      %3899 = vst.msk [vmem:[#allocation2 + $0xc0] sm:$0xff] %vm521, %v3867
      %3900 = vst.msk [vmem:[#allocation2 + $0xc8] sm:$0xff] %vm521, %v3868
      %3901 = vst.msk [vmem:[#allocation2 + $0xd0] sm:$0xff] %vm521, %v3869
      %3902 = vst.msk [vmem:[#allocation2 + $0xd8] sm:$0xff] %vm521, %v3870
      %3903 = vst.msk [vmem:[#allocation2 + $0xe0] sm:$0xff] %vm521, %v3871
      %3904 = vst.msk [vmem:[#allocation2 + $0xe8] sm:$0xff] %vm521, %v3872
      %3905 = vst.msk [vmem:[#allocation2 + $0xf0] sm:$0xff] %vm521, %v3873
      %3906 = vst.msk [vmem:[#allocation2 + $0xf8] sm:$0xff] %vm521, %v3874
      %v3907 = vld [vmem:[#allocation2] sm:$0xff]
      %v3908 = vld [vmem:[#allocation2 + $0x8] sm:$0xff]
      %v3909 = vld [vmem:[#allocation2 + $0x10] sm:$0xff]
      %v3910 = vld [vmem:[#allocation2 + $0x18] sm:$0xff]
      %v3911 = vld [vmem:[#allocation2 + $0x20] sm:$0xff]
      %v3912 = vld [vmem:[#allocation2 + $0x28] sm:$0xff]
      %v3913 = vld [vmem:[#allocation2 + $0x30] sm:$0xff]
      %v3914 = vld [vmem:[#allocation2 + $0x38] sm:$0xff]
      %v3915 = vld [vmem:[#allocation2 + $0x40] sm:$0xff]
      %v3916 = vld [vmem:[#allocation2 + $0x48] sm:$0xff]
      %v3917 = vld [vmem:[#allocation2 + $0x50] sm:$0xff]
      %v3918 = vld [vmem:[#allocation2 + $0x58] sm:$0xff]
      %v3919 = vld [vmem:[#allocation2 + $0x60] sm:$0xff]
      %v3920 = vld [vmem:[#allocation2 + $0x68] sm:$0xff]
      %v3921 = vld [vmem:[#allocation2 + $0x70] sm:$0xff]
      %v3922 = vld [vmem:[#allocation2 + $0x78] sm:$0xff]
      %v3923 = vld [vmem:[#allocation2 + $0x80] sm:$0xff]
      %v3924 = vld [vmem:[#allocation2 + $0x88] sm:$0xff]
      %v3925 = vld [vmem:[#allocation2 + $0x90] sm:$0xff]
      %v3926 = vld [vmem:[#allocation2 + $0x98] sm:$0xff]
      %v3927 = vld [vmem:[#allocation2 + $0xa0] sm:$0xff]
      %v3928 = vld [vmem:[#allocation2 + $0xa8] sm:$0xff]
      %v3929 = vld [vmem:[#allocation2 + $0xb0] sm:$0xff]
      %v3930 = vld [vmem:[#allocation2 + $0xb8] sm:$0xff]
      %v3931 = vld [vmem:[#allocation2 + $0xc0] sm:$0xff]
      %v3932 = vld [vmem:[#allocation2 + $0xc8] sm:$0xff]
      %v3933 = vld [vmem:[#allocation2 + $0xd0] sm:$0xff]
      %v3934 = vld [vmem:[#allocation2 + $0xd8] sm:$0xff]
      %v3935 = vld [vmem:[#allocation2 + $0xe0] sm:$0xff]
      %v3936 = vld [vmem:[#allocation2 + $0xe8] sm:$0xff]
      %v3937 = vld [vmem:[#allocation2 + $0xf0] sm:$0xff]
      %v3938 = vld [vmem:[#allocation2 + $0xf8] sm:$0xff]
      %v3939 = vld [vmem:[%s2] sm:$0x1]
      %v3941 = vperm.slane %v3939, 0
      %v3943 = vadd.f32 %v3907, %v3941
      %v3944 = vadd.f32 %v3908, %v3941
      %v3945 = vadd.f32 %v3909, %v3941
      %v3946 = vadd.f32 %v3910, %v3941
      %v3947 = vadd.f32 %v3911, %v3941
      %v3948 = vadd.f32 %v3912, %v3941
      %v3949 = vadd.f32 %v3913, %v3941
      %v3950 = vadd.f32 %v3914, %v3941
      %v3951 = vadd.f32 %v3915, %v3941
      %v3952 = vadd.f32 %v3916, %v3941
      %v3953 = vadd.f32 %v3917, %v3941
      %v3954 = vadd.f32 %v3918, %v3941
      %v3955 = vadd.f32 %v3919, %v3941
      %v3956 = vadd.f32 %v3920, %v3941
      %v3957 = vadd.f32 %v3921, %v3941
      %v3958 = vadd.f32 %v3922, %v3941
      %v3959 = vadd.f32 %v3923, %v3941
      %v3960 = vadd.f32 %v3924, %v3941
      %v3961 = vadd.f32 %v3925, %v3941
      %v3962 = vadd.f32 %v3926, %v3941
      %v3963 = vadd.f32 %v3927, %v3941
      %v3964 = vadd.f32 %v3928, %v3941
      %v3965 = vadd.f32 %v3929, %v3941
      %v3966 = vadd.f32 %v3930, %v3941
      %v3967 = vadd.f32 %v3931, %v3941
      %v3968 = vadd.f32 %v3932, %v3941
      %v3969 = vadd.f32 %v3933, %v3941
      %v3970 = vadd.f32 %v3934, %v3941
      %v3971 = vadd.f32 %v3935, %v3941
      %v3972 = vadd.f32 %v3936, %v3941
      %v3973 = vadd.f32 %v3937, %v3941
      %v3974 = vadd.f32 %v3938, %v3941
      %v3975 = vmax.f32 %v3943, 0.0
      %v3976 = vmax.f32 %v3944, 0.0
      %v3977 = vmax.f32 %v3945, 0.0
      %v3978 = vmax.f32 %v3946, 0.0
      %v3979 = vmax.f32 %v3947, 0.0
      %v3980 = vmax.f32 %v3948, 0.0
      %v3981 = vmax.f32 %v3949, 0.0
      %v3982 = vmax.f32 %v3950, 0.0
      %v3983 = vmax.f32 %v3951, 0.0
      %v3984 = vmax.f32 %v3952, 0.0
      %v3985 = vmax.f32 %v3953, 0.0
      %v3986 = vmax.f32 %v3954, 0.0
      %v3987 = vmax.f32 %v3955, 0.0
      %v3988 = vmax.f32 %v3956, 0.0
      %v3989 = vmax.f32 %v3957, 0.0
      %v3990 = vmax.f32 %v3958, 0.0
      %v3991 = vmax.f32 %v3959, 0.0
      %v3992 = vmax.f32 %v3960, 0.0
      %v3993 = vmax.f32 %v3961, 0.0
      %v3994 = vmax.f32 %v3962, 0.0
      %v3995 = vmax.f32 %v3963, 0.0
      %v3996 = vmax.f32 %v3964, 0.0
      %v3997 = vmax.f32 %v3965, 0.0
      %v3998 = vmax.f32 %v3966, 0.0
      %v3999 = vmax.f32 %v3967, 0.0
      %v4000 = vmax.f32 %v3968, 0.0
      %v4001 = vmax.f32 %v3969, 0.0
      %v4002 = vmax.f32 %v3970, 0.0
      %v4003 = vmax.f32 %v3971, 0.0
      %v4004 = vmax.f32 %v3972, 0.0
      %v4005 = vmax.f32 %v3973, 0.0
      %v4006 = vmax.f32 %v3974, 0.0
      %v4007 = vpack.c.bf16 %v3976, %v3975
      %v4008 = vpack.c.bf16 %v3978, %v3977
      %v4009 = vpack.c.bf16 %v3980, %v3979
      %v4010 = vpack.c.bf16 %v3982, %v3981
      %v4011 = vpack.c.bf16 %v3984, %v3983
      %v4012 = vpack.c.bf16 %v3986, %v3985
      %v4013 = vpack.c.bf16 %v3988, %v3987
      %v4014 = vpack.c.bf16 %v3990, %v3989
      %v4015 = vpack.c.bf16 %v3992, %v3991
      %v4016 = vpack.c.bf16 %v3994, %v3993
      %v4017 = vpack.c.bf16 %v3996, %v3995
      %v4018 = vpack.c.bf16 %v3998, %v3997
      %v4019 = vpack.c.bf16 %v4000, %v3999
      %v4020 = vpack.c.bf16 %v4002, %v4001
      %v4021 = vpack.c.bf16 %v4004, %v4003
      %v4022 = vpack.c.bf16 %v4006, %v4005
      %v4023 = vld [vmem:[%s3] sm:$0x3]
      %v4024 = vld [vmem:[%s4] sm:$0x1]
      %v4026 = vperm.slane %v4024, 0
      %v4029 = vsel %vm521, %v4007, 0
      %v4032 = vsel %vm521, %v4008, 0
      %v4035 = vsel %vm521, %v4009, 0
      %v4038 = vsel %vm521, %v4010, 0
      %v4041 = vsel %vm521, %v4011, 0
      %v4044 = vsel %vm521, %v4012, 0
      %v4047 = vsel %vm521, %v4013, 0
      %v4050 = vsel %vm521, %v4014, 0
      %v4053 = vsel %vm521, %v4015, 0
      %v4056 = vsel %vm521, %v4016, 0
      %v4059 = vsel %vm521, %v4017, 0
      %v4062 = vsel %vm521, %v4018, 0
      %v4065 = vsel %vm521, %v4019, 0
      %v4068 = vsel %vm521, %v4020, 0
      %v4071 = vsel %vm521, %v4021, 0
      %v4074 = vsel %vm521, %v4022, 0
      %vm4076 = vcmask 1041408
      %v4078 = vsel %vm4076, %v4023, 0
      %4080 = vmatpush.bf16.msra.mxu0 0
      %4081 = vmatpush.bf16.msra.mxu0 0
      %4082 = vmatpush.bf16.msra.mxu0 0
      %4083 = vmatpush.bf16.msra.mxu0 0
      %4084 = vmatpush.bf16.msra.mxu0 0
      %4085 = vmatpush.bf16.msra.mxu0 0
      %4086 = vmatpush.bf16.msra.mxu0 0
      %4087 = vmatpush.bf16.msra.mxu0 %v4078
      %4088 = vmatmul.bf16.gmra.mxu0 %v4029
      %v4089 = vpop.f32.mrf.mxu0
      %v4090 = vadd.f32 %v4026, %v4089
      %v4091 = vpop.f32.mrf.mxu0
      %v4092 = vadd.f32 %v4026, %v4091
      %4093 = vmatmul.bf16.gmra.mxu0 %v4032
      %v4094 = vpop.f32.mrf.mxu0
      %v4095 = vadd.f32 %v4026, %v4094
      %v4096 = vpop.f32.mrf.mxu0
      %v4097 = vadd.f32 %v4026, %v4096
      %4098 = vmatmul.bf16.gmra.mxu0 %v4035
      %v4099 = vpop.f32.mrf.mxu0
      %v4100 = vadd.f32 %v4026, %v4099
      %v4101 = vpop.f32.mrf.mxu0
      %v4102 = vadd.f32 %v4026, %v4101
      %4103 = vmatmul.bf16.gmra.mxu0 %v4038
      %v4104 = vpop.f32.mrf.mxu0
      %v4105 = vadd.f32 %v4026, %v4104
      %v4106 = vpop.f32.mrf.mxu0
      %v4107 = vadd.f32 %v4026, %v4106
      %4108 = vmatmul.bf16.gmra.mxu0 %v4041
      %v4109 = vpop.f32.mrf.mxu0
      %v4110 = vadd.f32 %v4026, %v4109
      %v4111 = vpop.f32.mrf.mxu0
      %v4112 = vadd.f32 %v4026, %v4111
      %4113 = vmatmul.bf16.gmra.mxu0 %v4044
      %v4114 = vpop.f32.mrf.mxu0
      %v4115 = vadd.f32 %v4026, %v4114
      %v4116 = vpop.f32.mrf.mxu0
      %v4117 = vadd.f32 %v4026, %v4116
      %4118 = vmatmul.bf16.gmra.mxu0 %v4047
      %v4119 = vpop.f32.mrf.mxu0
      %v4120 = vadd.f32 %v4026, %v4119
      %v4121 = vpop.f32.mrf.mxu0
      %v4122 = vadd.f32 %v4026, %v4121
      %4123 = vmatmul.bf16.gmra.mxu0 %v4050
      %v4124 = vpop.f32.mrf.mxu0
      %v4125 = vadd.f32 %v4026, %v4124
      %v4126 = vpop.f32.mrf.mxu0
      %v4127 = vadd.f32 %v4026, %v4126
      %4128 = vmatmul.bf16.gmra.mxu0 %v4053
      %v4129 = vpop.f32.mrf.mxu0
      %v4130 = vadd.f32 %v4026, %v4129
      %v4131 = vpop.f32.mrf.mxu0
      %v4132 = vadd.f32 %v4026, %v4131
      %4133 = vmatmul.bf16.gmra.mxu0 %v4056
      %v4134 = vpop.f32.mrf.mxu0
      %v4135 = vadd.f32 %v4026, %v4134
      %v4136 = vpop.f32.mrf.mxu0
      %v4137 = vadd.f32 %v4026, %v4136
      %4138 = vmatmul.bf16.gmra.mxu0 %v4059
      %v4139 = vpop.f32.mrf.mxu0
      %v4140 = vadd.f32 %v4026, %v4139
      %v4141 = vpop.f32.mrf.mxu0
      %v4142 = vadd.f32 %v4026, %v4141
      %4143 = vmatmul.bf16.gmra.mxu0 %v4062
      %v4144 = vpop.f32.mrf.mxu0
      %v4145 = vadd.f32 %v4026, %v4144
      %v4146 = vpop.f32.mrf.mxu0
      %v4147 = vadd.f32 %v4026, %v4146
      %4148 = vmatmul.bf16.gmra.mxu0 %v4065
      %v4149 = vpop.f32.mrf.mxu0
      %v4150 = vadd.f32 %v4026, %v4149
      %v4151 = vpop.f32.mrf.mxu0
      %v4152 = vadd.f32 %v4026, %v4151
      %4153 = vmatmul.bf16.gmra.mxu0 %v4068
      %v4154 = vpop.f32.mrf.mxu0
      %v4155 = vadd.f32 %v4026, %v4154
      %v4156 = vpop.f32.mrf.mxu0
      %v4157 = vadd.f32 %v4026, %v4156
      %4158 = vmatmul.bf16.gmra.mxu0 %v4071
      %v4159 = vpop.f32.mrf.mxu0
      %v4160 = vadd.f32 %v4026, %v4159
      %v4161 = vpop.f32.mrf.mxu0
      %v4162 = vadd.f32 %v4026, %v4161
      %4163 = vmatmul.bf16.gmra.mxu0 %v4074
      %v4164 = vpop.f32.mrf.mxu0
      %v4165 = vadd.f32 %v4026, %v4164
      %v4166 = vpop.f32.mrf.mxu0
      %v4167 = vadd.f32 %v4026, %v4166
      %4168 = vdwg.mxu0
      %v4169 = vpack.c.bf16 %v4090, %v4090
      %v4170 = vpack.c.bf16 %v4092, %v4092
      %v4171 = vpack.c.bf16 %v4095, %v4095
      %v4172 = vpack.c.bf16 %v4097, %v4097
      %v4173 = vpack.c.bf16 %v4100, %v4100
      %v4174 = vpack.c.bf16 %v4102, %v4102
      %v4175 = vpack.c.bf16 %v4105, %v4105
      %v4176 = vpack.c.bf16 %v4107, %v4107
      %v4177 = vpack.c.bf16 %v4110, %v4110
      %v4178 = vpack.c.bf16 %v4112, %v4112
      %v4179 = vpack.c.bf16 %v4115, %v4115
      %v4180 = vpack.c.bf16 %v4117, %v4117
      %v4181 = vpack.c.bf16 %v4120, %v4120
      %v4182 = vpack.c.bf16 %v4122, %v4122
      %v4183 = vpack.c.bf16 %v4125, %v4125
      %v4184 = vpack.c.bf16 %v4127, %v4127
      %v4185 = vpack.c.bf16 %v4130, %v4130
      %v4186 = vpack.c.bf16 %v4132, %v4132
      %v4187 = vpack.c.bf16 %v4135, %v4135
      %v4188 = vpack.c.bf16 %v4137, %v4137
      %v4189 = vpack.c.bf16 %v4140, %v4140
      %v4190 = vpack.c.bf16 %v4142, %v4142
      %v4191 = vpack.c.bf16 %v4145, %v4145
      %v4192 = vpack.c.bf16 %v4147, %v4147
      %v4193 = vpack.c.bf16 %v4150, %v4150
      %v4194 = vpack.c.bf16 %v4152, %v4152
      %v4195 = vpack.c.bf16 %v4155, %v4155
      %v4196 = vpack.c.bf16 %v4157, %v4157
      %v4197 = vpack.c.bf16 %v4160, %v4160
      %v4198 = vpack.c.bf16 %v4162, %v4162
      %v4199 = vpack.c.bf16 %v4165, %v4165
      %v4200 = vpack.c.bf16 %v4167, %v4167
      %vm4201 = vcmask 60416
      %4202 = vst.msk [vmem:[%s260] sm:$0xf] %vm4201, %v4169
      %4203 = vst.msk [vmem:[%s260 + $0x4] sm:$0xf] %vm4201, %v4170
      %4204 = vst.msk [vmem:[%s260 + $0x8] sm:$0xf] %vm4201, %v4171
      %4205 = vst.msk [vmem:[%s260 + $0xc] sm:$0xf] %vm4201, %v4172
      %4206 = vst.msk [vmem:[%s260 + $0x10] sm:$0xf] %vm4201, %v4173
      %4207 = vst.msk [vmem:[%s260 + $0x14] sm:$0xf] %vm4201, %v4174
      %4208 = vst.msk [vmem:[%s260 + $0x18] sm:$0xf] %vm4201, %v4175
      %4209 = vst.msk [vmem:[%s260 + $0x1c] sm:$0xf] %vm4201, %v4176
      %4210 = vst.msk [vmem:[%s260 + $0x20] sm:$0xf] %vm4201, %v4177
      %4211 = vst.msk [vmem:[%s260 + $0x24] sm:$0xf] %vm4201, %v4178
      %4212 = vst.msk [vmem:[%s260 + $0x28] sm:$0xf] %vm4201, %v4179
      %4213 = vst.msk [vmem:[%s260 + $0x2c] sm:$0xf] %vm4201, %v4180
      %4214 = vst.msk [vmem:[%s260 + $0x30] sm:$0xf] %vm4201, %v4181
      %4215 = vst.msk [vmem:[%s260 + $0x34] sm:$0xf] %vm4201, %v4182
      %4216 = vst.msk [vmem:[%s260 + $0x38] sm:$0xf] %vm4201, %v4183
      %4217 = vst.msk [vmem:[%s260 + $0x3c] sm:$0xf] %vm4201, %v4184
      %4218 = vst.msk [vmem:[%s260 + $0x40] sm:$0xf] %vm4201, %v4185
      %4219 = vst.msk [vmem:[%s260 + $0x44] sm:$0xf] %vm4201, %v4186
      %4220 = vst.msk [vmem:[%s260 + $0x48] sm:$0xf] %vm4201, %v4187
      %4221 = vst.msk [vmem:[%s260 + $0x4c] sm:$0xf] %vm4201, %v4188
      %4222 = vst.msk [vmem:[%s260 + $0x50] sm:$0xf] %vm4201, %v4189
      %4223 = vst.msk [vmem:[%s260 + $0x54] sm:$0xf] %vm4201, %v4190
      %4224 = vst.msk [vmem:[%s260 + $0x58] sm:$0xf] %vm4201, %v4191
      %4225 = vst.msk [vmem:[%s260 + $0x5c] sm:$0xf] %vm4201, %v4192
      %4226 = vst.msk [vmem:[%s260 + $0x60] sm:$0xf] %vm4201, %v4193
      %4227 = vst.msk [vmem:[%s260 + $0x64] sm:$0xf] %vm4201, %v4194
      %4228 = vst.msk [vmem:[%s260 + $0x68] sm:$0xf] %vm4201, %v4195
      %4229 = vst.msk [vmem:[%s260 + $0x6c] sm:$0xf] %vm4201, %v4196
      %4230 = vst.msk [vmem:[%s260 + $0x70] sm:$0xf] %vm4201, %v4197
      %4231 = vst.msk [vmem:[%s260 + $0x74] sm:$0xf] %vm4201, %v4198
      %4232 = vst.msk [vmem:[%s260 + $0x78] sm:$0xf] %vm4201, %v4199
      %4233 = vst.msk [vmem:[%s260 + $0x7c] sm:$0xf] %vm4201, %v4200
      %s4234 = smul.u32 32, %s21
      %p4235 = scmp.lt.s32.totalorder %s20, 1
      %s4236 = scalar_select %p4235, %s20, 1
      %p4237 = scmp.lt.s32.totalorder %s4234, 63
      %s4238 = scalar_select %p4237, %s4234, 63
      %s4239 = smul.addr %s4236, 64
      %s4240 = sadd.s32 %s4238, %s4239
      %s4241 = smul.addr %s4240, 4
      %s4242 = scalar_lea.vmem %s5, %s4241
      // Predicated region
      $region41: #{tpu_custom_call.1} parent=39 // pred_check
        %p4243 = pneg %p160
      $region42: #{tpu_custom_call.1} parent=39 // pred_check_branch
        %4245 = sbr.rel (%p4243) target = $region44
      $region43: #{tpu_custom_call.1} parent=39 // pred_region
        %s4246 = smul.u32 32, %s21
      $region44: #{tpu_custom_call.1} parent=39 // pred_fallthru
        _
    $region40: #{tpu_custom_call.1} parent=5 // pred_fallthru
      _
    %p4247 = scmp.le.s32.totalorder 2, %s11
    // Predicated region
    $region45: #{tpu_custom_call.1} parent=5 // pred_check
      %p4248 = pneg %p4247
    $region46: #{tpu_custom_call.1} parent=5 // pred_check_branch
      %4250 = sbr.rel (%p4248) target = $region48
    $region47: #{tpu_custom_call.1} parent=5 // pred_region
      %s4251 = ssub.s32 %s11, 2
      // Predicated region
      $region49: #{tpu_custom_call.1} parent=47 // pred_check
        %p4252 = pneg %p166
      $region50: #{tpu_custom_call.1} parent=47 // pred_check_branch
        %4254 = sbr.rel (%p4252) target = $region52
      $region51: #{tpu_custom_call.1} parent=47 // pred_region
        %s4255 = smul.u32 32, %s23
        %p4256 = scmp.lt.s32.totalorder %s22, 1
        %s4257 = scalar_select %p4256, %s22, 1
        %p4258 = scmp.lt.s32.totalorder %s4255, 63
        %s4259 = scalar_select %p4258, %s4255, 63
        %s4260 = smul.addr %s4257, 64
        %s4261 = sadd.s32 %s4259, %s4260
        %s4262 = smul.addr %s4261, 4
        %s4263 = scalar_lea.vmem %s5, %s4262
      $region52: #{tpu_custom_call.1} parent=47 // pred_fallthru
        _
    $region48: #{tpu_custom_call.1} parent=5 // pred_fallthru
      _
  $region6: #{tpu_custom_call.1} parent=0 // loop_footer
    %s15 = sadd.s32 1, %s11
  $region7: #{tpu_custom_call.1} parent=0 // loop_footer_branch
    %10 = sbr.rel target = $region3
  $region8: #{tpu_custom_call.1} parent=0 // loop_exit
    _

</llo_original>
